<compile_context>
chip_gen: v6e
topology: v6e:2x2x1
jax: 0.10.0
libtpu: 0.0.40
codegen_flags: <defaults>
</compile_context>

<pallas_src>
import jax
import jax.numpy as jnp
from jax.experimental import pallas as pl
from jax.experimental.pallas import tpu as pltpu

EPS = 1e-5  # BatchNorm eps


def _round_up(n, m):
    return ((n + m - 1) // m) * m


def _block_diag(w, reps):
    """blockdiag(reps copies of w): (cin, cout) -> (reps*cin, reps*cout)."""
    cin, cout = w.shape
    eye = jnp.eye(reps, dtype=w.dtype)
    bd = eye[:, None, :, None] * w[None, :, None, :]      # (reps, cin, reps, cout)
    return bd.reshape(reps * cin, reps * cout)


def _tiled_group_max(x, group, n_groups):
    """Max over `n_groups` lane groups of width `group`, returned lane-TILED.

    Cyclic max tree over the full lane extent: after rolling by 4g/2g/g and
    taking maxima the result is periodic with period `group`, i.e. every group
    already holds the reduced value (no separate broadcast/tile step needed).
    """
    r = x
    sh = (n_groups // 2) * group
    while sh >= group:
        r = jnp.maximum(r, pltpu.roll(r, shift=sh, axis=1))
        sh //= 2
    return r


def _halving_group_max(x, group):
    """Max over lane groups of width `group`, returned narrow (.., group).

    Uses vreg-aligned halving slices (all split points are multiples of 128),
    so no lane shuffles and the minimal number of VPU max ops.
    """
    r = x
    while r.shape[1] > group:
        half = r.shape[1] // 2
        r = jnp.maximum(r[:, :half], r[:, half:])
    return r


def svfe_kernel(x_ref, m8_ref,
                w1_ref, s1_ref,
                w2a_ref, w2b_ref, s2_ref,
                w3a_ref, w3b_ref, s3_ref,
                e1_ref, e2_ref,
                o_ref):
    bf16 = jnp.bfloat16
    f32 = jnp.float32
    T = m8_ref.shape[1]                 # 8 points per voxel
    u1 = w2a_ref.shape[0] // T          # 16
    u2 = w3a_ref.shape[0] // T          # 64
    cout = o_ref.shape[1]               # 128

    x = x_ref[...]                      # (tk, T*7) bf16, point-major lanes
    m8 = m8_ref[...]                    # (tk, T)   bf16 {0,1} per-point mask

    # Expand the compact mask to the lane-blocked layouts with two tiny MXU
    # matmuls against constant 0/1 indicator matrices (exact for 0/1 values).
    mask_u1 = jnp.dot(m8, e1_ref[...], preferred_element_type=f32)   # (tk, T*u1)
    mask_u2 = jnp.dot(m8, e2_ref[...], preferred_element_type=f32)   # (tk, T*u2)

    # ---- VFE1: blockdiag Linear(7,16) per point (BN folded) + ReLU ----
    h1 = jnp.dot(x, w1_ref[...], preferred_element_type=f32)         # (tk, T*u1)
    pwf1 = jnp.maximum(h1 + s1_ref[...], 0.0)
    laf1t = _tiled_group_max(pwf1, u1, T)          # laf1, already lane-tiled
    a1 = (mask_u1 * pwf1).astype(bf16)             # masked per-point half
    b1 = (mask_u1 * laf1t).astype(bf16)            # masked aggregated half

    # ---- VFE2: split-weight blockdiag Linear(32,64) per point + ReLU ----
    h2 = (jnp.dot(a1, w2a_ref[...], preferred_element_type=f32)
          + jnp.dot(b1, w2b_ref[...], preferred_element_type=f32)
          + s2_ref[...])                                              # (tk, T*u2)
    pwf2 = jnp.maximum(h2, 0.0)
    laf2t = _tiled_group_max(pwf2, u2, T)
    a2 = (mask_u2 * pwf2).astype(bf16)
    b2 = (mask_u2 * laf2t).astype(bf16)

    # ---- FCN(128,128) per point, then max over the T points ----
    h3 = (jnp.dot(a2, w3a_ref[...], preferred_element_type=f32)
          + jnp.dot(b2, w3b_ref[...], preferred_element_type=f32))   # (tk, T*cout)
    red = _halving_group_max(h3, cout)                                # (tk, cout)
    # (+shift) and ReLU are monotone -> commute with the max over points.
    o_ref[...] = jnp.maximum(red + s3_ref[...], 0.0)


def _fold_bn(w, b, scale, shift):
    """Fold eval-mode BatchNorm (y = (x@w + b)*scale + shift) into w / bias."""
    return (w * scale).astype(jnp.float32), (b * scale + shift).astype(jnp.float32)


def svfe_forward(x, params, tk=512):
    """x: (K, T, 7) float32; params: 3 tuples (w, b, scale, shift), w is (cin, cout)."""
    K, T, C = x.shape
    assert T & (T - 1) == 0, "T must be a power of two for the cyclic max tree"
    bf16 = jnp.bfloat16

    (w1, b1, sc1, sh1), (w2, b2, sc2, sh2), (w3, b3, sc3, sh3) = params
    w1f, s1f = _fold_bn(w1, b1, sc1, sh1)          # (7,16),    (1,16)
    w2f, s2f = _fold_bn(w2, b2, sc2, sh2)          # (32,64),   (1,64)
    w3f, s3f = _fold_bn(w3, b3, sc3, sh3)          # (128,128), (1,128)
    u1, u2, cout = w1f.shape[1], w2f.shape[1], w3f.shape[1]

    # Block-diagonal per-point weights (bf16 MXU operands) and lane-tiled shifts.
    # Rows [:u] of the layer-2/3 weights act on the per-point half (pwf),
    # rows [u:] on the locally-aggregated half (laf).
    w1bd = _block_diag(w1f, T).astype(bf16)            # (T*7,  T*u1)
    w2abd = _block_diag(w2f[:u1], T).astype(bf16)      # (T*u1, T*u2)
    w2bbd = _block_diag(w2f[u1:], T).astype(bf16)      # (T*u1, T*u2)
    w3abd = _block_diag(w3f[:u2], T).astype(bf16)      # (T*u2, T*cout)
    w3bbd = _block_diag(w3f[u2:], T).astype(bf16)      # (T*u2, T*cout)
    e1 = _block_diag(jnp.ones((1, u1), jnp.float32), T).astype(bf16)   # (T, T*u1)
    e2 = _block_diag(jnp.ones((1, u2), jnp.float32), T).astype(bf16)   # (T, T*u2)
    s1t = jnp.tile(s1f, (1, T))                        # (1, T*u1) f32
    s2t = jnp.tile(s2f, (1, T))                        # (1, T*u2) f32
    s3t = s3f                                          # (1, cout) f32

    # Lane-dense inputs: (K, T*C) points and a compact (K, T) per-point mask.
    x2d = x.reshape(K, T * C).astype(bf16)
    mask8 = (jnp.max(x, axis=2) != 0.0).astype(bf16)

    # Voxel tile: multiple of 16, clamped for small K; keep >=2 grid steps when
    # possible so both TensorCores get work on dual-core chips (v7x).
    tk = max(16, (min(tk, _round_up(K, 16)) // 16) * 16)
    if pl.cdiv(K, tk) < 2 and K >= 32:
        tk = _round_up((K + 1) // 2, 16)
    grid = (pl.cdiv(K, tk),)   # partial last tile handled by Pallas (no jnp.pad)

    def _res(a):               # weights / shifts stay resident in VMEM
        return pl.BlockSpec(a.shape, lambda i: (0, 0))

    grid_spec = pl.GridSpec(
        grid=grid,
        in_specs=[pl.BlockSpec((tk, T * C), lambda i: (i, 0)),
                  pl.BlockSpec((tk, T), lambda i: (i, 0)),
                  _res(w1bd), _res(s1t),
                  _res(w2abd), _res(w2bbd), _res(s2t),
                  _res(w3abd), _res(w3bbd), _res(s3t),
                  _res(e1), _res(e2)],
        out_specs=pl.BlockSpec((tk, cout), lambda i: (i, 0)),
    )

    return pl.pallas_call(
        svfe_kernel,
        out_shape=jax.ShapeDtypeStruct((K, cout), jnp.float32),
        grid_spec=grid_spec,
        compiler_params=pltpu.CompilerParams(
            dimension_semantics=("parallel",),
            vmem_limit_bytes=64 * 1024 * 1024),  # within v7x physical; allows tk sweeps
    )(x2d, mask8, w1bd, s1t, w2abd, w2bbd, s2t, w3abd, w3bbd, s3t, e1, e2)


def svfe_reference(x, params):
    """Pure-JAX f32 reference matching the PyTorch module (eval-mode BN)."""
    mask = (jnp.max(x, axis=2, keepdims=True) != 0.0).astype(jnp.float32)

    def fcn(inp, w, b, scale, shift):
        kk, t, cin = inp.shape
        h = inp.reshape(kk * t, cin) @ w + b
        h = h * scale + shift
        return jnp.maximum(h, 0.0).reshape(kk, t, -1)

    def vfe(inp, p):
        pwf = fcn(inp, *p)
        laf = jnp.broadcast_to(jnp.max(pwf, axis=1, keepdims=True), pwf.shape)
        return jnp.concatenate([pwf, laf], axis=2) * mask

    h = vfe(x, params[0])
    h = vfe(h, params[1])
    h = fcn(h, *params[2])
    return jnp.max(h, axis=1)


def init_fcn_params(key, cin, cout):
    """Synthetic params for Linear(cin,cout) + BatchNorm1d(cout) (eval mode)."""
    kw, kb, kg, kbe, km, kv = jax.random.split(key, 6)
    bound = 1.0 / (cin ** 0.5)
    # Linear weight stored pre-transposed as (cin, cout) so kernels do x @ W.
    w = jax.random.uniform(kw, (cin, cout), jnp.float32, -bound, bound)
    b = jax.random.uniform(kb, (1, cout), jnp.float32, -bound, bound)
    gamma = 1.0 + 0.1 * jax.random.normal(kg, (1, cout), dtype=jnp.float32)
    beta = 0.1 * jax.random.normal(kbe, (1, cout), dtype=jnp.float32)
    run_mean = 0.1 * jax.random.normal(km, (1, cout), dtype=jnp.float32)
    run_var = 1.0 + 0.1 * jax.random.uniform(kv, (1, cout), dtype=jnp.float32)
    scale = gamma / jnp.sqrt(run_var + EPS)
    shift = beta - run_mean * scale
    return (w, b, scale, shift)


if __name__ == "__main__":
    key = jax.random.PRNGKey(0)
    k_x, k_drop, k1, k2, k3 = jax.random.split(key, 5)

    K, T, C = 16, 8, 7                     # small shapes consistent with SVFE(T=8)
    x = jax.random.normal(k_x, (K, T, C), dtype=jnp.float32)
    # Zero out some points so the voxel mask is exercised.
    keep = jax.random.bernoulli(k_drop, p=0.7, shape=(K, T)).astype(jnp.float32)
    x = x * keep[:, :, None]

    params = [
        init_fcn_params(k1, 7, 16),        # VFE(7, 32)   -> units = 16
        init_fcn_params(k2, 32, 64),       # VFE(32, 128) -> units = 64
        init_fcn_params(k3, 128, 128),     # FCN(128, 128)
    ]

    out = svfe_forward(x, params)          # (K, 128); tk auto-clamped for small K
    jax.block_until_ready(out)
    assert out.shape == (K, 128) and out.dtype == jnp.float32

    # Validate against the f32 reference with a bf16-appropriate tolerance.
    ref = svfe_reference(x, params)
    err = float(jnp.max(jnp.abs(out - ref)))
    scale = max(1.0, float(jnp.max(jnp.abs(ref))))
    assert err <= 5e-2 * scale, f"max abs error {err} exceeds tolerance"

    print("KERNEL_OK")
</pallas_src>

<mosaic_0001>
module attributes {stable_mosaic.version = 11 : i64} {
  func.func @svfe_kernel(%arg0: i32, %arg1: memref<16x56xbf16, #tpu.memory_space<vmem>>, %arg2: memref<16x8xbf16, #tpu.memory_space<vmem>>, %arg3: memref<56x128xbf16, #tpu.memory_space<vmem>>, %arg4: memref<1x128xf32, #tpu.memory_space<vmem>>, %arg5: memref<128x512xbf16, #tpu.memory_space<vmem>>, %arg6: memref<128x512xbf16, #tpu.memory_space<vmem>>, %arg7: memref<1x512xf32, #tpu.memory_space<vmem>>, %arg8: memref<512x1024xbf16, #tpu.memory_space<vmem>>, %arg9: memref<512x1024xbf16, #tpu.memory_space<vmem>>, %arg10: memref<1x128xf32, #tpu.memory_space<vmem>>, %arg11: memref<8x128xbf16, #tpu.memory_space<vmem>>, %arg12: memref<8x512xbf16, #tpu.memory_space<vmem>>, %arg13: memref<16x128xf32, #tpu.memory_space<vmem>>) attributes {dimension_semantics = [#tpu.dimension_semantics<parallel>], iteration_bounds = array<i64: 1>, scalar_prefetch = 0 : i64, scratch_operands = 0 : i64, tpu.core_type = #tpu.core_type<tc>, window_params = [{transform_indices = @transform_0, window_bounds = array<i64: 16, 56>}, {transform_indices = @transform_1, window_bounds = array<i64: 16, 8>}, {pipeline_mode = #tpu.pipeline_mode<synchronous>, transform_indices = @transform_2, window_bounds = array<i64: 56, 128>}, {pipeline_mode = #tpu.pipeline_mode<synchronous>, transform_indices = @transform_3, window_bounds = array<i64: 1, 128>}, {pipeline_mode = #tpu.pipeline_mode<synchronous>, transform_indices = @transform_4, window_bounds = array<i64: 128, 512>}, {pipeline_mode = #tpu.pipeline_mode<synchronous>, transform_indices = @transform_5, window_bounds = array<i64: 128, 512>}, {pipeline_mode = #tpu.pipeline_mode<synchronous>, transform_indices = @transform_6, window_bounds = array<i64: 1, 512>}, {pipeline_mode = #tpu.pipeline_mode<synchronous>, transform_indices = @transform_7, window_bounds = array<i64: 512, 1024>}, {pipeline_mode = #tpu.pipeline_mode<synchronous>, transform_indices = @transform_8, window_bounds = array<i64: 512, 1024>}, {pipeline_mode = #tpu.pipeline_mode<synchronous>, transform_indices = @transform_9, window_bounds = array<i64: 1, 128>}, {pipeline_mode = #tpu.pipeline_mode<synchronous>, transform_indices = @transform_10, window_bounds = array<i64: 8, 128>}, {pipeline_mode = #tpu.pipeline_mode<synchronous>, transform_indices = @transform_11, window_bounds = array<i64: 8, 512>}, {transform_indices = @transform_12, window_bounds = array<i64: 16, 128>}]} {
    %c0 = arith.constant 0 : index
    %c0_0 = arith.constant 0 : index
    %0 = vector.load %arg1[%c0, %c0_0] : memref<16x56xbf16, #tpu.memory_space<vmem>>, vector<16x56xbf16>
    %c0_1 = arith.constant 0 : index
    %c0_2 = arith.constant 0 : index
    %1 = vector.load %arg2[%c0_1, %c0_2] : memref<16x8xbf16, #tpu.memory_space<vmem>>, vector<16x8xbf16>
    %c0_3 = arith.constant 0 : index
    %c0_4 = arith.constant 0 : index
    %2 = vector.load %arg11[%c0_3, %c0_4] : memref<8x128xbf16, #tpu.memory_space<vmem>>, vector<8x128xbf16>
    %cst = arith.constant dense<0.000000e+00> : vector<16x128xf32>
    %3 = tpu.matmul %1, %2, %cst {dimension_numbers = #tpu.dot_dimension_numbers<[1], [0], [0], [1], [0, 0, 1, 1], [], []>} : vector<16x8xbf16>, vector<8x128xbf16>, vector<16x128xf32> -> vector<16x128xf32>
    %c0_5 = arith.constant 0 : index
    %c0_6 = arith.constant 0 : index
    %4 = vector.load %arg12[%c0_5, %c0_6] : memref<8x512xbf16, #tpu.memory_space<vmem>>, vector<8x512xbf16>
    %cst_7 = arith.constant dense<0.000000e+00> : vector<16x512xf32>
    %5 = tpu.matmul %1, %4, %cst_7 {dimension_numbers = #tpu.dot_dimension_numbers<[1], [0], [0], [1], [0, 0, 1, 1], [], []>} : vector<16x8xbf16>, vector<8x512xbf16>, vector<16x512xf32> -> vector<16x512xf32>
    %c0_8 = arith.constant 0 : index
    %c0_9 = arith.constant 0 : index
    %6 = vector.load %arg3[%c0_8, %c0_9] : memref<56x128xbf16, #tpu.memory_space<vmem>>, vector<56x128xbf16>
    %cst_10 = arith.constant dense<0.000000e+00> : vector<16x128xf32>
    %7 = tpu.matmul %0, %6, %cst_10 {dimension_numbers = #tpu.dot_dimension_numbers<[1], [0], [0], [1], [0, 0, 1, 1], [], []>} : vector<16x56xbf16>, vector<56x128xbf16>, vector<16x128xf32> -> vector<16x128xf32>
    %c0_11 = arith.constant 0 : index
    %c0_12 = arith.constant 0 : index
    %8 = vector.load %arg4[%c0_11, %c0_12] : memref<1x128xf32, #tpu.memory_space<vmem>>, vector<1x128xf32>
    %9 = vector.broadcast %8 : vector<1x128xf32> to vector<16x128xf32>
    %10 = arith.addf %7, %9 : vector<16x128xf32>
    %cst_13 = arith.constant 0.000000e+00 : f32
    %11 = vector.broadcast %cst_13 : f32 to vector<16x128xf32>
    %12 = arith.maximumf %10, %11 : vector<16x128xf32>
    %c64_i32 = arith.constant 64 : i32
    %13 = tpu.dynamic_rotate %12 by %c64_i32 dim 1 : vector<16x128xf32>, i32 -> vector<16x128xf32>
    %14 = arith.maximumf %12, %13 : vector<16x128xf32>
    %c32_i32 = arith.constant 32 : i32
    %15 = tpu.dynamic_rotate %14 by %c32_i32 dim 1 : vector<16x128xf32>, i32 -> vector<16x128xf32>
    %16 = arith.maximumf %14, %15 : vector<16x128xf32>
    %c16_i32 = arith.constant 16 : i32
    %17 = tpu.dynamic_rotate %16 by %c16_i32 dim 1 : vector<16x128xf32>, i32 -> vector<16x128xf32>
    %18 = arith.maximumf %16, %17 : vector<16x128xf32>
    %19 = arith.mulf %3, %12 : vector<16x128xf32>
    %20 = arith.truncf %19 : vector<16x128xf32> to vector<16x128xbf16>
    %21 = arith.mulf %3, %18 : vector<16x128xf32>
    %22 = arith.truncf %21 : vector<16x128xf32> to vector<16x128xbf16>
    %c0_14 = arith.constant 0 : index
    %c0_15 = arith.constant 0 : index
    %23 = vector.load %arg5[%c0_14, %c0_15] : memref<128x512xbf16, #tpu.memory_space<vmem>>, vector<128x512xbf16>
    %cst_16 = arith.constant dense<0.000000e+00> : vector<16x512xf32>
    %24 = tpu.matmul %20, %23, %cst_16 {dimension_numbers = #tpu.dot_dimension_numbers<[1], [0], [0], [1], [0, 0, 1, 1], [], []>} : vector<16x128xbf16>, vector<128x512xbf16>, vector<16x512xf32> -> vector<16x512xf32>
    %c0_17 = arith.constant 0 : index
    %c0_18 = arith.constant 0 : index
    %25 = vector.load %arg6[%c0_17, %c0_18] : memref<128x512xbf16, #tpu.memory_space<vmem>>, vector<128x512xbf16>
    %cst_19 = arith.constant dense<0.000000e+00> : vector<16x512xf32>
    %26 = tpu.matmul %22, %25, %cst_19 {dimension_numbers = #tpu.dot_dimension_numbers<[1], [0], [0], [1], [0, 0, 1, 1], [], []>} : vector<16x128xbf16>, vector<128x512xbf16>, vector<16x512xf32> -> vector<16x512xf32>
    %27 = arith.addf %24, %26 : vector<16x512xf32>
    %c0_20 = arith.constant 0 : index
    %c0_21 = arith.constant 0 : index
    %28 = vector.load %arg7[%c0_20, %c0_21] : memref<1x512xf32, #tpu.memory_space<vmem>>, vector<1x512xf32>
    %29 = vector.broadcast %28 : vector<1x512xf32> to vector<16x512xf32>
    %30 = arith.addf %27, %29 : vector<16x512xf32>
    %cst_22 = arith.constant 0.000000e+00 : f32
    %31 = vector.broadcast %cst_22 : f32 to vector<16x512xf32>
    %32 = arith.maximumf %30, %31 : vector<16x512xf32>
    %c256_i32 = arith.constant 256 : i32
    %33 = tpu.dynamic_rotate %32 by %c256_i32 dim 1 : vector<16x512xf32>, i32 -> vector<16x512xf32>
    %34 = arith.maximumf %32, %33 : vector<16x512xf32>
    %c128_i32 = arith.constant 128 : i32
    %35 = tpu.dynamic_rotate %34 by %c128_i32 dim 1 : vector<16x512xf32>, i32 -> vector<16x512xf32>
    %36 = arith.maximumf %34, %35 : vector<16x512xf32>
    %c64_i32_23 = arith.constant 64 : i32
    %37 = tpu.dynamic_rotate %36 by %c64_i32_23 dim 1 : vector<16x512xf32>, i32 -> vector<16x512xf32>
    %38 = arith.maximumf %36, %37 : vector<16x512xf32>
    %39 = arith.mulf %5, %32 : vector<16x512xf32>
    %40 = arith.truncf %39 : vector<16x512xf32> to vector<16x512xbf16>
    %41 = arith.mulf %5, %38 : vector<16x512xf32>
    %42 = arith.truncf %41 : vector<16x512xf32> to vector<16x512xbf16>
    %c0_24 = arith.constant 0 : index
    %c0_25 = arith.constant 0 : index
    %43 = vector.load %arg8[%c0_24, %c0_25] : memref<512x1024xbf16, #tpu.memory_space<vmem>>, vector<512x1024xbf16>
    %cst_26 = arith.constant dense<0.000000e+00> : vector<16x1024xf32>
    %44 = tpu.matmul %40, %43, %cst_26 {dimension_numbers = #tpu.dot_dimension_numbers<[1], [0], [0], [1], [0, 0, 1, 1], [], []>} : vector<16x512xbf16>, vector<512x1024xbf16>, vector<16x1024xf32> -> vector<16x1024xf32>
    %c0_27 = arith.constant 0 : index
    %c0_28 = arith.constant 0 : index
    %45 = vector.load %arg9[%c0_27, %c0_28] : memref<512x1024xbf16, #tpu.memory_space<vmem>>, vector<512x1024xbf16>
    %cst_29 = arith.constant dense<0.000000e+00> : vector<16x1024xf32>
    %46 = tpu.matmul %42, %45, %cst_29 {dimension_numbers = #tpu.dot_dimension_numbers<[1], [0], [0], [1], [0, 0, 1, 1], [], []>} : vector<16x512xbf16>, vector<512x1024xbf16>, vector<16x1024xf32> -> vector<16x1024xf32>
    %47 = arith.addf %44, %46 : vector<16x1024xf32>
    %48 = vector.extract_strided_slice %47 {offsets = [0, 0], sizes = [16, 512], strides = [1, 1]} : vector<16x1024xf32> to vector<16x512xf32>
    %49 = vector.extract_strided_slice %47 {offsets = [0, 512], sizes = [16, 512], strides = [1, 1]} : vector<16x1024xf32> to vector<16x512xf32>
    %50 = arith.maximumf %48, %49 : vector<16x512xf32>
    %51 = vector.extract_strided_slice %50 {offsets = [0, 0], sizes = [16, 256], strides = [1, 1]} : vector<16x512xf32> to vector<16x256xf32>
    %52 = vector.extract_strided_slice %50 {offsets = [0, 256], sizes = [16, 256], strides = [1, 1]} : vector<16x512xf32> to vector<16x256xf32>
    %53 = arith.maximumf %51, %52 : vector<16x256xf32>
    %54 = vector.extract_strided_slice %53 {offsets = [0, 0], sizes = [16, 128], strides = [1, 1]} : vector<16x256xf32> to vector<16x128xf32>
    %55 = vector.extract_strided_slice %53 {offsets = [0, 128], sizes = [16, 128], strides = [1, 1]} : vector<16x256xf32> to vector<16x128xf32>
    %56 = arith.maximumf %54, %55 : vector<16x128xf32>
    %c0_30 = arith.constant 0 : index
    %c0_31 = arith.constant 0 : index
    %57 = vector.load %arg10[%c0_30, %c0_31] : memref<1x128xf32, #tpu.memory_space<vmem>>, vector<1x128xf32>
    %58 = vector.broadcast %57 : vector<1x128xf32> to vector<16x128xf32>
    %59 = arith.addf %56, %58 : vector<16x128xf32>
    %cst_32 = arith.constant 0.000000e+00 : f32
    %60 = vector.broadcast %cst_32 : f32 to vector<16x128xf32>
    %61 = arith.maximumf %59, %60 : vector<16x128xf32>
    %c0_33 = arith.constant 0 : index
    %c0_34 = arith.constant 0 : index
    %62 = vector.load %arg13[%c0_33, %c0_34] : memref<16x128xf32, #tpu.memory_space<vmem>>, vector<16x128xf32>
    tpu.vector_store %arg13[%c0_33, %c0_34], %61 {strides = array<i32>} : memref<16x128xf32, #tpu.memory_space<vmem>>, vector<16x128xf32>,
    return
  }
  func.func @transform_0(%arg0: i32) -> (i32, i32) {
    %c0_i32 = arith.constant 0 : i32
    %c0_i32_0 = arith.constant 0 : i32
    return %arg0, %c0_i32 : i32, i32
  }
  func.func @transform_1(%arg0: i32) -> (i32, i32) {
    %c0_i32 = arith.constant 0 : i32
    %c0_i32_0 = arith.constant 0 : i32
    return %arg0, %c0_i32 : i32, i32
  }
  func.func @transform_2(%arg0: i32) -> (i32, i32) {
    %c0_i32 = arith.constant 0 : i32
    %c0_i32_0 = arith.constant 0 : i32
    %c0_i32_1 = arith.constant 0 : i32
    return %c0_i32, %c0_i32_0 : i32, i32
  }
  func.func @transform_3(%arg0: i32) -> (i32, i32) {
    %c0_i32 = arith.constant 0 : i32
    %c0_i32_0 = arith.constant 0 : i32
    %c0_i32_1 = arith.constant 0 : i32
    return %c0_i32, %c0_i32_0 : i32, i32
  }
  func.func @transform_4(%arg0: i32) -> (i32, i32) {
    %c0_i32 = arith.constant 0 : i32
    %c0_i32_0 = arith.constant 0 : i32
    %c0_i32_1 = arith.constant 0 : i32
    return %c0_i32, %c0_i32_0 : i32, i32
  }
  func.func @transform_5(%arg0: i32) -> (i32, i32) {
    %c0_i32 = arith.constant 0 : i32
    %c0_i32_0 = arith.constant 0 : i32
    %c0_i32_1 = arith.constant 0 : i32
    return %c0_i32, %c0_i32_0 : i32, i32
  }
  func.func @transform_6(%arg0: i32) -> (i32, i32) {
    %c0_i32 = arith.constant 0 : i32
    %c0_i32_0 = arith.constant 0 : i32
    %c0_i32_1 = arith.constant 0 : i32
    return %c0_i32, %c0_i32_0 : i32, i32
  }
  func.func @transform_7(%arg0: i32) -> (i32, i32) {
    %c0_i32 = arith.constant 0 : i32
    %c0_i32_0 = arith.constant 0 : i32
    %c0_i32_1 = arith.constant 0 : i32
    return %c0_i32, %c0_i32_0 : i32, i32
  }
  func.func @transform_8(%arg0: i32) -> (i32, i32) {
    %c0_i32 = arith.constant 0 : i32
    %c0_i32_0 = arith.constant 0 : i32
    %c0_i32_1 = arith.constant 0 : i32
    return %c0_i32, %c0_i32_0 : i32, i32
  }
  func.func @transform_9(%arg0: i32) -> (i32, i32) {
    %c0_i32 = arith.constant 0 : i32
    %c0_i32_0 = arith.constant 0 : i32
    %c0_i32_1 = arith.constant 0 : i32
    return %c0_i32, %c0_i32_0 : i32, i32
  }
  func.func @transform_10(%arg0: i32) -> (i32, i32) {
    %c0_i32 = arith.constant 0 : i32
    %c0_i32_0 = arith.constant 0 : i32
    %c0_i32_1 = arith.constant 0 : i32
    return %c0_i32, %c0_i32_0 : i32, i32
  }
  func.func @transform_11(%arg0: i32) -> (i32, i32) {
    %c0_i32 = arith.constant 0 : i32
    %c0_i32_0 = arith.constant 0 : i32
    %c0_i32_1 = arith.constant 0 : i32
    return %c0_i32, %c0_i32_0 : i32, i32
  }
  func.func @transform_12(%arg0: i32) -> (i32, i32) {
    %c0_i32 = arith.constant 0 : i32
    %c0_i32_0 = arith.constant 0 : i32
    return %arg0, %c0_i32 : i32, i32
  }
}

</mosaic_0001>

<llo_original>
// kernel: tpu_custom_call.1
$region0: #{tpu_custom_call.1}
  #allocation0 [shape = 'u32[]', space=smem, size = 0x4, offset = 0x4, fixed_abs, tag = 'smem constant byte address 0x4 - core index']
  #allocation1 [shape = 'u32[144,128]{1,0:T(1,128)}', space=vmem, size = 0x12000, scoped, tag = 'internal scratch']
  %s0 = inlined_call_operand.vmem [shape: bf16[16,56], index: 0, kind: input, shape index: {}]
  %s1 = inlined_call_operand.vmem [shape: bf16[16,8], index: 1, kind: input, shape index: {}]
  %s2 = inlined_call_operand.hbm [shape: bf16[56,128], index: 2, kind: input, shape index: {}]
  %s3 = inlined_call_operand.hbm [shape: f32[1,128], index: 3, kind: input, shape index: {}]
  %s4 = inlined_call_operand.hbm [shape: bf16[128,512], index: 4, kind: input, shape index: {}]
  %s5 = inlined_call_operand.hbm [shape: bf16[128,512], index: 5, kind: input, shape index: {}]
  %s6 = inlined_call_operand.vmem [shape: f32[1,512], index: 6, kind: input, shape index: {}]
  %s7 = inlined_call_operand.hbm [shape: bf16[512,1024], index: 7, kind: input, shape index: {}]
  %s8 = inlined_call_operand.hbm [shape: bf16[512,1024], index: 8, kind: input, shape index: {}]
  %s9 = inlined_call_operand.hbm [shape: f32[1,128], index: 9, kind: input, shape index: {}]
  %s10 = inlined_call_operand.vmem [shape: bf16[8,128], index: 10, kind: input, shape index: {}]
  %s11 = inlined_call_operand.vmem [shape: bf16[8,512], index: 11, kind: input, shape index: {}]
  %s12 = inlined_call_operand.hbm [shape: f32[16,128], index: 12, kind: output, shape index: {}]
  %s13 = sld [smem:[#allocation0]]
  $region86: #{tpu_custom_call.1} parent=0
    _
  %s15 = ssub.s32 1, %s13
  %s16 = scalar_select 0, %s15, %s13
  $region1: #{tpu_custom_call.1} parent=0
    #allocation2 [shape = 'u8[14336]{0}', space=vmem, size = 0x3800, scoped, tag = 'input window, operand 2, single buffered']
    #allocation3 [shape = 's32[1]{0}', space=sflag, size = 0x4, scoped, tag = 'scoped memory for tpu_custom_call.1']
    #allocation4 [shape = 's32[1]{0}', space=sflag, size = 0x4, scoped, tag = 'scoped memory for tpu_custom_call.1']
    #allocation5 [shape = 'u8[512]{0}', space=vmem, size = 0x400, scoped, tag = 'input window, operand 3, single buffered']
    #allocation6 [shape = 's32[1]{0}', space=sflag, size = 0x4, scoped, tag = 'scoped memory for tpu_custom_call.1']
    #allocation7 [shape = 'u8[131072]{0}', space=vmem, size = 0x20000, scoped, tag = 'input window, operand 4, single buffered']
    #allocation8 [shape = 'u8[131072]{0}', space=vmem, size = 0x20000, scoped, tag = 'input window, operand 5, single buffered']
    #allocation9 [shape = 's32[1]{0}', space=sflag, size = 0x4, scoped, tag = 'scoped memory for tpu_custom_call.1']
    #allocation10 [shape = 'u8[1048576]{0}', space=vmem, size = 0x100000, scoped, tag = 'input window, operand 7, single buffered']
    #allocation11 [shape = 'u8[1048576]{0}', space=vmem, size = 0x100000, scoped, tag = 'input window, operand 8, single buffered']
    #allocation12 [shape = 's32[1]{0}', space=sflag, size = 0x4, scoped, tag = 'scoped memory for tpu_custom_call.1']
    #allocation13 [shape = 'u8[512]{0}', space=vmem, size = 0x400, scoped, tag = 'input window, operand 9, single buffered']
    #allocation14 [shape = 'u8[8192]{0}', space=vmem, size = 0x2000, scoped, tag = 'output window, operand 0, single buffered']
    %17 = vsyncpa [#allocation3], 0
    %18 = vsyncpa [#allocation6], 0
    %19 = vsyncpa [#allocation9], 0
    %20 = vsyncpa [#allocation12], 0
    %21 = vsyncpa [#allocation4], 0
    // Predicated region
    $region2: #{tpu_custom_call.1} parent=1 // pred_check
      _
    $region3: #{tpu_custom_call.1} parent=1 // pred_check_branch
      %23 = sbr.rel (0) target = $region5
    $region4: #{tpu_custom_call.1} parent=1 // pred_region
      _
    $region5: #{tpu_custom_call.1} parent=1 // pred_fallthru
      _
    // Predicated region
    $region6: #{tpu_custom_call.1} parent=1 // pred_check
      _
    $region7: #{tpu_custom_call.1} parent=1 // pred_check_branch
      %25 = sbr.rel (0) target = $region9
    $region8: #{tpu_custom_call.1} parent=1 // pred_region
      _
    $region9: #{tpu_custom_call.1} parent=1 // pred_fallthru
      _
    // Predicated region
    $region10: #{tpu_custom_call.1} parent=1 // pred_check
      _
    $region11: #{tpu_custom_call.1} parent=1 // pred_check_branch
      %27 = sbr.rel (0) target = $region13
    $region12: #{tpu_custom_call.1} parent=1 // pred_region
      %s29 = ssub.s32 448, 448
      %30 = vsyncadd [#allocation3], %s29
      %s31 = sshll.u32 [#allocation2], 4
      %s32 = int_to_ptr.vmem [resolvable:$true] %s31
      %37 = dma.hbm_to_vmem [thread:$0]  %s2, 448, %s32, [#allocation3], 64, 64, 4
    $region13: #{tpu_custom_call.1} parent=1 // pred_fallthru
      _
    // Predicated region
    $region14: #{tpu_custom_call.1} parent=1 // pred_check
      _
    $region15: #{tpu_custom_call.1} parent=1 // pred_check_branch
      %39 = sbr.rel (0) target = $region17
    $region16: #{tpu_custom_call.1} parent=1 // pred_region
      %s41 = ssub.s32 16, 16
      %42 = vsyncadd [#allocation6], %s41
      %s44 = sshll.u32 [#allocation5], 4
      %s45 = int_to_ptr.vmem [resolvable:$true] %s44
      %47 = dma.hbm_to_vmem [thread:$0]  %s3, 16, %s45, [#allocation6]
    $region17: #{tpu_custom_call.1} parent=1 // pred_fallthru
      _
    // Predicated region
    $region18: #{tpu_custom_call.1} parent=1 // pred_check
      _
    $region19: #{tpu_custom_call.1} parent=1 // pred_check_branch
      %49 = sbr.rel (0) target = $region21
    $region20: #{tpu_custom_call.1} parent=1 // pred_region
      %s51 = ssub.s32 4096, 4096
      %52 = vsyncadd [#allocation6], %s51
      %s53 = sshll.u32 [#allocation7], 4
      %s54 = int_to_ptr.vmem [resolvable:$true] %s53
      %59 = dma.hbm_to_vmem [thread:$0]  %s4, 4096, %s54, [#allocation6], 256, 256, 16
    $region21: #{tpu_custom_call.1} parent=1 // pred_fallthru
      _
    // Predicated region
    $region22: #{tpu_custom_call.1} parent=1 // pred_check
      _
    $region23: #{tpu_custom_call.1} parent=1 // pred_check_branch
      %61 = sbr.rel (0) target = $region25
    $region24: #{tpu_custom_call.1} parent=1 // pred_region
      %s63 = ssub.s32 4096, 4096
      %64 = vsyncadd [#allocation9], %s63
      %s65 = sshll.u32 [#allocation8], 4
      %s66 = int_to_ptr.vmem [resolvable:$true] %s65
      %71 = dma.hbm_to_vmem [thread:$0]  %s5, 4096, %s66, [#allocation9], 256, 256, 16
    $region25: #{tpu_custom_call.1} parent=1 // pred_fallthru
      _
    // Predicated region
    $region26: #{tpu_custom_call.1} parent=1 // pred_check
      _
    $region27: #{tpu_custom_call.1} parent=1 // pred_check_branch
      %73 = sbr.rel (0) target = $region29
    $region28: #{tpu_custom_call.1} parent=1 // pred_region
      _
    $region29: #{tpu_custom_call.1} parent=1 // pred_fallthru
      _
    // Predicated region
    $region30: #{tpu_custom_call.1} parent=1 // pred_check
      _
    $region31: #{tpu_custom_call.1} parent=1 // pred_check_branch
      %75 = sbr.rel (0) target = $region33
    $region32: #{tpu_custom_call.1} parent=1 // pred_region
      %s77 = ssub.s32 32768, 32768
      %78 = vsyncadd [#allocation9], %s77
      %s79 = sshll.u32 [#allocation10], 4
      %s80 = int_to_ptr.vmem [resolvable:$true] %s79
      %85 = dma.hbm_to_vmem [thread:$0]  %s7, 32768, %s80, [#allocation9], 512, 512, 32
    $region33: #{tpu_custom_call.1} parent=1 // pred_fallthru
      _
    // Predicated region
    $region34: #{tpu_custom_call.1} parent=1 // pred_check
      _
    $region35: #{tpu_custom_call.1} parent=1 // pred_check_branch
      %87 = sbr.rel (0) target = $region37
    $region36: #{tpu_custom_call.1} parent=1 // pred_region
      %s89 = ssub.s32 32768, 32768
      %90 = vsyncadd [#allocation12], %s89
      %s91 = sshll.u32 [#allocation11], 4
      %s92 = int_to_ptr.vmem [resolvable:$true] %s91
      %97 = dma.hbm_to_vmem [thread:$0]  %s8, 32768, %s92, [#allocation12], 512, 512, 32
    $region37: #{tpu_custom_call.1} parent=1 // pred_fallthru
      _
    // Predicated region
    $region38: #{tpu_custom_call.1} parent=1 // pred_check
      _
    $region39: #{tpu_custom_call.1} parent=1 // pred_check_branch
      %99 = sbr.rel (0) target = $region41
    $region40: #{tpu_custom_call.1} parent=1 // pred_region
      %s101 = ssub.s32 16, 16
      %102 = vsyncadd [#allocation12], %s101
      %s104 = sshll.u32 [#allocation13], 4
      %s105 = int_to_ptr.vmem [resolvable:$true] %s104
      %107 = dma.hbm_to_vmem [thread:$0]  %s9, 16, %s105, [#allocation12]
    $region41: #{tpu_custom_call.1} parent=1 // pred_fallthru
      _
    // Predicated region
    $region42: #{tpu_custom_call.1} parent=1 // pred_check
      _
    $region43: #{tpu_custom_call.1} parent=1 // pred_check_branch
      %109 = sbr.rel (0) target = $region45
    $region44: #{tpu_custom_call.1} parent=1 // pred_region
      _
    $region45: #{tpu_custom_call.1} parent=1 // pred_fallthru
      _
    // Predicated region
    $region46: #{tpu_custom_call.1} parent=1 // pred_check
      _
    $region47: #{tpu_custom_call.1} parent=1 // pred_check_branch
      %111 = sbr.rel (0) target = $region49
    $region48: #{tpu_custom_call.1} parent=1 // pred_region
      _
    $region49: #{tpu_custom_call.1} parent=1 // pred_fallthru
      _
    // Predicated region
    $region50: #{tpu_custom_call.1} parent=1 // pred_check
      _
    $region51: #{tpu_custom_call.1} parent=1 // pred_check_branch
      %113 = sbr.rel (0) target = $region53
    $region52: #{tpu_custom_call.1} parent=1 // pred_region
      %114 = dma.done [#allocation3], 448
    $region53: #{tpu_custom_call.1} parent=1 // pred_fallthru
      _
    // Predicated region
    $region54: #{tpu_custom_call.1} parent=1 // pred_check
      _
    $region55: #{tpu_custom_call.1} parent=1 // pred_check_branch
      %116 = sbr.rel (0) target = $region57
    $region56: #{tpu_custom_call.1} parent=1 // pred_region
      %117 = dma.done [#allocation6], 16
    $region57: #{tpu_custom_call.1} parent=1 // pred_fallthru
      _
    // Predicated region
    $region58: #{tpu_custom_call.1} parent=1 // pred_check
      _
    $region59: #{tpu_custom_call.1} parent=1 // pred_check_branch
      %119 = sbr.rel (0) target = $region61
    $region60: #{tpu_custom_call.1} parent=1 // pred_region
      %120 = dma.done [#allocation6], 4096
    $region61: #{tpu_custom_call.1} parent=1 // pred_fallthru
      _
    // Predicated region
    $region62: #{tpu_custom_call.1} parent=1 // pred_check
      _
    $region63: #{tpu_custom_call.1} parent=1 // pred_check_branch
      %122 = sbr.rel (0) target = $region65
    $region64: #{tpu_custom_call.1} parent=1 // pred_region
      %123 = dma.done [#allocation9], 4096
    $region65: #{tpu_custom_call.1} parent=1 // pred_fallthru
      _
    // Predicated region
    $region66: #{tpu_custom_call.1} parent=1 // pred_check
      _
    $region67: #{tpu_custom_call.1} parent=1 // pred_check_branch
      %125 = sbr.rel (0) target = $region69
    $region68: #{tpu_custom_call.1} parent=1 // pred_region
      %126 = dma.done [#allocation9], 32768
    $region69: #{tpu_custom_call.1} parent=1 // pred_fallthru
      _
    // Predicated region
    $region70: #{tpu_custom_call.1} parent=1 // pred_check
      _
    $region71: #{tpu_custom_call.1} parent=1 // pred_check_branch
      %128 = sbr.rel (0) target = $region73
    $region72: #{tpu_custom_call.1} parent=1 // pred_region
      %129 = dma.done [#allocation12], 32768
    $region73: #{tpu_custom_call.1} parent=1 // pred_fallthru
      _
    // Predicated region
    $region74: #{tpu_custom_call.1} parent=1 // pred_check
      _
    $region75: #{tpu_custom_call.1} parent=1 // pred_check_branch
      %131 = sbr.rel (0) target = $region77
    $region76: #{tpu_custom_call.1} parent=1 // pred_region
      %132 = dma.done [#allocation12], 16
    $region77: #{tpu_custom_call.1} parent=1 // pred_fallthru
      _
    %v134 = vld [vmem:[%s0] sm:$0xf]
    %v135 = vld [vmem:[%s0 + $0x4] sm:$0xf]
    %v136 = vld [vmem:[%s1] sm:$0xf]
    %v137 = vld [vmem:[%s1 + $0x4] sm:$0xf]
    %v138 = vld [vmem:[%s10] sm:$0xf]
    %v141 = vunpack.c.l.b16 %v136
    %v142 = vunpack.c.l.b16 %v137
    %v143 = vpack.c.b16 %v142, %v141
    %vm144 = vcmask 64512
    %v146 = vsel %vm144, %v143, 0
    %vm148 = vcmask 1043456
    %v150 = vsel %vm148, %v138, 0
    %152 = vmatprep.subr.bf16.mxu0 0
    %153 = vmatpush1.bf16.msra.mxu0 0
    %154 = vmatprep.subr.bf16.mxu0 0
    %155 = vmatpush1.bf16.msra.mxu0 0
    %156 = vmatprep.subr.bf16.mxu0 0
    %157 = vmatpush1.bf16.msra.mxu0 0
    %158 = vmatprep.subr.bf16.mxu0 0
    %159 = vmatpush1.bf16.msra.mxu0 0
    %160 = vmatprep.subr.bf16.mxu0 0
    %161 = vmatpush1.bf16.msra.mxu0 0
    %162 = vmatprep.subr.bf16.mxu0 0
    %163 = vmatpush1.bf16.msra.mxu0 0
    %164 = vmatprep.subr.bf16.mxu0 0
    %165 = vmatpush1.bf16.msra.mxu0 0
    %166 = vmatprep.subr.bf16.mxu0 0
    %167 = vmatpush1.bf16.msra.mxu0 %v150
    %168 = vmatprep.subr.bf16.mxu0 0
    %169 = vmatpush2.bf16.msra.mxu0 0
    %170 = vmatprep.subr.bf16.mxu0 0
    %171 = vmatpush2.bf16.msra.mxu0 0
    %172 = vmatprep.subr.bf16.mxu0 0
    %173 = vmatpush2.bf16.msra.mxu0 0
    %174 = vmatprep.subr.bf16.mxu0 0
    %175 = vmatpush2.bf16.msra.mxu0 0
    %176 = vmatprep.subr.bf16.mxu0 0
    %177 = vmatpush2.bf16.msra.mxu0 0
    %178 = vmatprep.subr.bf16.mxu0 0
    %179 = vmatpush2.bf16.msra.mxu0 0
    %180 = vmatprep.subr.bf16.mxu0 0
    %181 = vmatpush2.bf16.msra.mxu0 0
    %182 = vmatprep.subr.bf16.mxu0 0
    %183 = vmatpush2.bf16.msra.mxu0 0
    %184 = vmatprep.mubr.bf16.mxu0 0
    %185 = vmatmul.mubr.bf16.gmra.mxu0 %v146
    %v186 = vpop.f32.mrf.mxu0
    %v187 = vadd.f32 0.0, %v186
    %v188 = vpop.f32.mrf.mxu0
    %v189 = vpop.f32.mrf.mxu0
    %v190 = vadd.f32 0.0, %v189
    %v191 = vpop.f32.mrf.mxu0
    %192 = vdwg.mxu0
    %v193 = vld [vmem:[%s11] sm:$0xff]
    %v194 = vld [vmem:[%s11 + $0x8] sm:$0xff]
    %v197 = vunpack.c.l.b16 %v193
    %v198 = vunpack.c.h.b16 %v193
    %v199 = vunpack.c.l.b16 %v194
    %v200 = vunpack.c.h.b16 %v194
    %v201 = vpack.c.b16 %v197, %v197
    %v202 = vpack.c.b16 %v198, %v198
    %v203 = vpack.c.b16 %v199, %v199
    %v204 = vpack.c.b16 %v200, %v200
    %v206 = vsel %vm148, %v201, 0
    %v209 = vsel %vm148, %v202, 0
    %v212 = vsel %vm148, %v203, 0
    %v215 = vsel %vm148, %v204, 0
    %217 = vmatprep.subr.bf16.mxu0 0
    %218 = vmatpush1.bf16.msra.mxu0 0
    %219 = vmatprep.subr.bf16.mxu0 0
    %220 = vmatpush1.bf16.msra.mxu0 0
    %221 = vmatprep.subr.bf16.mxu0 0
    %222 = vmatpush1.bf16.msra.mxu0 0
    %223 = vmatprep.subr.bf16.mxu0 0
    %224 = vmatpush1.bf16.msra.mxu0 0
    %225 = vmatprep.subr.bf16.mxu0 0
    %226 = vmatpush1.bf16.msra.mxu0 0
    %227 = vmatprep.subr.bf16.mxu0 0
    %228 = vmatpush1.bf16.msra.mxu0 0
    %229 = vmatprep.subr.bf16.mxu0 0
    %230 = vmatpush1.bf16.msra.mxu0 0
    %231 = vmatprep.subr.bf16.mxu0 %v209
    %232 = vmatpush1.bf16.msra.mxu0 %v206
    %233 = vmatprep.subr.bf16.mxu0 0
    %234 = vmatpush2.bf16.msra.mxu0 0
    %235 = vmatprep.subr.bf16.mxu0 0
    %236 = vmatpush2.bf16.msra.mxu0 0
    %237 = vmatprep.subr.bf16.mxu0 0
    %238 = vmatpush2.bf16.msra.mxu0 0
    %239 = vmatprep.subr.bf16.mxu0 0
    %240 = vmatpush2.bf16.msra.mxu0 0
    %241 = vmatprep.subr.bf16.mxu0 0
    %242 = vmatpush2.bf16.msra.mxu0 0
    %243 = vmatprep.subr.bf16.mxu0 0
    %244 = vmatpush2.bf16.msra.mxu0 0
    %245 = vmatprep.subr.bf16.mxu0 0
    %246 = vmatpush2.bf16.msra.mxu0 0
    %247 = vmatprep.subr.bf16.mxu0 0
    %248 = vmatpush2.bf16.msra.mxu0 0
    %249 = vmatprep.mubr.bf16.mxu0 0
    %250 = vmatmul.mubr.bf16.gmra.mxu0 %v146
    %v251 = vpop.f32.mrf.mxu0
    %v252 = vadd.f32 0.0, %v251
    %v253 = vpop.f32.mrf.mxu0
    %v254 = vadd.f32 0.0, %v253
    %v255 = vpop.f32.mrf.mxu0
    %v256 = vadd.f32 0.0, %v255
    %v257 = vpop.f32.mrf.mxu0
    %v258 = vadd.f32 0.0, %v257
    %259 = vdwg.mxu0
    %260 = vmatprep.subr.bf16.mxu0 0
    %261 = vmatpush1.bf16.msra.mxu0 0
    %262 = vmatprep.subr.bf16.mxu0 0
    %263 = vmatpush1.bf16.msra.mxu0 0
    %264 = vmatprep.subr.bf16.mxu0 0
    %265 = vmatpush1.bf16.msra.mxu0 0
    %266 = vmatprep.subr.bf16.mxu0 0
    %267 = vmatpush1.bf16.msra.mxu0 0
    %268 = vmatprep.subr.bf16.mxu0 0
    %269 = vmatpush1.bf16.msra.mxu0 0
    %270 = vmatprep.subr.bf16.mxu0 0
    %271 = vmatpush1.bf16.msra.mxu0 0
    %272 = vmatprep.subr.bf16.mxu0 0
    %273 = vmatpush1.bf16.msra.mxu0 0
    %274 = vmatprep.subr.bf16.mxu0 %v215
    %275 = vmatpush1.bf16.msra.mxu0 %v212
    %276 = vmatprep.subr.bf16.mxu0 0
    %277 = vmatpush2.bf16.msra.mxu0 0
    %278 = vmatprep.subr.bf16.mxu0 0
    %279 = vmatpush2.bf16.msra.mxu0 0
    %280 = vmatprep.subr.bf16.mxu0 0
    %281 = vmatpush2.bf16.msra.mxu0 0
    %282 = vmatprep.subr.bf16.mxu0 0
    %283 = vmatpush2.bf16.msra.mxu0 0
    %284 = vmatprep.subr.bf16.mxu0 0
    %285 = vmatpush2.bf16.msra.mxu0 0
    %286 = vmatprep.subr.bf16.mxu0 0
    %287 = vmatpush2.bf16.msra.mxu0 0
    %288 = vmatprep.subr.bf16.mxu0 0
    %289 = vmatpush2.bf16.msra.mxu0 0
    %290 = vmatprep.subr.bf16.mxu0 0
    %291 = vmatpush2.bf16.msra.mxu0 0
    %292 = vmatprep.mubr.bf16.mxu0 0
    %293 = vmatmul.mubr.bf16.gmra.mxu0 %v146
    %v294 = vpop.f32.mrf.mxu0
    %v295 = vadd.f32 0.0, %v294
    %v296 = vpop.f32.mrf.mxu0
    %v297 = vadd.f32 0.0, %v296
    %v298 = vpop.f32.mrf.mxu0
    %v299 = vadd.f32 0.0, %v298
    %v300 = vpop.f32.mrf.mxu0
    %v301 = vadd.f32 0.0, %v300
    %302 = vdwg.mxu0
    %v303 = vld [vmem:[#allocation2] sm:$0xf]
    %v304 = vld [vmem:[#allocation2 + $0x4] sm:$0xf]
    %v305 = vld [vmem:[#allocation2 + $0x8] sm:$0xf]
    %v306 = vld [vmem:[#allocation2 + $0xc] sm:$0xf]
    %v307 = vld [vmem:[#allocation2 + $0x10] sm:$0xf]
    %v308 = vld [vmem:[#allocation2 + $0x14] sm:$0xf]
    %v309 = vld [vmem:[#allocation2 + $0x18] sm:$0xf]
    %v310 = vld [vmem:[#allocation5] sm:$0x1]
    %v312 = vlaneseq
    %v313 = vshrl.u32 %v312, 7
    %v314 = vsub.s32 0, %v313
    %v315 = vrot.slane %v310, %v314
    %v319 = vunpack.c.l.b16 %v134
    %v320 = vunpack.c.l.b16 %v135
    %v321 = vpack.c.b16 %v320, %v319
    %v329 = vunpack.c.l.b16 %v303
    %v330 = vunpack.c.l.b16 %v304
    %v331 = vunpack.c.l.b16 %v305
    %v332 = vunpack.c.l.b16 %v306
    %v333 = vunpack.c.l.b16 %v307
    %v334 = vunpack.c.l.b16 %v308
    %v335 = vunpack.c.l.b16 %v309
    %v336 = vpack.c.b16 %v330, %v329
    %v337 = vpack.c.b16 %v332, %v331
    %v338 = vpack.c.b16 %v334, %v333
    %v339 = vpack.c.b16 %v335, %v335
    %vm343 = vcmask 457728
    %v345 = vsel %vm343, %v321, 0
    %v348 = vsel %vm148, %v339, 0
    %350 = vmatprep.subr.bf16.mxu0 0
    %351 = vmatpush1.bf16.msra.mxu0 0
    %352 = vmatprep.subr.bf16.mxu0 0
    %353 = vmatpush1.bf16.msra.mxu0 0
    %354 = vmatprep.subr.bf16.mxu0 0
    %355 = vmatpush1.bf16.msra.mxu0 0
    %356 = vmatprep.subr.bf16.mxu0 0
    %357 = vmatpush1.bf16.msra.mxu0 0
    %358 = vmatprep.subr.bf16.mxu0 0
    %359 = vmatpush1.bf16.msra.mxu0 %v348
    %360 = vmatprep.subr.bf16.mxu0 0
    %361 = vmatpush1.bf16.msra.mxu0 %v338
    %362 = vmatprep.subr.bf16.mxu0 0
    %363 = vmatpush1.bf16.msra.mxu0 %v337
    %364 = vmatprep.subr.bf16.mxu0 0
    %365 = vmatpush1.bf16.msra.mxu0 %v336
    %366 = vmatprep.subr.bf16.mxu0 0
    %367 = vmatpush2.bf16.msra.mxu0 0
    %368 = vmatprep.subr.bf16.mxu0 0
    %369 = vmatpush2.bf16.msra.mxu0 0
    %370 = vmatprep.subr.bf16.mxu0 0
    %371 = vmatpush2.bf16.msra.mxu0 0
    %372 = vmatprep.subr.bf16.mxu0 0
    %373 = vmatpush2.bf16.msra.mxu0 0
    %374 = vmatprep.subr.bf16.mxu0 0
    %375 = vmatpush2.bf16.msra.mxu0 0
    %376 = vmatprep.subr.bf16.mxu0 0
    %377 = vmatpush2.bf16.msra.mxu0 0
    %378 = vmatprep.subr.bf16.mxu0 0
    %379 = vmatpush2.bf16.msra.mxu0 0
    %380 = vmatprep.subr.bf16.mxu0 0
    %381 = vmatpush2.bf16.msra.mxu0 0
    %382 = vmatprep.mubr.bf16.mxu0 0
    %383 = vmatmul.mubr.bf16.gmra.mxu0 %v345
    %v384 = vpop.f32.mrf.mxu0
    %v385 = vadd.f32 %v315, %v384
    %v386 = vpop.f32.mrf.mxu0
    %v387 = vpop.f32.mrf.mxu0
    %v388 = vadd.f32 %v315, %v387
    %v389 = vpop.f32.mrf.mxu0
    %390 = vdwg.mxu0
    %v391 = vmax.f32 %v385, 0.0
    %v392 = vmax.f32 %v388, 0.0
    %393 = vrot.lane.b32.xlu0 %v391, 64
    %v394 = vpop.permute.xlu0 %393
    %395 = vrot.lane.b32.xlu0 %v392, 64
    %v396 = vpop.permute.xlu0 %395
    %v397 = vmax.f32 %v391, %v394
    %v398 = vmax.f32 %v392, %v396
    %399 = vrot.lane.b32.xlu0 %v397, 32
    %v400 = vpop.permute.xlu0 %399
    %401 = vrot.lane.b32.xlu0 %v398, 32
    %v402 = vpop.permute.xlu0 %401
    %v403 = vmax.f32 %v397, %v400
    %v404 = vmax.f32 %v398, %v402
    %405 = vrot.lane.b32.xlu0 %v403, 16
    %v406 = vpop.permute.xlu0 %405
    %407 = vrot.lane.b32.xlu0 %v404, 16
    %v408 = vpop.permute.xlu0 %407
    %v409 = vmax.f32 %v403, %v406
    %v410 = vmax.f32 %v404, %v408
    %v411 = vmul.f32 %v187, %v391
    %v412 = vmul.f32 %v190, %v392
    %v413 = vpack.c.bf16 %v412, %v411
    %v414 = vmul.f32 %v187, %v409
    %v415 = vmul.f32 %v190, %v410
    %v416 = vpack.c.bf16 %v415, %v414
    %v417 = vld [vmem:[#allocation7] sm:$0xff]
    %v418 = vld [vmem:[#allocation7 + $0x8] sm:$0xff]
    %v419 = vld [vmem:[#allocation7 + $0x10] sm:$0xff]
    %v420 = vld [vmem:[#allocation7 + $0x18] sm:$0xff]
    %v421 = vld [vmem:[#allocation7 + $0x20] sm:$0xff]
    %v422 = vld [vmem:[#allocation7 + $0x28] sm:$0xff]
    %v423 = vld [vmem:[#allocation7 + $0x30] sm:$0xff]
    %v424 = vld [vmem:[#allocation7 + $0x38] sm:$0xff]
    %v425 = vld [vmem:[#allocation7 + $0x40] sm:$0xff]
    %v426 = vld [vmem:[#allocation7 + $0x48] sm:$0xff]
    %v427 = vld [vmem:[#allocation7 + $0x50] sm:$0xff]
    %v428 = vld [vmem:[#allocation7 + $0x58] sm:$0xff]
    %v429 = vld [vmem:[#allocation7 + $0x60] sm:$0xff]
    %v430 = vld [vmem:[#allocation7 + $0x68] sm:$0xff]
    %v431 = vld [vmem:[#allocation7 + $0x70] sm:$0xff]
    %v432 = vld [vmem:[#allocation7 + $0x78] sm:$0xff]
    %v433 = vld [vmem:[#allocation7 + $0x80] sm:$0xff]
    %v434 = vld [vmem:[#allocation7 + $0x88] sm:$0xff]
    %v435 = vld [vmem:[#allocation7 + $0x90] sm:$0xff]
    %v436 = vld [vmem:[#allocation7 + $0x98] sm:$0xff]
    %v437 = vld [vmem:[#allocation7 + $0xa0] sm:$0xff]
    %v438 = vld [vmem:[#allocation7 + $0xa8] sm:$0xff]
    %v439 = vld [vmem:[#allocation7 + $0xb0] sm:$0xff]
    %v440 = vld [vmem:[#allocation7 + $0xb8] sm:$0xff]
    %v441 = vld [vmem:[#allocation7 + $0xc0] sm:$0xff]
    %v442 = vld [vmem:[#allocation7 + $0xc8] sm:$0xff]
    %v443 = vld [vmem:[#allocation7 + $0xd0] sm:$0xff]
    %v444 = vld [vmem:[#allocation7 + $0xd8] sm:$0xff]
    %v445 = vld [vmem:[#allocation7 + $0xe0] sm:$0xff]
    %v446 = vld [vmem:[#allocation7 + $0xe8] sm:$0xff]
    %v447 = vld [vmem:[#allocation7 + $0xf0] sm:$0xff]
    %v448 = vld [vmem:[#allocation7 + $0xf8] sm:$0xff]
    %v449 = vld [vmem:[#allocation8] sm:$0xff]
    %v450 = vld [vmem:[#allocation8 + $0x8] sm:$0xff]
    %v451 = vld [vmem:[#allocation8 + $0x10] sm:$0xff]
    %v452 = vld [vmem:[#allocation8 + $0x18] sm:$0xff]
    %v453 = vld [vmem:[#allocation8 + $0x20] sm:$0xff]
    %v454 = vld [vmem:[#allocation8 + $0x28] sm:$0xff]
    %v455 = vld [vmem:[#allocation8 + $0x30] sm:$0xff]
    %v456 = vld [vmem:[#allocation8 + $0x38] sm:$0xff]
    %v457 = vld [vmem:[#allocation8 + $0x40] sm:$0xff]
    %v458 = vld [vmem:[#allocation8 + $0x48] sm:$0xff]
    %v459 = vld [vmem:[#allocation8 + $0x50] sm:$0xff]
    %v460 = vld [vmem:[#allocation8 + $0x58] sm:$0xff]
    %v461 = vld [vmem:[#allocation8 + $0x60] sm:$0xff]
    %v462 = vld [vmem:[#allocation8 + $0x68] sm:$0xff]
    %v463 = vld [vmem:[#allocation8 + $0x70] sm:$0xff]
    %v464 = vld [vmem:[#allocation8 + $0x78] sm:$0xff]
    %v465 = vld [vmem:[#allocation8 + $0x80] sm:$0xff]
    %v466 = vld [vmem:[#allocation8 + $0x88] sm:$0xff]
    %v467 = vld [vmem:[#allocation8 + $0x90] sm:$0xff]
    %v468 = vld [vmem:[#allocation8 + $0x98] sm:$0xff]
    %v469 = vld [vmem:[#allocation8 + $0xa0] sm:$0xff]
    %v470 = vld [vmem:[#allocation8 + $0xa8] sm:$0xff]
    %v471 = vld [vmem:[#allocation8 + $0xb0] sm:$0xff]
    %v472 = vld [vmem:[#allocation8 + $0xb8] sm:$0xff]
    %v473 = vld [vmem:[#allocation8 + $0xc0] sm:$0xff]
    %v474 = vld [vmem:[#allocation8 + $0xc8] sm:$0xff]
    %v475 = vld [vmem:[#allocation8 + $0xd0] sm:$0xff]
    %v476 = vld [vmem:[#allocation8 + $0xd8] sm:$0xff]
    %v477 = vld [vmem:[#allocation8 + $0xe0] sm:$0xff]
    %v478 = vld [vmem:[#allocation8 + $0xe8] sm:$0xff]
    %v479 = vld [vmem:[#allocation8 + $0xf0] sm:$0xff]
    %v480 = vld [vmem:[#allocation8 + $0xf8] sm:$0xff]
    %v513 = vunpack.c.l.b16 %v449
    %v514 = vunpack.c.h.b16 %v449
    %v515 = vunpack.c.l.b16 %v450
    %v516 = vunpack.c.h.b16 %v450
    %v517 = vunpack.c.l.b16 %v451
    %v518 = vunpack.c.h.b16 %v451
    %v519 = vunpack.c.l.b16 %v452
    %v520 = vunpack.c.h.b16 %v452
    %v521 = vunpack.c.l.b16 %v453
    %v522 = vunpack.c.h.b16 %v453
    %v523 = vunpack.c.l.b16 %v454
    %v524 = vunpack.c.h.b16 %v454
    %v525 = vunpack.c.l.b16 %v455
    %v526 = vunpack.c.h.b16 %v455
    %v527 = vunpack.c.l.b16 %v456
    %v528 = vunpack.c.h.b16 %v456
    %v529 = vunpack.c.l.b16 %v457
    %v530 = vunpack.c.h.b16 %v457
    %v531 = vunpack.c.l.b16 %v458
    %v532 = vunpack.c.h.b16 %v458
    %v533 = vunpack.c.l.b16 %v459
    %v534 = vunpack.c.h.b16 %v459
    %v535 = vunpack.c.l.b16 %v460
    %v536 = vunpack.c.h.b16 %v460
    %v537 = vunpack.c.l.b16 %v461
    %v538 = vunpack.c.h.b16 %v461
    %v539 = vunpack.c.l.b16 %v462
    %v540 = vunpack.c.h.b16 %v462
    %v541 = vunpack.c.l.b16 %v463
    %v542 = vunpack.c.h.b16 %v463
    %v543 = vunpack.c.l.b16 %v464
    %v544 = vunpack.c.h.b16 %v464
    %v545 = vunpack.c.l.b16 %v465
    %v546 = vunpack.c.h.b16 %v465
    %v547 = vunpack.c.l.b16 %v466
    %v548 = vunpack.c.h.b16 %v466
    %v549 = vunpack.c.l.b16 %v467
    %v550 = vunpack.c.h.b16 %v467
    %v551 = vunpack.c.l.b16 %v468
    %v552 = vunpack.c.h.b16 %v468
    %v553 = vunpack.c.l.b16 %v469
    %v554 = vunpack.c.h.b16 %v469
    %v555 = vunpack.c.l.b16 %v470
    %v556 = vunpack.c.h.b16 %v470
    %v557 = vunpack.c.l.b16 %v471
    %v558 = vunpack.c.h.b16 %v471
    %v559 = vunpack.c.l.b16 %v472
    %v560 = vunpack.c.h.b16 %v472
    %v561 = vunpack.c.l.b16 %v473
    %v562 = vunpack.c.h.b16 %v473
    %v563 = vunpack.c.l.b16 %v474
    %v564 = vunpack.c.h.b16 %v474
    %v565 = vunpack.c.l.b16 %v475
    %v566 = vunpack.c.h.b16 %v475
    %v567 = vunpack.c.l.b16 %v476
    %v568 = vunpack.c.h.b16 %v476
    %v569 = vunpack.c.l.b16 %v477
    %v570 = vunpack.c.h.b16 %v477
    %v571 = vunpack.c.l.b16 %v478
    %v572 = vunpack.c.h.b16 %v478
    %v573 = vunpack.c.l.b16 %v479
    %v574 = vunpack.c.h.b16 %v479
    %v575 = vunpack.c.l.b16 %v480
    %v576 = vunpack.c.h.b16 %v480
    %v577 = vpack.c.b16 %v517, %v513
    %v578 = vpack.c.b16 %v518, %v514
    %v579 = vpack.c.b16 %v519, %v515
    %v580 = vpack.c.b16 %v520, %v516
    %v581 = vpack.c.b16 %v525, %v521
    %v582 = vpack.c.b16 %v526, %v522
    %v583 = vpack.c.b16 %v527, %v523
    %v584 = vpack.c.b16 %v528, %v524
    %v585 = vpack.c.b16 %v533, %v529
    %v586 = vpack.c.b16 %v534, %v530
    %v587 = vpack.c.b16 %v535, %v531
    %v588 = vpack.c.b16 %v536, %v532
    %v589 = vpack.c.b16 %v541, %v537
    %v590 = vpack.c.b16 %v542, %v538
    %v591 = vpack.c.b16 %v543, %v539
    %v592 = vpack.c.b16 %v544, %v540
    %v593 = vpack.c.b16 %v549, %v545
    %v594 = vpack.c.b16 %v550, %v546
    %v595 = vpack.c.b16 %v551, %v547
    %v596 = vpack.c.b16 %v552, %v548
    %v597 = vpack.c.b16 %v557, %v553
    %v598 = vpack.c.b16 %v558, %v554
    %v599 = vpack.c.b16 %v559, %v555
    %v600 = vpack.c.b16 %v560, %v556
    %v601 = vpack.c.b16 %v565, %v561
    %v602 = vpack.c.b16 %v566, %v562
    %v603 = vpack.c.b16 %v567, %v563
    %v604 = vpack.c.b16 %v568, %v564
    %v605 = vpack.c.b16 %v573, %v569
    %v606 = vpack.c.b16 %v574, %v570
    %v607 = vpack.c.b16 %v575, %v571
    %v608 = vpack.c.b16 %v576, %v572
    %641 = vmatprep.subr.bf16.mxu0 %v606
    %642 = vmatpush1.bf16.msra.mxu0 %v605
    %643 = vmatprep.subr.bf16.mxu0 %v602
    %644 = vmatpush1.bf16.msra.mxu0 %v601
    %645 = vmatprep.subr.bf16.mxu0 %v598
    %646 = vmatpush1.bf16.msra.mxu0 %v597
    %647 = vmatprep.subr.bf16.mxu0 %v594
    %648 = vmatpush1.bf16.msra.mxu0 %v593
    %649 = vmatprep.subr.bf16.mxu0 %v590
    %650 = vmatpush1.bf16.msra.mxu0 %v589
    %651 = vmatprep.subr.bf16.mxu0 %v586
    %652 = vmatpush1.bf16.msra.mxu0 %v585
    %653 = vmatprep.subr.bf16.mxu0 %v582
    %654 = vmatpush1.bf16.msra.mxu0 %v581
    %655 = vmatprep.subr.bf16.mxu0 %v578
    %656 = vmatpush1.bf16.msra.mxu0 %v577
    %657 = vmatprep.subr.bf16.mxu0 0
    %658 = vmatpush2.bf16.msra.mxu0 0
    %659 = vmatprep.subr.bf16.mxu0 0
    %660 = vmatpush2.bf16.msra.mxu0 0
    %661 = vmatprep.subr.bf16.mxu0 0
    %662 = vmatpush2.bf16.msra.mxu0 0
    %663 = vmatprep.subr.bf16.mxu0 0
    %664 = vmatpush2.bf16.msra.mxu0 0
    %665 = vmatprep.subr.bf16.mxu0 0
    %666 = vmatpush2.bf16.msra.mxu0 0
    %667 = vmatprep.subr.bf16.mxu0 0
    %668 = vmatpush2.bf16.msra.mxu0 0
    %669 = vmatprep.subr.bf16.mxu0 0
    %670 = vmatpush2.bf16.msra.mxu0 0
    %671 = vmatprep.subr.bf16.mxu0 0
    %672 = vmatpush2.bf16.msra.mxu0 0
    %673 = vmatprep.mubr.bf16.mxu0 0
    %674 = vmatmul.mubr.bf16.gmra.mxu0 %v416
    %v675 = vpop.f32.mrf.mxu0
    %v676 = vadd.f32 0.0, %v675
    %v677 = vpop.f32.mrf.mxu0
    %v678 = vadd.f32 0.0, %v677
    %v679 = vpop.f32.mrf.mxu0
    %v680 = vadd.f32 0.0, %v679
    %v681 = vpop.f32.mrf.mxu0
    %v682 = vadd.f32 0.0, %v681
    %683 = vdwg.mxu0
    %684 = vmatprep.subr.bf16.mxu0 %v608
    %685 = vmatpush1.bf16.msra.mxu0 %v607
    %686 = vmatprep.subr.bf16.mxu0 %v604
    %687 = vmatpush1.bf16.msra.mxu0 %v603
    %688 = vmatprep.subr.bf16.mxu0 %v600
    %689 = vmatpush1.bf16.msra.mxu0 %v599
    %690 = vmatprep.subr.bf16.mxu0 %v596
    %691 = vmatpush1.bf16.msra.mxu0 %v595
    %692 = vmatprep.subr.bf16.mxu0 %v592
    %693 = vmatpush1.bf16.msra.mxu0 %v591
    %694 = vmatprep.subr.bf16.mxu0 %v588
    %695 = vmatpush1.bf16.msra.mxu0 %v587
    %696 = vmatprep.subr.bf16.mxu0 %v584
    %697 = vmatpush1.bf16.msra.mxu0 %v583
    %698 = vmatprep.subr.bf16.mxu0 %v580
    %699 = vmatpush1.bf16.msra.mxu0 %v579
    %700 = vmatprep.subr.bf16.mxu0 0
    %701 = vmatpush2.bf16.msra.mxu0 0
    %702 = vmatprep.subr.bf16.mxu0 0
    %703 = vmatpush2.bf16.msra.mxu0 0
    %704 = vmatprep.subr.bf16.mxu0 0
    %705 = vmatpush2.bf16.msra.mxu0 0
    %706 = vmatprep.subr.bf16.mxu0 0
    %707 = vmatpush2.bf16.msra.mxu0 0
    %708 = vmatprep.subr.bf16.mxu0 0
    %709 = vmatpush2.bf16.msra.mxu0 0
    %710 = vmatprep.subr.bf16.mxu0 0
    %711 = vmatpush2.bf16.msra.mxu0 0
    %712 = vmatprep.subr.bf16.mxu0 0
    %713 = vmatpush2.bf16.msra.mxu0 0
    %714 = vmatprep.subr.bf16.mxu0 0
    %715 = vmatpush2.bf16.msra.mxu0 0
    %716 = vmatprep.mubr.bf16.mxu0 0
    %717 = vmatmul.mubr.bf16.gmra.mxu0 %v416
    %v718 = vpop.f32.mrf.mxu0
    %v719 = vadd.f32 0.0, %v718
    %v720 = vpop.f32.mrf.mxu0
    %v721 = vadd.f32 0.0, %v720
    %v722 = vpop.f32.mrf.mxu0
    %v723 = vadd.f32 0.0, %v722
    %v724 = vpop.f32.mrf.mxu0
    %v725 = vadd.f32 0.0, %v724
    %726 = vdwg.mxu0
    %v759 = vunpack.c.l.b16 %v417
    %v760 = vunpack.c.h.b16 %v417
    %v761 = vunpack.c.l.b16 %v418
    %v762 = vunpack.c.h.b16 %v418
    %v763 = vunpack.c.l.b16 %v419
    %v764 = vunpack.c.h.b16 %v419
    %v765 = vunpack.c.l.b16 %v420
    %v766 = vunpack.c.h.b16 %v420
    %v767 = vunpack.c.l.b16 %v421
    %v768 = vunpack.c.h.b16 %v421
    %v769 = vunpack.c.l.b16 %v422
    %v770 = vunpack.c.h.b16 %v422
    %v771 = vunpack.c.l.b16 %v423
    %v772 = vunpack.c.h.b16 %v423
    %v773 = vunpack.c.l.b16 %v424
    %v774 = vunpack.c.h.b16 %v424
    %v775 = vunpack.c.l.b16 %v425
    %v776 = vunpack.c.h.b16 %v425
    %v777 = vunpack.c.l.b16 %v426
    %v778 = vunpack.c.h.b16 %v426
    %v779 = vunpack.c.l.b16 %v427
    %v780 = vunpack.c.h.b16 %v427
    %v781 = vunpack.c.l.b16 %v428
    %v782 = vunpack.c.h.b16 %v428
    %v783 = vunpack.c.l.b16 %v429
    %v784 = vunpack.c.h.b16 %v429
    %v785 = vunpack.c.l.b16 %v430
    %v786 = vunpack.c.h.b16 %v430
    %v787 = vunpack.c.l.b16 %v431
    %v788 = vunpack.c.h.b16 %v431
    %v789 = vunpack.c.l.b16 %v432
    %v790 = vunpack.c.h.b16 %v432
    %v791 = vunpack.c.l.b16 %v433
    %v792 = vunpack.c.h.b16 %v433
    %v793 = vunpack.c.l.b16 %v434
    %v794 = vunpack.c.h.b16 %v434
    %v795 = vunpack.c.l.b16 %v435
    %v796 = vunpack.c.h.b16 %v435
    %v797 = vunpack.c.l.b16 %v436
    %v798 = vunpack.c.h.b16 %v436
    %v799 = vunpack.c.l.b16 %v437
    %v800 = vunpack.c.h.b16 %v437
    %v801 = vunpack.c.l.b16 %v438
    %v802 = vunpack.c.h.b16 %v438
    %v803 = vunpack.c.l.b16 %v439
    %v804 = vunpack.c.h.b16 %v439
    %v805 = vunpack.c.l.b16 %v440
    %v806 = vunpack.c.h.b16 %v440
    %v807 = vunpack.c.l.b16 %v441
    %v808 = vunpack.c.h.b16 %v441
    %v809 = vunpack.c.l.b16 %v442
    %v810 = vunpack.c.h.b16 %v442
    %v811 = vunpack.c.l.b16 %v443
    %v812 = vunpack.c.h.b16 %v443
    %v813 = vunpack.c.l.b16 %v444
    %v814 = vunpack.c.h.b16 %v444
    %v815 = vunpack.c.l.b16 %v445
    %v816 = vunpack.c.h.b16 %v445
    %v817 = vunpack.c.l.b16 %v446
    %v818 = vunpack.c.h.b16 %v446
    %v819 = vunpack.c.l.b16 %v447
    %v820 = vunpack.c.h.b16 %v447
    %v821 = vunpack.c.l.b16 %v448
    %v822 = vunpack.c.h.b16 %v448
    %v823 = vpack.c.b16 %v763, %v759
    %v824 = vpack.c.b16 %v764, %v760
    %v825 = vpack.c.b16 %v765, %v761
    %v826 = vpack.c.b16 %v766, %v762
    %v827 = vpack.c.b16 %v771, %v767
    %v828 = vpack.c.b16 %v772, %v768
    %v829 = vpack.c.b16 %v773, %v769
    %v830 = vpack.c.b16 %v774, %v770
    %v831 = vpack.c.b16 %v779, %v775
    %v832 = vpack.c.b16 %v780, %v776
    %v833 = vpack.c.b16 %v781, %v777
    %v834 = vpack.c.b16 %v782, %v778
    %v835 = vpack.c.b16 %v787, %v783
    %v836 = vpack.c.b16 %v788, %v784
    %v837 = vpack.c.b16 %v789, %v785
    %v838 = vpack.c.b16 %v790, %v786
    %v839 = vpack.c.b16 %v795, %v791
    %v840 = vpack.c.b16 %v796, %v792
    %v841 = vpack.c.b16 %v797, %v793
    %v842 = vpack.c.b16 %v798, %v794
    %v843 = vpack.c.b16 %v803, %v799
    %v844 = vpack.c.b16 %v804, %v800
    %v845 = vpack.c.b16 %v805, %v801
    %v846 = vpack.c.b16 %v806, %v802
    %v847 = vpack.c.b16 %v811, %v807
    %v848 = vpack.c.b16 %v812, %v808
    %v849 = vpack.c.b16 %v813, %v809
    %v850 = vpack.c.b16 %v814, %v810
    %v851 = vpack.c.b16 %v819, %v815
    %v852 = vpack.c.b16 %v820, %v816
    %v853 = vpack.c.b16 %v821, %v817
    %v854 = vpack.c.b16 %v822, %v818
    %887 = vmatprep.subr.bf16.mxu0 %v852
    %888 = vmatpush1.bf16.msra.mxu0 %v851
    %889 = vmatprep.subr.bf16.mxu0 %v848
    %890 = vmatpush1.bf16.msra.mxu0 %v847
    %891 = vmatprep.subr.bf16.mxu0 %v844
    %892 = vmatpush1.bf16.msra.mxu0 %v843
    %893 = vmatprep.subr.bf16.mxu0 %v840
    %894 = vmatpush1.bf16.msra.mxu0 %v839
    %895 = vmatprep.subr.bf16.mxu0 %v836
    %896 = vmatpush1.bf16.msra.mxu0 %v835
    %897 = vmatprep.subr.bf16.mxu0 %v832
    %898 = vmatpush1.bf16.msra.mxu0 %v831
    %899 = vmatprep.subr.bf16.mxu0 %v828
    %900 = vmatpush1.bf16.msra.mxu0 %v827
    %901 = vmatprep.subr.bf16.mxu0 %v824
    %902 = vmatpush1.bf16.msra.mxu0 %v823
    %903 = vmatprep.subr.bf16.mxu0 0
    %904 = vmatpush2.bf16.msra.mxu0 0
    %905 = vmatprep.subr.bf16.mxu0 0
    %906 = vmatpush2.bf16.msra.mxu0 0
    %907 = vmatprep.subr.bf16.mxu0 0
    %908 = vmatpush2.bf16.msra.mxu0 0
    %909 = vmatprep.subr.bf16.mxu0 0
    %910 = vmatpush2.bf16.msra.mxu0 0
    %911 = vmatprep.subr.bf16.mxu0 0
    %912 = vmatpush2.bf16.msra.mxu0 0
    %913 = vmatprep.subr.bf16.mxu0 0
    %914 = vmatpush2.bf16.msra.mxu0 0
    %915 = vmatprep.subr.bf16.mxu0 0
    %916 = vmatpush2.bf16.msra.mxu0 0
    %917 = vmatprep.subr.bf16.mxu0 0
    %918 = vmatpush2.bf16.msra.mxu0 0
    %919 = vmatprep.mubr.bf16.mxu0 0
    %920 = vmatmul.mubr.bf16.gmra.mxu0 %v413
    %v921 = vpop.f32.mrf.mxu0
    %v922 = vadd.f32 %v676, %v921
    %v923 = vpop.f32.mrf.mxu0
    %v924 = vadd.f32 %v678, %v923
    %v925 = vpop.f32.mrf.mxu0
    %v926 = vadd.f32 %v680, %v925
    %v927 = vpop.f32.mrf.mxu0
    %v928 = vadd.f32 %v682, %v927
    %929 = vdwg.mxu0
    %930 = vmatprep.subr.bf16.mxu0 %v854
    %931 = vmatpush1.bf16.msra.mxu0 %v853
    %932 = vmatprep.subr.bf16.mxu0 %v850
    %933 = vmatpush1.bf16.msra.mxu0 %v849
    %934 = vmatprep.subr.bf16.mxu0 %v846
    %935 = vmatpush1.bf16.msra.mxu0 %v845
    %936 = vmatprep.subr.bf16.mxu0 %v842
    %937 = vmatpush1.bf16.msra.mxu0 %v841
    %938 = vmatprep.subr.bf16.mxu0 %v838
    %939 = vmatpush1.bf16.msra.mxu0 %v837
    %940 = vmatprep.subr.bf16.mxu0 %v834
    %941 = vmatpush1.bf16.msra.mxu0 %v833
    %942 = vmatprep.subr.bf16.mxu0 %v830
    %943 = vmatpush1.bf16.msra.mxu0 %v829
    %944 = vmatprep.subr.bf16.mxu0 %v826
    %945 = vmatpush1.bf16.msra.mxu0 %v825
    %946 = vmatprep.subr.bf16.mxu0 0
    %947 = vmatpush2.bf16.msra.mxu0 0
    %948 = vmatprep.subr.bf16.mxu0 0
    %949 = vmatpush2.bf16.msra.mxu0 0
    %950 = vmatprep.subr.bf16.mxu0 0
    %951 = vmatpush2.bf16.msra.mxu0 0
    %952 = vmatprep.subr.bf16.mxu0 0
    %953 = vmatpush2.bf16.msra.mxu0 0
    %954 = vmatprep.subr.bf16.mxu0 0
    %955 = vmatpush2.bf16.msra.mxu0 0
    %956 = vmatprep.subr.bf16.mxu0 0
    %957 = vmatpush2.bf16.msra.mxu0 0
    %958 = vmatprep.subr.bf16.mxu0 0
    %959 = vmatpush2.bf16.msra.mxu0 0
    %960 = vmatprep.subr.bf16.mxu0 0
    %961 = vmatpush2.bf16.msra.mxu0 0
    %962 = vmatprep.mubr.bf16.mxu0 0
    %963 = vmatmul.mubr.bf16.gmra.mxu0 %v413
    %v964 = vpop.f32.mrf.mxu0
    %v965 = vadd.f32 %v719, %v964
    %v966 = vpop.f32.mrf.mxu0
    %v967 = vadd.f32 %v721, %v966
    %v968 = vpop.f32.mrf.mxu0
    %v969 = vadd.f32 %v723, %v968
    %v970 = vpop.f32.mrf.mxu0
    %v971 = vadd.f32 %v725, %v970
    %972 = vdwg.mxu0
    %v973 = vld [vmem:[%s6] sm:$0xf]
    %v975 = vlaneseq
    %v976 = vshrl.u32 %v975, 7
    %v977 = vsub.s32 0, %v976
    %v978 = vrot.slane %v973, %v977
    %v979 = vlaneseq
    %v980 = vshrl.u32 %v979, 7
    %v981 = vsub.s32 1, %v980
    %v982 = vrot.slane %v973, %v981
    %v983 = vlaneseq
    %v984 = vshrl.u32 %v983, 7
    %v985 = vsub.s32 2, %v984
    %v986 = vrot.slane %v973, %v985
    %v987 = vlaneseq
    %v988 = vshrl.u32 %v987, 7
    %v989 = vsub.s32 3, %v988
    %v990 = vrot.slane %v973, %v989
    %v995 = vadd.f32 %v922, %v978
    %v996 = vadd.f32 %v924, %v982
    %v997 = vadd.f32 %v965, %v986
    %v998 = vadd.f32 %v967, %v990
    %v999 = vadd.f32 %v926, %v978
    %v1000 = vadd.f32 %v928, %v982
    %v1001 = vadd.f32 %v969, %v986
    %v1002 = vadd.f32 %v971, %v990
    %v1003 = vmax.f32 %v995, 0.0
    %v1004 = vmax.f32 %v996, 0.0
    %v1005 = vmax.f32 %v997, 0.0
    %v1006 = vmax.f32 %v998, 0.0
    %v1007 = vmax.f32 %v999, 0.0
    %v1008 = vmax.f32 %v1000, 0.0
    %v1009 = vmax.f32 %v1001, 0.0
    %v1010 = vmax.f32 %v1002, 0.0
    %v1011 = vmax.f32 %v1003, %v1005
    %v1012 = vmax.f32 %v1004, %v1006
    %v1013 = vmax.f32 %v1007, %v1009
    %v1014 = vmax.f32 %v1008, %v1010
    %v1015 = vmax.f32 %v1011, %v1012
    %v1016 = vmax.f32 %v1013, %v1014
    %1017 = vrot.lane.b32.xlu0 %v1015, 64
    %v1018 = vpop.permute.xlu0 %1017
    %1019 = vrot.lane.b32.xlu0 %v1016, 64
    %v1020 = vpop.permute.xlu0 %1019
    %v1021 = vlaneseq
    %v1022 = vand.u32 %v1021, 127
    %v1023 = vmax.f32 %v1015, %v1018
    %v1024 = vmax.f32 %v1016, %v1020
    %v1025 = vmul.f32 %v252, %v1003
    %v1026 = vmul.f32 %v254, %v1004
    %v1027 = vmul.f32 %v295, %v1005
    %v1028 = vmul.f32 %v297, %v1006
    %v1029 = vmul.f32 %v256, %v1007
    %v1030 = vmul.f32 %v258, %v1008
    %v1031 = vmul.f32 %v299, %v1009
    %v1032 = vmul.f32 %v301, %v1010
    %v1033 = vpack.c.bf16 %v1029, %v1025
    %v1034 = vpack.c.bf16 %v1030, %v1026
    %v1035 = vpack.c.bf16 %v1031, %v1027
    %v1036 = vpack.c.bf16 %v1032, %v1028
    %v1037 = vmul.f32 %v252, %v1023
    %v1038 = vmul.f32 %v254, %v1023
    %v1039 = vmul.f32 %v295, %v1023
    %v1040 = vmul.f32 %v297, %v1023
    %v1041 = vmul.f32 %v256, %v1024
    %v1042 = vmul.f32 %v258, %v1024
    %v1043 = vmul.f32 %v299, %v1024
    %v1044 = vmul.f32 %v301, %v1024
    %v1045 = vpack.c.bf16 %v1041, %v1037
    %v1046 = vpack.c.bf16 %v1042, %v1038
    %v1047 = vpack.c.bf16 %v1043, %v1039
    %v1048 = vpack.c.bf16 %v1044, %v1040
    %v1049 = vld [vmem:[#allocation10] sm:$0xff]
    %v1050 = vld [vmem:[#allocation10 + $0x8] sm:$0xff]
    %v1051 = vld [vmem:[#allocation10 + $0x10] sm:$0xff]
    %v1052 = vld [vmem:[#allocation10 + $0x18] sm:$0xff]
    %v1053 = vld [vmem:[#allocation10 + $0x20] sm:$0xff]
    %v1054 = vld [vmem:[#allocation10 + $0x28] sm:$0xff]
    %v1055 = vld [vmem:[#allocation10 + $0x30] sm:$0xff]
    %v1056 = vld [vmem:[#allocation10 + $0x38] sm:$0xff]
    %v1057 = vld [vmem:[#allocation10 + $0x40] sm:$0xff]
    %v1058 = vld [vmem:[#allocation10 + $0x48] sm:$0xff]
    %v1059 = vld [vmem:[#allocation10 + $0x50] sm:$0xff]
    %v1060 = vld [vmem:[#allocation10 + $0x58] sm:$0xff]
    %v1061 = vld [vmem:[#allocation10 + $0x60] sm:$0xff]
    %v1062 = vld [vmem:[#allocation10 + $0x68] sm:$0xff]
    %v1063 = vld [vmem:[#allocation10 + $0x70] sm:$0xff]
    %v1064 = vld [vmem:[#allocation10 + $0x78] sm:$0xff]
    %v1065 = vld [vmem:[#allocation10 + $0x80] sm:$0xff]
    %v1066 = vld [vmem:[#allocation10 + $0x88] sm:$0xff]
    %v1067 = vld [vmem:[#allocation10 + $0x90] sm:$0xff]
    %v1068 = vld [vmem:[#allocation10 + $0x98] sm:$0xff]
    %v1069 = vld [vmem:[#allocation10 + $0xa0] sm:$0xff]
    %v1070 = vld [vmem:[#allocation10 + $0xa8] sm:$0xff]
    %v1071 = vld [vmem:[#allocation10 + $0xb0] sm:$0xff]
    %v1072 = vld [vmem:[#allocation10 + $0xb8] sm:$0xff]
    %v1073 = vld [vmem:[#allocation10 + $0xc0] sm:$0xff]
    %v1074 = vld [vmem:[#allocation10 + $0xc8] sm:$0xff]
    %v1075 = vld [vmem:[#allocation10 + $0xd0] sm:$0xff]
    %v1076 = vld [vmem:[#allocation10 + $0xd8] sm:$0xff]
    %v1077 = vld [vmem:[#allocation10 + $0xe0] sm:$0xff]
    %v1078 = vld [vmem:[#allocation10 + $0xe8] sm:$0xff]
    %v1079 = vld [vmem:[#allocation10 + $0xf0] sm:$0xff]
    %v1080 = vld [vmem:[#allocation10 + $0xf8] sm:$0xff]
    %v1081 = vld [vmem:[#allocation10 + $0x100] sm:$0xff]
    %v1082 = vld [vmem:[#allocation10 + $0x108] sm:$0xff]
    %v1083 = vld [vmem:[#allocation10 + $0x110] sm:$0xff]
    %v1084 = vld [vmem:[#allocation10 + $0x118] sm:$0xff]
    %v1085 = vld [vmem:[#allocation10 + $0x120] sm:$0xff]
    %v1086 = vld [vmem:[#allocation10 + $0x128] sm:$0xff]
    %v1087 = vld [vmem:[#allocation10 + $0x130] sm:$0xff]
    %v1088 = vld [vmem:[#allocation10 + $0x138] sm:$0xff]
    %v1089 = vld [vmem:[#allocation10 + $0x140] sm:$0xff]
    %v1090 = vld [vmem:[#allocation10 + $0x148] sm:$0xff]
    %v1091 = vld [vmem:[#allocation10 + $0x150] sm:$0xff]
    %v1092 = vld [vmem:[#allocation10 + $0x158] sm:$0xff]
    %v1093 = vld [vmem:[#allocation10 + $0x160] sm:$0xff]
    %v1094 = vld [vmem:[#allocation10 + $0x168] sm:$0xff]
    %v1095 = vld [vmem:[#allocation10 + $0x170] sm:$0xff]
    %v1096 = vld [vmem:[#allocation10 + $0x178] sm:$0xff]
    %v1097 = vld [vmem:[#allocation10 + $0x180] sm:$0xff]
    %v1098 = vld [vmem:[#allocation10 + $0x188] sm:$0xff]
    %v1099 = vld [vmem:[#allocation10 + $0x190] sm:$0xff]
    %v1100 = vld [vmem:[#allocation10 + $0x198] sm:$0xff]
    %v1101 = vld [vmem:[#allocation10 + $0x1a0] sm:$0xff]
    %v1102 = vld [vmem:[#allocation10 + $0x1a8] sm:$0xff]
    %v1103 = vld [vmem:[#allocation10 + $0x1b0] sm:$0xff]
    %v1104 = vld [vmem:[#allocation10 + $0x1b8] sm:$0xff]
    %v1105 = vld [vmem:[#allocation10 + $0x1c0] sm:$0xff]
    %v1106 = vld [vmem:[#allocation10 + $0x1c8] sm:$0xff]
    %v1107 = vld [vmem:[#allocation10 + $0x1d0] sm:$0xff]
    %v1108 = vld [vmem:[#allocation10 + $0x1d8] sm:$0xff]
    %v1109 = vld [vmem:[#allocation10 + $0x1e0] sm:$0xff]
    %v1110 = vld [vmem:[#allocation10 + $0x1e8] sm:$0xff]
    %v1111 = vld [vmem:[#allocation10 + $0x1f0] sm:$0xff]
    %v1112 = vld [vmem:[#allocation10 + $0x1f8] sm:$0xff]
    %v1113 = vld [vmem:[#allocation10 + $0x200] sm:$0xff]
    %v1114 = vld [vmem:[#allocation10 + $0x208] sm:$0xff]
    %v1115 = vld [vmem:[#allocation10 + $0x210] sm:$0xff]
    %v1116 = vld [vmem:[#allocation10 + $0x218] sm:$0xff]
    %v1117 = vld [vmem:[#allocation10 + $0x220] sm:$0xff]
    %v1118 = vld [vmem:[#allocation10 + $0x228] sm:$0xff]
    %v1119 = vld [vmem:[#allocation10 + $0x230] sm:$0xff]
    %v1120 = vld [vmem:[#allocation10 + $0x238] sm:$0xff]
    %v1121 = vld [vmem:[#allocation10 + $0x240] sm:$0xff]
    %v1122 = vld [vmem:[#allocation10 + $0x248] sm:$0xff]
    %v1123 = vld [vmem:[#allocation10 + $0x250] sm:$0xff]
    %v1124 = vld [vmem:[#allocation10 + $0x258] sm:$0xff]
    %v1125 = vld [vmem:[#allocation10 + $0x260] sm:$0xff]
    %v1126 = vld [vmem:[#allocation10 + $0x268] sm:$0xff]
    %v1127 = vld [vmem:[#allocation10 + $0x270] sm:$0xff]
    %v1128 = vld [vmem:[#allocation10 + $0x278] sm:$0xff]
    %v1129 = vld [vmem:[#allocation10 + $0x280] sm:$0xff]
    %v1130 = vld [vmem:[#allocation10 + $0x288] sm:$0xff]
    %v1131 = vld [vmem:[#allocation10 + $0x290] sm:$0xff]
    %v1132 = vld [vmem:[#allocation10 + $0x298] sm:$0xff]
    %v1133 = vld [vmem:[#allocation10 + $0x2a0] sm:$0xff]
    %v1134 = vld [vmem:[#allocation10 + $0x2a8] sm:$0xff]
    %v1135 = vld [vmem:[#allocation10 + $0x2b0] sm:$0xff]
    %v1136 = vld [vmem:[#allocation10 + $0x2b8] sm:$0xff]
    %v1137 = vld [vmem:[#allocation10 + $0x2c0] sm:$0xff]
    %v1138 = vld [vmem:[#allocation10 + $0x2c8] sm:$0xff]
    %v1139 = vld [vmem:[#allocation10 + $0x2d0] sm:$0xff]
    %v1140 = vld [vmem:[#allocation10 + $0x2d8] sm:$0xff]
    %v1141 = vld [vmem:[#allocation10 + $0x2e0] sm:$0xff]
    %v1142 = vld [vmem:[#allocation10 + $0x2e8] sm:$0xff]
    %v1143 = vld [vmem:[#allocation10 + $0x2f0] sm:$0xff]
    %v1144 = vld [vmem:[#allocation10 + $0x2f8] sm:$0xff]
    %v1145 = vld [vmem:[#allocation10 + $0x300] sm:$0xff]
    %v1146 = vld [vmem:[#allocation10 + $0x308] sm:$0xff]
    %v1147 = vld [vmem:[#allocation10 + $0x310] sm:$0xff]
    %v1148 = vld [vmem:[#allocation10 + $0x318] sm:$0xff]
    %v1149 = vld [vmem:[#allocation10 + $0x320] sm:$0xff]
    %v1150 = vld [vmem:[#allocation10 + $0x328] sm:$0xff]
    %v1151 = vld [vmem:[#allocation10 + $0x330] sm:$0xff]
    %v1152 = vld [vmem:[#allocation10 + $0x338] sm:$0xff]
    %v1153 = vld [vmem:[#allocation10 + $0x340] sm:$0xff]
    %v1154 = vld [vmem:[#allocation10 + $0x348] sm:$0xff]
    %v1155 = vld [vmem:[#allocation10 + $0x350] sm:$0xff]
    %v1156 = vld [vmem:[#allocation10 + $0x358] sm:$0xff]
    %v1157 = vld [vmem:[#allocation10 + $0x360] sm:$0xff]
    %v1158 = vld [vmem:[#allocation10 + $0x368] sm:$0xff]
    %v1159 = vld [vmem:[#allocation10 + $0x370] sm:$0xff]
    %v1160 = vld [vmem:[#allocation10 + $0x378] sm:$0xff]
    %v1161 = vld [vmem:[#allocation10 + $0x380] sm:$0xff]
    %v1162 = vld [vmem:[#allocation10 + $0x388] sm:$0xff]
    %v1163 = vld [vmem:[#allocation10 + $0x390] sm:$0xff]
    %v1164 = vld [vmem:[#allocation10 + $0x398] sm:$0xff]
    %v1165 = vld [vmem:[#allocation10 + $0x3a0] sm:$0xff]
    %v1166 = vld [vmem:[#allocation10 + $0x3a8] sm:$0xff]
    %v1167 = vld [vmem:[#allocation10 + $0x3b0] sm:$0xff]
    %v1168 = vld [vmem:[#allocation10 + $0x3b8] sm:$0xff]
    %v1169 = vld [vmem:[#allocation10 + $0x3c0] sm:$0xff]
    %v1170 = vld [vmem:[#allocation10 + $0x3c8] sm:$0xff]
    %v1171 = vld [vmem:[#allocation10 + $0x3d0] sm:$0xff]
    %v1172 = vld [vmem:[#allocation10 + $0x3d8] sm:$0xff]
    %v1173 = vld [vmem:[#allocation10 + $0x3e0] sm:$0xff]
    %v1174 = vld [vmem:[#allocation10 + $0x3e8] sm:$0xff]
    %v1175 = vld [vmem:[#allocation10 + $0x3f0] sm:$0xff]
    %v1176 = vld [vmem:[#allocation10 + $0x3f8] sm:$0xff]
    %v1177 = vld [vmem:[#allocation10 + $0x400] sm:$0xff]
    %v1178 = vld [vmem:[#allocation10 + $0x408] sm:$0xff]
    %v1179 = vld [vmem:[#allocation10 + $0x410] sm:$0xff]
    %v1180 = vld [vmem:[#allocation10 + $0x418] sm:$0xff]
    %v1181 = vld [vmem:[#allocation10 + $0x420] sm:$0xff]
    %v1182 = vld [vmem:[#allocation10 + $0x428] sm:$0xff]
    %v1183 = vld [vmem:[#allocation10 + $0x430] sm:$0xff]
    %v1184 = vld [vmem:[#allocation10 + $0x438] sm:$0xff]
    %v1185 = vld [vmem:[#allocation10 + $0x440] sm:$0xff]
    %v1186 = vld [vmem:[#allocation10 + $0x448] sm:$0xff]
    %v1187 = vld [vmem:[#allocation10 + $0x450] sm:$0xff]
    %v1188 = vld [vmem:[#allocation10 + $0x458] sm:$0xff]
    %v1189 = vld [vmem:[#allocation10 + $0x460] sm:$0xff]
    %v1190 = vld [vmem:[#allocation10 + $0x468] sm:$0xff]
    %v1191 = vld [vmem:[#allocation10 + $0x470] sm:$0xff]
    %v1192 = vld [vmem:[#allocation10 + $0x478] sm:$0xff]
    %v1193 = vld [vmem:[#allocation10 + $0x480] sm:$0xff]
    %v1194 = vld [vmem:[#allocation10 + $0x488] sm:$0xff]
    %v1195 = vld [vmem:[#allocation10 + $0x490] sm:$0xff]
    %v1196 = vld [vmem:[#allocation10 + $0x498] sm:$0xff]
    %v1197 = vld [vmem:[#allocation10 + $0x4a0] sm:$0xff]
    %v1198 = vld [vmem:[#allocation10 + $0x4a8] sm:$0xff]
    %v1199 = vld [vmem:[#allocation10 + $0x4b0] sm:$0xff]
    %v1200 = vld [vmem:[#allocation10 + $0x4b8] sm:$0xff]
    %v1201 = vld [vmem:[#allocation10 + $0x4c0] sm:$0xff]
    %v1202 = vld [vmem:[#allocation10 + $0x4c8] sm:$0xff]
    %v1203 = vld [vmem:[#allocation10 + $0x4d0] sm:$0xff]
    %v1204 = vld [vmem:[#allocation10 + $0x4d8] sm:$0xff]
    %v1205 = vld [vmem:[#allocation10 + $0x4e0] sm:$0xff]
    %v1206 = vld [vmem:[#allocation10 + $0x4e8] sm:$0xff]
    %v1207 = vld [vmem:[#allocation10 + $0x4f0] sm:$0xff]
    %v1208 = vld [vmem:[#allocation10 + $0x4f8] sm:$0xff]
    %v1209 = vld [vmem:[#allocation10 + $0x500] sm:$0xff]
    %v1210 = vld [vmem:[#allocation10 + $0x508] sm:$0xff]
    %v1211 = vld [vmem:[#allocation10 + $0x510] sm:$0xff]
    %v1212 = vld [vmem:[#allocation10 + $0x518] sm:$0xff]
    %v1213 = vld [vmem:[#allocation10 + $0x520] sm:$0xff]
    %v1214 = vld [vmem:[#allocation10 + $0x528] sm:$0xff]
    %v1215 = vld [vmem:[#allocation10 + $0x530] sm:$0xff]
    %v1216 = vld [vmem:[#allocation10 + $0x538] sm:$0xff]
    %v1217 = vld [vmem:[#allocation10 + $0x540] sm:$0xff]
    %v1218 = vld [vmem:[#allocation10 + $0x548] sm:$0xff]
    %v1219 = vld [vmem:[#allocation10 + $0x550] sm:$0xff]
    %v1220 = vld [vmem:[#allocation10 + $0x558] sm:$0xff]
    %v1221 = vld [vmem:[#allocation10 + $0x560] sm:$0xff]
    %v1222 = vld [vmem:[#allocation10 + $0x568] sm:$0xff]
    %v1223 = vld [vmem:[#allocation10 + $0x570] sm:$0xff]
    %v1224 = vld [vmem:[#allocation10 + $0x578] sm:$0xff]
    %v1225 = vld [vmem:[#allocation10 + $0x580] sm:$0xff]
    %v1226 = vld [vmem:[#allocation10 + $0x588] sm:$0xff]
    %v1227 = vld [vmem:[#allocation10 + $0x590] sm:$0xff]
    %v1228 = vld [vmem:[#allocation10 + $0x598] sm:$0xff]
    %v1229 = vld [vmem:[#allocation10 + $0x5a0] sm:$0xff]
    %v1230 = vld [vmem:[#allocation10 + $0x5a8] sm:$0xff]
    %v1231 = vld [vmem:[#allocation10 + $0x5b0] sm:$0xff]
    %v1232 = vld [vmem:[#allocation10 + $0x5b8] sm:$0xff]
    %v1233 = vld [vmem:[#allocation10 + $0x5c0] sm:$0xff]
    %v1234 = vld [vmem:[#allocation10 + $0x5c8] sm:$0xff]
    %v1235 = vld [vmem:[#allocation10 + $0x5d0] sm:$0xff]
    %v1236 = vld [vmem:[#allocation10 + $0x5d8] sm:$0xff]
    %v1237 = vld [vmem:[#allocation10 + $0x5e0] sm:$0xff]
    %v1238 = vld [vmem:[#allocation10 + $0x5e8] sm:$0xff]
    %v1239 = vld [vmem:[#allocation10 + $0x5f0] sm:$0xff]
    %v1240 = vld [vmem:[#allocation10 + $0x5f8] sm:$0xff]
    %v1241 = vld [vmem:[#allocation10 + $0x600] sm:$0xff]
    %v1242 = vld [vmem:[#allocation10 + $0x608] sm:$0xff]
    %v1243 = vld [vmem:[#allocation10 + $0x610] sm:$0xff]
    %v1244 = vld [vmem:[#allocation10 + $0x618] sm:$0xff]
    %v1245 = vld [vmem:[#allocation10 + $0x620] sm:$0xff]
    %v1246 = vld [vmem:[#allocation10 + $0x628] sm:$0xff]
    %v1247 = vld [vmem:[#allocation10 + $0x630] sm:$0xff]
    %v1248 = vld [vmem:[#allocation10 + $0x638] sm:$0xff]
    %v1249 = vld [vmem:[#allocation10 + $0x640] sm:$0xff]
    %v1250 = vld [vmem:[#allocation10 + $0x648] sm:$0xff]
    %v1251 = vld [vmem:[#allocation10 + $0x650] sm:$0xff]
    %v1252 = vld [vmem:[#allocation10 + $0x658] sm:$0xff]
    %v1253 = vld [vmem:[#allocation10 + $0x660] sm:$0xff]
    %v1254 = vld [vmem:[#allocation10 + $0x668] sm:$0xff]
    %v1255 = vld [vmem:[#allocation10 + $0x670] sm:$0xff]
    %v1256 = vld [vmem:[#allocation10 + $0x678] sm:$0xff]
    %v1257 = vld [vmem:[#allocation10 + $0x680] sm:$0xff]
    %v1258 = vld [vmem:[#allocation10 + $0x688] sm:$0xff]
    %v1259 = vld [vmem:[#allocation10 + $0x690] sm:$0xff]
    %v1260 = vld [vmem:[#allocation10 + $0x698] sm:$0xff]
    %v1261 = vld [vmem:[#allocation10 + $0x6a0] sm:$0xff]
    %v1262 = vld [vmem:[#allocation10 + $0x6a8] sm:$0xff]
    %v1263 = vld [vmem:[#allocation10 + $0x6b0] sm:$0xff]
    %v1264 = vld [vmem:[#allocation10 + $0x6b8] sm:$0xff]
    %v1265 = vld [vmem:[#allocation10 + $0x6c0] sm:$0xff]
    %v1266 = vld [vmem:[#allocation10 + $0x6c8] sm:$0xff]
    %v1267 = vld [vmem:[#allocation10 + $0x6d0] sm:$0xff]
    %v1268 = vld [vmem:[#allocation10 + $0x6d8] sm:$0xff]
    %v1269 = vld [vmem:[#allocation10 + $0x6e0] sm:$0xff]
    %v1270 = vld [vmem:[#allocation10 + $0x6e8] sm:$0xff]
    %v1271 = vld [vmem:[#allocation10 + $0x6f0] sm:$0xff]
    %v1272 = vld [vmem:[#allocation10 + $0x6f8] sm:$0xff]
    %v1273 = vld [vmem:[#allocation10 + $0x700] sm:$0xff]
    %v1274 = vld [vmem:[#allocation10 + $0x708] sm:$0xff]
    %v1275 = vld [vmem:[#allocation10 + $0x710] sm:$0xff]
    %v1276 = vld [vmem:[#allocation10 + $0x718] sm:$0xff]
    %v1277 = vld [vmem:[#allocation10 + $0x720] sm:$0xff]
    %v1278 = vld [vmem:[#allocation10 + $0x728] sm:$0xff]
    %v1279 = vld [vmem:[#allocation10 + $0x730] sm:$0xff]
    %v1280 = vld [vmem:[#allocation10 + $0x738] sm:$0xff]
    %v1281 = vld [vmem:[#allocation10 + $0x740] sm:$0xff]
    %v1282 = vld [vmem:[#allocation10 + $0x748] sm:$0xff]
    %v1283 = vld [vmem:[#allocation10 + $0x750] sm:$0xff]
    %v1284 = vld [vmem:[#allocation10 + $0x758] sm:$0xff]
    %v1285 = vld [vmem:[#allocation10 + $0x760] sm:$0xff]
    %v1286 = vld [vmem:[#allocation10 + $0x768] sm:$0xff]
    %v1287 = vld [vmem:[#allocation10 + $0x770] sm:$0xff]
    %v1288 = vld [vmem:[#allocation10 + $0x778] sm:$0xff]
    %v1289 = vld [vmem:[#allocation10 + $0x780] sm:$0xff]
    %v1290 = vld [vmem:[#allocation10 + $0x788] sm:$0xff]
    %v1291 = vld [vmem:[#allocation10 + $0x790] sm:$0xff]
    %v1292 = vld [vmem:[#allocation10 + $0x798] sm:$0xff]
    %v1293 = vld [vmem:[#allocation10 + $0x7a0] sm:$0xff]
    %v1294 = vld [vmem:[#allocation10 + $0x7a8] sm:$0xff]
    %v1295 = vld [vmem:[#allocation10 + $0x7b0] sm:$0xff]
    %v1296 = vld [vmem:[#allocation10 + $0x7b8] sm:$0xff]
    %v1297 = vld [vmem:[#allocation10 + $0x7c0] sm:$0xff]
    %v1298 = vld [vmem:[#allocation10 + $0x7c8] sm:$0xff]
    %v1299 = vld [vmem:[#allocation10 + $0x7d0] sm:$0xff]
    %v1300 = vld [vmem:[#allocation10 + $0x7d8] sm:$0xff]
    %v1301 = vld [vmem:[#allocation10 + $0x7e0] sm:$0xff]
    %v1302 = vld [vmem:[#allocation10 + $0x7e8] sm:$0xff]
    %v1303 = vld [vmem:[#allocation10 + $0x7f0] sm:$0xff]
    %v1304 = vld [vmem:[#allocation10 + $0x7f8] sm:$0xff]
    %v1305 = vld [vmem:[#allocation11] sm:$0xff]
    %v1306 = vld [vmem:[#allocation11 + $0x8] sm:$0xff]
    %v1307 = vld [vmem:[#allocation11 + $0x10] sm:$0xff]
    %v1308 = vld [vmem:[#allocation11 + $0x18] sm:$0xff]
    %v1309 = vld [vmem:[#allocation11 + $0x20] sm:$0xff]
    %v1310 = vld [vmem:[#allocation11 + $0x28] sm:$0xff]
    %v1311 = vld [vmem:[#allocation11 + $0x30] sm:$0xff]
    %v1312 = vld [vmem:[#allocation11 + $0x38] sm:$0xff]
    %v1313 = vld [vmem:[#allocation11 + $0x40] sm:$0xff]
    %v1314 = vld [vmem:[#allocation11 + $0x48] sm:$0xff]
    %v1315 = vld [vmem:[#allocation11 + $0x50] sm:$0xff]
    %v1316 = vld [vmem:[#allocation11 + $0x58] sm:$0xff]
    %v1317 = vld [vmem:[#allocation11 + $0x60] sm:$0xff]
    %v1318 = vld [vmem:[#allocation11 + $0x68] sm:$0xff]
    %v1319 = vld [vmem:[#allocation11 + $0x70] sm:$0xff]
    %v1320 = vld [vmem:[#allocation11 + $0x78] sm:$0xff]
    %v1321 = vld [vmem:[#allocation11 + $0x80] sm:$0xff]
    %v1322 = vld [vmem:[#allocation11 + $0x88] sm:$0xff]
    %v1323 = vld [vmem:[#allocation11 + $0x90] sm:$0xff]
    %v1324 = vld [vmem:[#allocation11 + $0x98] sm:$0xff]
    %v1325 = vld [vmem:[#allocation11 + $0xa0] sm:$0xff]
    %v1326 = vld [vmem:[#allocation11 + $0xa8] sm:$0xff]
    %v1327 = vld [vmem:[#allocation11 + $0xb0] sm:$0xff]
    %v1328 = vld [vmem:[#allocation11 + $0xb8] sm:$0xff]
    %v1329 = vld [vmem:[#allocation11 + $0xc0] sm:$0xff]
    %v1330 = vld [vmem:[#allocation11 + $0xc8] sm:$0xff]
    %v1331 = vld [vmem:[#allocation11 + $0xd0] sm:$0xff]
    %v1332 = vld [vmem:[#allocation11 + $0xd8] sm:$0xff]
    %v1333 = vld [vmem:[#allocation11 + $0xe0] sm:$0xff]
    %v1334 = vld [vmem:[#allocation11 + $0xe8] sm:$0xff]
    %v1335 = vld [vmem:[#allocation11 + $0xf0] sm:$0xff]
    %v1336 = vld [vmem:[#allocation11 + $0xf8] sm:$0xff]
    %v1337 = vld [vmem:[#allocation11 + $0x100] sm:$0xff]
    %v1338 = vld [vmem:[#allocation11 + $0x108] sm:$0xff]
    %v1339 = vld [vmem:[#allocation11 + $0x110] sm:$0xff]
    %v1340 = vld [vmem:[#allocation11 + $0x118] sm:$0xff]
    %v1341 = vld [vmem:[#allocation11 + $0x120] sm:$0xff]
    %v1342 = vld [vmem:[#allocation11 + $0x128] sm:$0xff]
    %v1343 = vld [vmem:[#allocation11 + $0x130] sm:$0xff]
    %v1344 = vld [vmem:[#allocation11 + $0x138] sm:$0xff]
    %v1345 = vld [vmem:[#allocation11 + $0x140] sm:$0xff]
    %v1346 = vld [vmem:[#allocation11 + $0x148] sm:$0xff]
    %v1347 = vld [vmem:[#allocation11 + $0x150] sm:$0xff]
    %v1348 = vld [vmem:[#allocation11 + $0x158] sm:$0xff]
    %v1349 = vld [vmem:[#allocation11 + $0x160] sm:$0xff]
    %v1350 = vld [vmem:[#allocation11 + $0x168] sm:$0xff]
    %v1351 = vld [vmem:[#allocation11 + $0x170] sm:$0xff]
    %v1352 = vld [vmem:[#allocation11 + $0x178] sm:$0xff]
    %v1353 = vld [vmem:[#allocation11 + $0x180] sm:$0xff]
    %v1354 = vld [vmem:[#allocation11 + $0x188] sm:$0xff]
    %v1355 = vld [vmem:[#allocation11 + $0x190] sm:$0xff]
    %v1356 = vld [vmem:[#allocation11 + $0x198] sm:$0xff]
    %v1357 = vld [vmem:[#allocation11 + $0x1a0] sm:$0xff]
    %v1358 = vld [vmem:[#allocation11 + $0x1a8] sm:$0xff]
    %v1359 = vld [vmem:[#allocation11 + $0x1b0] sm:$0xff]
    %v1360 = vld [vmem:[#allocation11 + $0x1b8] sm:$0xff]
    %v1361 = vld [vmem:[#allocation11 + $0x1c0] sm:$0xff]
    %v1362 = vld [vmem:[#allocation11 + $0x1c8] sm:$0xff]
    %v1363 = vld [vmem:[#allocation11 + $0x1d0] sm:$0xff]
    %v1364 = vld [vmem:[#allocation11 + $0x1d8] sm:$0xff]
    %v1365 = vld [vmem:[#allocation11 + $0x1e0] sm:$0xff]
    %v1366 = vld [vmem:[#allocation11 + $0x1e8] sm:$0xff]
    %v1367 = vld [vmem:[#allocation11 + $0x1f0] sm:$0xff]
    %v1368 = vld [vmem:[#allocation11 + $0x1f8] sm:$0xff]
    %v1369 = vld [vmem:[#allocation11 + $0x200] sm:$0xff]
    %v1370 = vld [vmem:[#allocation11 + $0x208] sm:$0xff]
    %v1371 = vld [vmem:[#allocation11 + $0x210] sm:$0xff]
    %v1372 = vld [vmem:[#allocation11 + $0x218] sm:$0xff]
    %v1373 = vld [vmem:[#allocation11 + $0x220] sm:$0xff]
    %v1374 = vld [vmem:[#allocation11 + $0x228] sm:$0xff]
    %v1375 = vld [vmem:[#allocation11 + $0x230] sm:$0xff]
    %v1376 = vld [vmem:[#allocation11 + $0x238] sm:$0xff]
    %v1377 = vld [vmem:[#allocation11 + $0x240] sm:$0xff]
    %v1378 = vld [vmem:[#allocation11 + $0x248] sm:$0xff]
    %v1379 = vld [vmem:[#allocation11 + $0x250] sm:$0xff]
    %v1380 = vld [vmem:[#allocation11 + $0x258] sm:$0xff]
    %v1381 = vld [vmem:[#allocation11 + $0x260] sm:$0xff]
    %v1382 = vld [vmem:[#allocation11 + $0x268] sm:$0xff]
    %v1383 = vld [vmem:[#allocation11 + $0x270] sm:$0xff]
    %v1384 = vld [vmem:[#allocation11 + $0x278] sm:$0xff]
    %v1385 = vld [vmem:[#allocation11 + $0x280] sm:$0xff]
    %v1386 = vld [vmem:[#allocation11 + $0x288] sm:$0xff]
    %v1387 = vld [vmem:[#allocation11 + $0x290] sm:$0xff]
    %v1388 = vld [vmem:[#allocation11 + $0x298] sm:$0xff]
    %v1389 = vld [vmem:[#allocation11 + $0x2a0] sm:$0xff]
    %v1390 = vld [vmem:[#allocation11 + $0x2a8] sm:$0xff]
    %v1391 = vld [vmem:[#allocation11 + $0x2b0] sm:$0xff]
    %v1392 = vld [vmem:[#allocation11 + $0x2b8] sm:$0xff]
    %v1393 = vld [vmem:[#allocation11 + $0x2c0] sm:$0xff]
    %v1394 = vld [vmem:[#allocation11 + $0x2c8] sm:$0xff]
    %v1395 = vld [vmem:[#allocation11 + $0x2d0] sm:$0xff]
    %v1396 = vld [vmem:[#allocation11 + $0x2d8] sm:$0xff]
    %v1397 = vld [vmem:[#allocation11 + $0x2e0] sm:$0xff]
    %v1398 = vld [vmem:[#allocation11 + $0x2e8] sm:$0xff]
    %v1399 = vld [vmem:[#allocation11 + $0x2f0] sm:$0xff]
    %v1400 = vld [vmem:[#allocation11 + $0x2f8] sm:$0xff]
    %v1401 = vld [vmem:[#allocation11 + $0x300] sm:$0xff]
    %v1402 = vld [vmem:[#allocation11 + $0x308] sm:$0xff]
    %v1403 = vld [vmem:[#allocation11 + $0x310] sm:$0xff]
    %v1404 = vld [vmem:[#allocation11 + $0x318] sm:$0xff]
    %v1405 = vld [vmem:[#allocation11 + $0x320] sm:$0xff]
    %v1406 = vld [vmem:[#allocation11 + $0x328] sm:$0xff]
    %v1407 = vld [vmem:[#allocation11 + $0x330] sm:$0xff]
    %v1408 = vld [vmem:[#allocation11 + $0x338] sm:$0xff]
    %v1409 = vld [vmem:[#allocation11 + $0x340] sm:$0xff]
    %v1410 = vld [vmem:[#allocation11 + $0x348] sm:$0xff]
    %v1411 = vld [vmem:[#allocation11 + $0x350] sm:$0xff]
    %v1412 = vld [vmem:[#allocation11 + $0x358] sm:$0xff]
    %v1413 = vld [vmem:[#allocation11 + $0x360] sm:$0xff]
    %v1414 = vld [vmem:[#allocation11 + $0x368] sm:$0xff]
    %v1415 = vld [vmem:[#allocation11 + $0x370] sm:$0xff]
    %v1416 = vld [vmem:[#allocation11 + $0x378] sm:$0xff]
    %v1417 = vld [vmem:[#allocation11 + $0x380] sm:$0xff]
    %v1418 = vld [vmem:[#allocation11 + $0x388] sm:$0xff]
    %v1419 = vld [vmem:[#allocation11 + $0x390] sm:$0xff]
    %v1420 = vld [vmem:[#allocation11 + $0x398] sm:$0xff]
    %v1421 = vld [vmem:[#allocation11 + $0x3a0] sm:$0xff]
    %v1422 = vld [vmem:[#allocation11 + $0x3a8] sm:$0xff]
    %v1423 = vld [vmem:[#allocation11 + $0x3b0] sm:$0xff]
    %v1424 = vld [vmem:[#allocation11 + $0x3b8] sm:$0xff]
    %v1425 = vld [vmem:[#allocation11 + $0x3c0] sm:$0xff]
    %v1426 = vld [vmem:[#allocation11 + $0x3c8] sm:$0xff]
    %v1427 = vld [vmem:[#allocation11 + $0x3d0] sm:$0xff]
    %v1428 = vld [vmem:[#allocation11 + $0x3d8] sm:$0xff]
    %v1429 = vld [vmem:[#allocation11 + $0x3e0] sm:$0xff]
    %v1430 = vld [vmem:[#allocation11 + $0x3e8] sm:$0xff]
    %v1431 = vld [vmem:[#allocation11 + $0x3f0] sm:$0xff]
    %v1432 = vld [vmem:[#allocation11 + $0x3f8] sm:$0xff]
    %v1433 = vld [vmem:[#allocation11 + $0x400] sm:$0xff]
    %v1434 = vld [vmem:[#allocation11 + $0x408] sm:$0xff]
    %v1435 = vld [vmem:[#allocation11 + $0x410] sm:$0xff]
    %v1436 = vld [vmem:[#allocation11 + $0x418] sm:$0xff]
    %v1437 = vld [vmem:[#allocation11 + $0x420] sm:$0xff]
    %v1438 = vld [vmem:[#allocation11 + $0x428] sm:$0xff]
    %v1439 = vld [vmem:[#allocation11 + $0x430] sm:$0xff]
    %v1440 = vld [vmem:[#allocation11 + $0x438] sm:$0xff]
    %v1441 = vld [vmem:[#allocation11 + $0x440] sm:$0xff]
    %v1442 = vld [vmem:[#allocation11 + $0x448] sm:$0xff]
    %v1443 = vld [vmem:[#allocation11 + $0x450] sm:$0xff]
    %v1444 = vld [vmem:[#allocation11 + $0x458] sm:$0xff]
    %v1445 = vld [vmem:[#allocation11 + $0x460] sm:$0xff]
    %v1446 = vld [vmem:[#allocation11 + $0x468] sm:$0xff]
    %v1447 = vld [vmem:[#allocation11 + $0x470] sm:$0xff]
    %v1448 = vld [vmem:[#allocation11 + $0x478] sm:$0xff]
    %v1449 = vld [vmem:[#allocation11 + $0x480] sm:$0xff]
    %v1450 = vld [vmem:[#allocation11 + $0x488] sm:$0xff]
    %v1451 = vld [vmem:[#allocation11 + $0x490] sm:$0xff]
    %v1452 = vld [vmem:[#allocation11 + $0x498] sm:$0xff]
    %v1453 = vld [vmem:[#allocation11 + $0x4a0] sm:$0xff]
    %v1454 = vld [vmem:[#allocation11 + $0x4a8] sm:$0xff]
    %v1455 = vld [vmem:[#allocation11 + $0x4b0] sm:$0xff]
    %v1456 = vld [vmem:[#allocation11 + $0x4b8] sm:$0xff]
    %v1457 = vld [vmem:[#allocation11 + $0x4c0] sm:$0xff]
    %v1458 = vld [vmem:[#allocation11 + $0x4c8] sm:$0xff]
    %v1459 = vld [vmem:[#allocation11 + $0x4d0] sm:$0xff]
    %v1460 = vld [vmem:[#allocation11 + $0x4d8] sm:$0xff]
    %v1461 = vld [vmem:[#allocation11 + $0x4e0] sm:$0xff]
    %v1462 = vld [vmem:[#allocation11 + $0x4e8] sm:$0xff]
    %v1463 = vld [vmem:[#allocation11 + $0x4f0] sm:$0xff]
    %v1464 = vld [vmem:[#allocation11 + $0x4f8] sm:$0xff]
    %v1465 = vld [vmem:[#allocation11 + $0x500] sm:$0xff]
    %v1466 = vld [vmem:[#allocation11 + $0x508] sm:$0xff]
    %v1467 = vld [vmem:[#allocation11 + $0x510] sm:$0xff]
    %v1468 = vld [vmem:[#allocation11 + $0x518] sm:$0xff]
    %v1469 = vld [vmem:[#allocation11 + $0x520] sm:$0xff]
    %v1470 = vld [vmem:[#allocation11 + $0x528] sm:$0xff]
    %v1471 = vld [vmem:[#allocation11 + $0x530] sm:$0xff]
    %v1472 = vld [vmem:[#allocation11 + $0x538] sm:$0xff]
    %v1473 = vld [vmem:[#allocation11 + $0x540] sm:$0xff]
    %v1474 = vld [vmem:[#allocation11 + $0x548] sm:$0xff]
    %v1475 = vld [vmem:[#allocation11 + $0x550] sm:$0xff]
    %v1476 = vld [vmem:[#allocation11 + $0x558] sm:$0xff]
    %v1477 = vld [vmem:[#allocation11 + $0x560] sm:$0xff]
    %v1478 = vld [vmem:[#allocation11 + $0x568] sm:$0xff]
    %v1479 = vld [vmem:[#allocation11 + $0x570] sm:$0xff]
    %v1480 = vld [vmem:[#allocation11 + $0x578] sm:$0xff]
    %v1481 = vld [vmem:[#allocation11 + $0x580] sm:$0xff]
    %v1482 = vld [vmem:[#allocation11 + $0x588] sm:$0xff]
    %v1483 = vld [vmem:[#allocation11 + $0x590] sm:$0xff]
    %v1484 = vld [vmem:[#allocation11 + $0x598] sm:$0xff]
    %v1485 = vld [vmem:[#allocation11 + $0x5a0] sm:$0xff]
    %v1486 = vld [vmem:[#allocation11 + $0x5a8] sm:$0xff]
    %v1487 = vld [vmem:[#allocation11 + $0x5b0] sm:$0xff]
    %v1488 = vld [vmem:[#allocation11 + $0x5b8] sm:$0xff]
    %v1489 = vld [vmem:[#allocation11 + $0x5c0] sm:$0xff]
    %v1490 = vld [vmem:[#allocation11 + $0x5c8] sm:$0xff]
    %v1491 = vld [vmem:[#allocation11 + $0x5d0] sm:$0xff]
    %v1492 = vld [vmem:[#allocation11 + $0x5d8] sm:$0xff]
    %v1493 = vld [vmem:[#allocation11 + $0x5e0] sm:$0xff]
    %v1494 = vld [vmem:[#allocation11 + $0x5e8] sm:$0xff]
    %v1495 = vld [vmem:[#allocation11 + $0x5f0] sm:$0xff]
    %v1496 = vld [vmem:[#allocation11 + $0x5f8] sm:$0xff]
    %v1497 = vld [vmem:[#allocation11 + $0x600] sm:$0xff]
    %v1498 = vld [vmem:[#allocation11 + $0x608] sm:$0xff]
    %v1499 = vld [vmem:[#allocation11 + $0x610] sm:$0xff]
    %v1500 = vld [vmem:[#allocation11 + $0x618] sm:$0xff]
    %v1501 = vld [vmem:[#allocation11 + $0x620] sm:$0xff]
    %v1502 = vld [vmem:[#allocation11 + $0x628] sm:$0xff]
    %v1503 = vld [vmem:[#allocation11 + $0x630] sm:$0xff]
    %v1504 = vld [vmem:[#allocation11 + $0x638] sm:$0xff]
    %v1505 = vld [vmem:[#allocation11 + $0x640] sm:$0xff]
    %v1506 = vld [vmem:[#allocation11 + $0x648] sm:$0xff]
    %v1507 = vld [vmem:[#allocation11 + $0x650] sm:$0xff]
    %v1508 = vld [vmem:[#allocation11 + $0x658] sm:$0xff]
    %v1509 = vld [vmem:[#allocation11 + $0x660] sm:$0xff]
    %v1510 = vld [vmem:[#allocation11 + $0x668] sm:$0xff]
    %v1511 = vld [vmem:[#allocation11 + $0x670] sm:$0xff]
    %v1512 = vld [vmem:[#allocation11 + $0x678] sm:$0xff]
    %v1513 = vld [vmem:[#allocation11 + $0x680] sm:$0xff]
    %v1514 = vld [vmem:[#allocation11 + $0x688] sm:$0xff]
    %v1515 = vld [vmem:[#allocation11 + $0x690] sm:$0xff]
    %v1516 = vld [vmem:[#allocation11 + $0x698] sm:$0xff]
    %v1517 = vld [vmem:[#allocation11 + $0x6a0] sm:$0xff]
    %v1518 = vld [vmem:[#allocation11 + $0x6a8] sm:$0xff]
    %v1519 = vld [vmem:[#allocation11 + $0x6b0] sm:$0xff]
    %v1520 = vld [vmem:[#allocation11 + $0x6b8] sm:$0xff]
    %v1521 = vld [vmem:[#allocation11 + $0x6c0] sm:$0xff]
    %v1522 = vld [vmem:[#allocation11 + $0x6c8] sm:$0xff]
    %v1523 = vld [vmem:[#allocation11 + $0x6d0] sm:$0xff]
    %v1524 = vld [vmem:[#allocation11 + $0x6d8] sm:$0xff]
    %v1525 = vld [vmem:[#allocation11 + $0x6e0] sm:$0xff]
    %v1526 = vld [vmem:[#allocation11 + $0x6e8] sm:$0xff]
    %v1527 = vld [vmem:[#allocation11 + $0x6f0] sm:$0xff]
    %v1528 = vld [vmem:[#allocation11 + $0x6f8] sm:$0xff]
    %v1529 = vld [vmem:[#allocation11 + $0x700] sm:$0xff]
    %v1530 = vld [vmem:[#allocation11 + $0x708] sm:$0xff]
    %v1531 = vld [vmem:[#allocation11 + $0x710] sm:$0xff]
    %v1532 = vld [vmem:[#allocation11 + $0x718] sm:$0xff]
    %v1533 = vld [vmem:[#allocation11 + $0x720] sm:$0xff]
    %v1534 = vld [vmem:[#allocation11 + $0x728] sm:$0xff]
    %v1535 = vld [vmem:[#allocation11 + $0x730] sm:$0xff]
    %v1536 = vld [vmem:[#allocation11 + $0x738] sm:$0xff]
    %v1537 = vld [vmem:[#allocation11 + $0x740] sm:$0xff]
    %v1538 = vld [vmem:[#allocation11 + $0x748] sm:$0xff]
    %v1539 = vld [vmem:[#allocation11 + $0x750] sm:$0xff]
    %v1540 = vld [vmem:[#allocation11 + $0x758] sm:$0xff]
    %v1541 = vld [vmem:[#allocation11 + $0x760] sm:$0xff]
    %v1542 = vld [vmem:[#allocation11 + $0x768] sm:$0xff]
    %v1543 = vld [vmem:[#allocation11 + $0x770] sm:$0xff]
    %v1544 = vld [vmem:[#allocation11 + $0x778] sm:$0xff]
    %v1545 = vld [vmem:[#allocation11 + $0x780] sm:$0xff]
    %v1546 = vld [vmem:[#allocation11 + $0x788] sm:$0xff]
    %v1547 = vld [vmem:[#allocation11 + $0x790] sm:$0xff]
    %v1548 = vld [vmem:[#allocation11 + $0x798] sm:$0xff]
    %v1549 = vld [vmem:[#allocation11 + $0x7a0] sm:$0xff]
    %v1550 = vld [vmem:[#allocation11 + $0x7a8] sm:$0xff]
    %v1551 = vld [vmem:[#allocation11 + $0x7b0] sm:$0xff]
    %v1552 = vld [vmem:[#allocation11 + $0x7b8] sm:$0xff]
    %v1553 = vld [vmem:[#allocation11 + $0x7c0] sm:$0xff]
    %v1554 = vld [vmem:[#allocation11 + $0x7c8] sm:$0xff]
    %v1555 = vld [vmem:[#allocation11 + $0x7d0] sm:$0xff]
    %v1556 = vld [vmem:[#allocation11 + $0x7d8] sm:$0xff]
    %v1557 = vld [vmem:[#allocation11 + $0x7e0] sm:$0xff]
    %v1558 = vld [vmem:[#allocation11 + $0x7e8] sm:$0xff]
    %v1559 = vld [vmem:[#allocation11 + $0x7f0] sm:$0xff]
    %v1560 = vld [vmem:[#allocation11 + $0x7f8] sm:$0xff]
    %v1817 = vunpack.c.l.b16 %v1305
    %v1818 = vunpack.c.h.b16 %v1305
    %v1819 = vunpack.c.l.b16 %v1306
    %v1820 = vunpack.c.h.b16 %v1306
    %v1821 = vunpack.c.l.b16 %v1307
    %v1822 = vunpack.c.h.b16 %v1307
    %v1823 = vunpack.c.l.b16 %v1308
    %v1824 = vunpack.c.h.b16 %v1308
    %v1825 = vunpack.c.l.b16 %v1309
    %v1826 = vunpack.c.h.b16 %v1309
    %v1827 = vunpack.c.l.b16 %v1310
    %v1828 = vunpack.c.h.b16 %v1310
    %v1829 = vunpack.c.l.b16 %v1311
    %v1830 = vunpack.c.h.b16 %v1311
    %v1831 = vunpack.c.l.b16 %v1312
    %v1832 = vunpack.c.h.b16 %v1312
    %v1833 = vunpack.c.l.b16 %v1313
    %v1834 = vunpack.c.h.b16 %v1313
    %v1835 = vunpack.c.l.b16 %v1314
    %v1836 = vunpack.c.h.b16 %v1314
    %v1837 = vunpack.c.l.b16 %v1315
    %v1838 = vunpack.c.h.b16 %v1315
    %v1839 = vunpack.c.l.b16 %v1316
    %v1840 = vunpack.c.h.b16 %v1316
    %v1841 = vunpack.c.l.b16 %v1317
    %v1842 = vunpack.c.h.b16 %v1317
    %v1843 = vunpack.c.l.b16 %v1318
    %v1844 = vunpack.c.h.b16 %v1318
    %v1845 = vunpack.c.l.b16 %v1319
    %v1846 = vunpack.c.h.b16 %v1319
    %v1847 = vunpack.c.l.b16 %v1320
    %v1848 = vunpack.c.h.b16 %v1320
    %v1849 = vunpack.c.l.b16 %v1321
    %v1850 = vunpack.c.h.b16 %v1321
    %v1851 = vunpack.c.l.b16 %v1322
    %v1852 = vunpack.c.h.b16 %v1322
    %v1853 = vunpack.c.l.b16 %v1323
    %v1854 = vunpack.c.h.b16 %v1323
    %v1855 = vunpack.c.l.b16 %v1324
    %v1856 = vunpack.c.h.b16 %v1324
    %v1857 = vunpack.c.l.b16 %v1325
    %v1858 = vunpack.c.h.b16 %v1325
    %v1859 = vunpack.c.l.b16 %v1326
    %v1860 = vunpack.c.h.b16 %v1326
    %v1861 = vunpack.c.l.b16 %v1327
    %v1862 = vunpack.c.h.b16 %v1327
    %v1863 = vunpack.c.l.b16 %v1328
    %v1864 = vunpack.c.h.b16 %v1328
    %v1865 = vunpack.c.l.b16 %v1329
    %v1866 = vunpack.c.h.b16 %v1329
    %v1867 = vunpack.c.l.b16 %v1330
    %v1868 = vunpack.c.h.b16 %v1330
    %v1869 = vunpack.c.l.b16 %v1331
    %v1870 = vunpack.c.h.b16 %v1331
    %v1871 = vunpack.c.l.b16 %v1332
    %v1872 = vunpack.c.h.b16 %v1332
    %v1873 = vunpack.c.l.b16 %v1333
    %v1874 = vunpack.c.h.b16 %v1333
    %v1875 = vunpack.c.l.b16 %v1334
    %v1876 = vunpack.c.h.b16 %v1334
    %v1877 = vunpack.c.l.b16 %v1335
    %v1878 = vunpack.c.h.b16 %v1335
    %v1879 = vunpack.c.l.b16 %v1336
    %v1880 = vunpack.c.h.b16 %v1336
    %v1881 = vunpack.c.l.b16 %v1337
    %v1882 = vunpack.c.h.b16 %v1337
    %v1883 = vunpack.c.l.b16 %v1338
    %v1884 = vunpack.c.h.b16 %v1338
    %v1885 = vunpack.c.l.b16 %v1339
    %v1886 = vunpack.c.h.b16 %v1339
    %v1887 = vunpack.c.l.b16 %v1340
    %v1888 = vunpack.c.h.b16 %v1340
    %v1889 = vunpack.c.l.b16 %v1341
    %v1890 = vunpack.c.h.b16 %v1341
    %v1891 = vunpack.c.l.b16 %v1342
    %v1892 = vunpack.c.h.b16 %v1342
    %v1893 = vunpack.c.l.b16 %v1343
    %v1894 = vunpack.c.h.b16 %v1343
    %v1895 = vunpack.c.l.b16 %v1344
    %v1896 = vunpack.c.h.b16 %v1344
    %v1897 = vunpack.c.l.b16 %v1345
    %v1898 = vunpack.c.h.b16 %v1345
    %v1899 = vunpack.c.l.b16 %v1346
    %v1900 = vunpack.c.h.b16 %v1346
    %v1901 = vunpack.c.l.b16 %v1347
    %v1902 = vunpack.c.h.b16 %v1347
    %v1903 = vunpack.c.l.b16 %v1348
    %v1904 = vunpack.c.h.b16 %v1348
    %v1905 = vunpack.c.l.b16 %v1349
    %v1906 = vunpack.c.h.b16 %v1349
    %v1907 = vunpack.c.l.b16 %v1350
    %v1908 = vunpack.c.h.b16 %v1350
    %v1909 = vunpack.c.l.b16 %v1351
    %v1910 = vunpack.c.h.b16 %v1351
    %v1911 = vunpack.c.l.b16 %v1352
    %v1912 = vunpack.c.h.b16 %v1352
    %v1913 = vunpack.c.l.b16 %v1353
    %v1914 = vunpack.c.h.b16 %v1353
    %v1915 = vunpack.c.l.b16 %v1354
    %v1916 = vunpack.c.h.b16 %v1354
    %v1917 = vunpack.c.l.b16 %v1355
    %v1918 = vunpack.c.h.b16 %v1355
    %v1919 = vunpack.c.l.b16 %v1356
    %v1920 = vunpack.c.h.b16 %v1356
    %v1921 = vunpack.c.l.b16 %v1357
    %v1922 = vunpack.c.h.b16 %v1357
    %v1923 = vunpack.c.l.b16 %v1358
    %v1924 = vunpack.c.h.b16 %v1358
    %v1925 = vunpack.c.l.b16 %v1359
    %v1926 = vunpack.c.h.b16 %v1359
    %v1927 = vunpack.c.l.b16 %v1360
    %v1928 = vunpack.c.h.b16 %v1360
    %v1929 = vunpack.c.l.b16 %v1361
    %v1930 = vunpack.c.h.b16 %v1361
    %v1931 = vunpack.c.l.b16 %v1362
    %v1932 = vunpack.c.h.b16 %v1362
    %v1933 = vunpack.c.l.b16 %v1363
    %v1934 = vunpack.c.h.b16 %v1363
    %v1935 = vunpack.c.l.b16 %v1364
    %v1936 = vunpack.c.h.b16 %v1364
    %v1937 = vunpack.c.l.b16 %v1365
    %v1938 = vunpack.c.h.b16 %v1365
    %v1939 = vunpack.c.l.b16 %v1366
    %v1940 = vunpack.c.h.b16 %v1366
    %v1941 = vunpack.c.l.b16 %v1367
    %v1942 = vunpack.c.h.b16 %v1367
    %v1943 = vunpack.c.l.b16 %v1368
    %v1944 = vunpack.c.h.b16 %v1368
    %v1945 = vunpack.c.l.b16 %v1369
    %v1946 = vunpack.c.h.b16 %v1369
    %v1947 = vunpack.c.l.b16 %v1370
    %v1948 = vunpack.c.h.b16 %v1370
    %v1949 = vunpack.c.l.b16 %v1371
    %v1950 = vunpack.c.h.b16 %v1371
    %v1951 = vunpack.c.l.b16 %v1372
    %v1952 = vunpack.c.h.b16 %v1372
    %v1953 = vunpack.c.l.b16 %v1373
    %v1954 = vunpack.c.h.b16 %v1373
    %v1955 = vunpack.c.l.b16 %v1374
    %v1956 = vunpack.c.h.b16 %v1374
    %v1957 = vunpack.c.l.b16 %v1375
    %v1958 = vunpack.c.h.b16 %v1375
    %v1959 = vunpack.c.l.b16 %v1376
    %v1960 = vunpack.c.h.b16 %v1376
    %v1961 = vunpack.c.l.b16 %v1377
    %v1962 = vunpack.c.h.b16 %v1377
    %v1963 = vunpack.c.l.b16 %v1378
    %v1964 = vunpack.c.h.b16 %v1378
    %v1965 = vunpack.c.l.b16 %v1379
    %v1966 = vunpack.c.h.b16 %v1379
    %v1967 = vunpack.c.l.b16 %v1380
    %v1968 = vunpack.c.h.b16 %v1380
    %v1969 = vunpack.c.l.b16 %v1381
    %v1970 = vunpack.c.h.b16 %v1381
    %v1971 = vunpack.c.l.b16 %v1382
    %v1972 = vunpack.c.h.b16 %v1382
    %v1973 = vunpack.c.l.b16 %v1383
    %v1974 = vunpack.c.h.b16 %v1383
    %v1975 = vunpack.c.l.b16 %v1384
    %v1976 = vunpack.c.h.b16 %v1384
    %v1977 = vunpack.c.l.b16 %v1385
    %v1978 = vunpack.c.h.b16 %v1385
    %v1979 = vunpack.c.l.b16 %v1386
    %v1980 = vunpack.c.h.b16 %v1386
    %v1981 = vunpack.c.l.b16 %v1387
    %v1982 = vunpack.c.h.b16 %v1387
    %v1983 = vunpack.c.l.b16 %v1388
    %v1984 = vunpack.c.h.b16 %v1388
    %v1985 = vunpack.c.l.b16 %v1389
    %v1986 = vunpack.c.h.b16 %v1389
    %v1987 = vunpack.c.l.b16 %v1390
    %v1988 = vunpack.c.h.b16 %v1390
    %v1989 = vunpack.c.l.b16 %v1391
    %v1990 = vunpack.c.h.b16 %v1391
    %v1991 = vunpack.c.l.b16 %v1392
    %v1992 = vunpack.c.h.b16 %v1392
    %v1993 = vunpack.c.l.b16 %v1393
    %v1994 = vunpack.c.h.b16 %v1393
    %v1995 = vunpack.c.l.b16 %v1394
    %v1996 = vunpack.c.h.b16 %v1394
    %v1997 = vunpack.c.l.b16 %v1395
    %v1998 = vunpack.c.h.b16 %v1395
    %v1999 = vunpack.c.l.b16 %v1396
    %v2000 = vunpack.c.h.b16 %v1396
    %v2001 = vunpack.c.l.b16 %v1397
    %v2002 = vunpack.c.h.b16 %v1397
    %v2003 = vunpack.c.l.b16 %v1398
    %v2004 = vunpack.c.h.b16 %v1398
    %v2005 = vunpack.c.l.b16 %v1399
    %v2006 = vunpack.c.h.b16 %v1399
    %v2007 = vunpack.c.l.b16 %v1400
    %v2008 = vunpack.c.h.b16 %v1400
    %v2009 = vunpack.c.l.b16 %v1401
    %v2010 = vunpack.c.h.b16 %v1401
    %v2011 = vunpack.c.l.b16 %v1402
    %v2012 = vunpack.c.h.b16 %v1402
    %v2013 = vunpack.c.l.b16 %v1403
    %v2014 = vunpack.c.h.b16 %v1403
    %v2015 = vunpack.c.l.b16 %v1404
    %v2016 = vunpack.c.h.b16 %v1404
    %v2017 = vunpack.c.l.b16 %v1405
    %v2018 = vunpack.c.h.b16 %v1405
    %v2019 = vunpack.c.l.b16 %v1406
    %v2020 = vunpack.c.h.b16 %v1406
    %v2021 = vunpack.c.l.b16 %v1407
    %v2022 = vunpack.c.h.b16 %v1407
    %v2023 = vunpack.c.l.b16 %v1408
    %v2024 = vunpack.c.h.b16 %v1408
    %v2025 = vunpack.c.l.b16 %v1409
    %v2026 = vunpack.c.h.b16 %v1409
    %v2027 = vunpack.c.l.b16 %v1410
    %v2028 = vunpack.c.h.b16 %v1410
    %v2029 = vunpack.c.l.b16 %v1411
    %v2030 = vunpack.c.h.b16 %v1411
    %v2031 = vunpack.c.l.b16 %v1412
    %v2032 = vunpack.c.h.b16 %v1412
    %v2033 = vunpack.c.l.b16 %v1413
    %v2034 = vunpack.c.h.b16 %v1413
    %v2035 = vunpack.c.l.b16 %v1414
    %v2036 = vunpack.c.h.b16 %v1414
    %v2037 = vunpack.c.l.b16 %v1415
    %v2038 = vunpack.c.h.b16 %v1415
    %v2039 = vunpack.c.l.b16 %v1416
    %v2040 = vunpack.c.h.b16 %v1416
    %v2041 = vunpack.c.l.b16 %v1417
    %v2042 = vunpack.c.h.b16 %v1417
    %v2043 = vunpack.c.l.b16 %v1418
    %v2044 = vunpack.c.h.b16 %v1418
    %v2045 = vunpack.c.l.b16 %v1419
    %v2046 = vunpack.c.h.b16 %v1419
    %v2047 = vunpack.c.l.b16 %v1420
    %v2048 = vunpack.c.h.b16 %v1420
    %v2049 = vunpack.c.l.b16 %v1421
    %v2050 = vunpack.c.h.b16 %v1421
    %v2051 = vunpack.c.l.b16 %v1422
    %v2052 = vunpack.c.h.b16 %v1422
    %v2053 = vunpack.c.l.b16 %v1423
    %v2054 = vunpack.c.h.b16 %v1423
    %v2055 = vunpack.c.l.b16 %v1424
    %v2056 = vunpack.c.h.b16 %v1424
    %v2057 = vunpack.c.l.b16 %v1425
    %v2058 = vunpack.c.h.b16 %v1425
    %v2059 = vunpack.c.l.b16 %v1426
    %v2060 = vunpack.c.h.b16 %v1426
    %v2061 = vunpack.c.l.b16 %v1427
    %v2062 = vunpack.c.h.b16 %v1427
    %v2063 = vunpack.c.l.b16 %v1428
    %v2064 = vunpack.c.h.b16 %v1428
    %v2065 = vunpack.c.l.b16 %v1429
    %v2066 = vunpack.c.h.b16 %v1429
    %v2067 = vunpack.c.l.b16 %v1430
    %v2068 = vunpack.c.h.b16 %v1430
    %v2069 = vunpack.c.l.b16 %v1431
    %v2070 = vunpack.c.h.b16 %v1431
    %v2071 = vunpack.c.l.b16 %v1432
    %v2072 = vunpack.c.h.b16 %v1432
    %v2073 = vunpack.c.l.b16 %v1433
    %v2074 = vunpack.c.h.b16 %v1433
    %v2075 = vunpack.c.l.b16 %v1434
    %v2076 = vunpack.c.h.b16 %v1434
    %v2077 = vunpack.c.l.b16 %v1435
    %v2078 = vunpack.c.h.b16 %v1435
    %v2079 = vunpack.c.l.b16 %v1436
    %v2080 = vunpack.c.h.b16 %v1436
    %v2081 = vunpack.c.l.b16 %v1437
    %v2082 = vunpack.c.h.b16 %v1437
    %v2083 = vunpack.c.l.b16 %v1438
    %v2084 = vunpack.c.h.b16 %v1438
    %v2085 = vunpack.c.l.b16 %v1439
    %v2086 = vunpack.c.h.b16 %v1439
    %v2087 = vunpack.c.l.b16 %v1440
    %v2088 = vunpack.c.h.b16 %v1440
    %v2089 = vunpack.c.l.b16 %v1441
    %v2090 = vunpack.c.h.b16 %v1441
    %v2091 = vunpack.c.l.b16 %v1442
    %v2092 = vunpack.c.h.b16 %v1442
    %v2093 = vunpack.c.l.b16 %v1443
    %v2094 = vunpack.c.h.b16 %v1443
    %v2095 = vunpack.c.l.b16 %v1444
    %v2096 = vunpack.c.h.b16 %v1444
    %v2097 = vunpack.c.l.b16 %v1445
    %v2098 = vunpack.c.h.b16 %v1445
    %v2099 = vunpack.c.l.b16 %v1446
    %v2100 = vunpack.c.h.b16 %v1446
    %v2101 = vunpack.c.l.b16 %v1447
    %v2102 = vunpack.c.h.b16 %v1447
    %v2103 = vunpack.c.l.b16 %v1448
    %v2104 = vunpack.c.h.b16 %v1448
    %v2105 = vunpack.c.l.b16 %v1449
    %v2106 = vunpack.c.h.b16 %v1449
    %v2107 = vunpack.c.l.b16 %v1450
    %v2108 = vunpack.c.h.b16 %v1450
    %v2109 = vunpack.c.l.b16 %v1451
    %v2110 = vunpack.c.h.b16 %v1451
    %v2111 = vunpack.c.l.b16 %v1452
    %v2112 = vunpack.c.h.b16 %v1452
    %v2113 = vunpack.c.l.b16 %v1453
    %v2114 = vunpack.c.h.b16 %v1453
    %v2115 = vunpack.c.l.b16 %v1454
    %v2116 = vunpack.c.h.b16 %v1454
    %v2117 = vunpack.c.l.b16 %v1455
    %v2118 = vunpack.c.h.b16 %v1455
    %v2119 = vunpack.c.l.b16 %v1456
    %v2120 = vunpack.c.h.b16 %v1456
    %v2121 = vunpack.c.l.b16 %v1457
    %v2122 = vunpack.c.h.b16 %v1457
    %v2123 = vunpack.c.l.b16 %v1458
    %v2124 = vunpack.c.h.b16 %v1458
    %v2125 = vunpack.c.l.b16 %v1459
    %v2126 = vunpack.c.h.b16 %v1459
    %v2127 = vunpack.c.l.b16 %v1460
    %v2128 = vunpack.c.h.b16 %v1460
    %v2129 = vunpack.c.l.b16 %v1461
    %v2130 = vunpack.c.h.b16 %v1461
    %v2131 = vunpack.c.l.b16 %v1462
    %v2132 = vunpack.c.h.b16 %v1462
    %v2133 = vunpack.c.l.b16 %v1463
    %v2134 = vunpack.c.h.b16 %v1463
    %v2135 = vunpack.c.l.b16 %v1464
    %v2136 = vunpack.c.h.b16 %v1464
    %v2137 = vunpack.c.l.b16 %v1465
    %v2138 = vunpack.c.h.b16 %v1465
    %v2139 = vunpack.c.l.b16 %v1466
    %v2140 = vunpack.c.h.b16 %v1466
    %v2141 = vunpack.c.l.b16 %v1467
    %v2142 = vunpack.c.h.b16 %v1467
    %v2143 = vunpack.c.l.b16 %v1468
    %v2144 = vunpack.c.h.b16 %v1468
    %v2145 = vunpack.c.l.b16 %v1469
    %v2146 = vunpack.c.h.b16 %v1469
    %v2147 = vunpack.c.l.b16 %v1470
    %v2148 = vunpack.c.h.b16 %v1470
    %v2149 = vunpack.c.l.b16 %v1471
    %v2150 = vunpack.c.h.b16 %v1471
    %v2151 = vunpack.c.l.b16 %v1472
    %v2152 = vunpack.c.h.b16 %v1472
    %v2153 = vunpack.c.l.b16 %v1473
    %v2154 = vunpack.c.h.b16 %v1473
    %v2155 = vunpack.c.l.b16 %v1474
    %v2156 = vunpack.c.h.b16 %v1474
    %v2157 = vunpack.c.l.b16 %v1475
    %v2158 = vunpack.c.h.b16 %v1475
    %v2159 = vunpack.c.l.b16 %v1476
    %v2160 = vunpack.c.h.b16 %v1476
    %v2161 = vunpack.c.l.b16 %v1477
    %v2162 = vunpack.c.h.b16 %v1477
    %v2163 = vunpack.c.l.b16 %v1478
    %v2164 = vunpack.c.h.b16 %v1478
    %v2165 = vunpack.c.l.b16 %v1479
    %v2166 = vunpack.c.h.b16 %v1479
    %v2167 = vunpack.c.l.b16 %v1480
    %v2168 = vunpack.c.h.b16 %v1480
    %v2169 = vunpack.c.l.b16 %v1481
    %v2170 = vunpack.c.h.b16 %v1481
    %v2171 = vunpack.c.l.b16 %v1482
    %v2172 = vunpack.c.h.b16 %v1482
    %v2173 = vunpack.c.l.b16 %v1483
    %v2174 = vunpack.c.h.b16 %v1483
    %v2175 = vunpack.c.l.b16 %v1484
    %v2176 = vunpack.c.h.b16 %v1484
    %v2177 = vunpack.c.l.b16 %v1485
    %v2178 = vunpack.c.h.b16 %v1485
    %v2179 = vunpack.c.l.b16 %v1486
    %v2180 = vunpack.c.h.b16 %v1486
    %v2181 = vunpack.c.l.b16 %v1487
    %v2182 = vunpack.c.h.b16 %v1487
    %v2183 = vunpack.c.l.b16 %v1488
    %v2184 = vunpack.c.h.b16 %v1488
    %v2185 = vunpack.c.l.b16 %v1489
    %v2186 = vunpack.c.h.b16 %v1489
    %v2187 = vunpack.c.l.b16 %v1490
    %v2188 = vunpack.c.h.b16 %v1490
    %v2189 = vunpack.c.l.b16 %v1491
    %v2190 = vunpack.c.h.b16 %v1491
    %v2191 = vunpack.c.l.b16 %v1492
    %v2192 = vunpack.c.h.b16 %v1492
    %v2193 = vunpack.c.l.b16 %v1493
    %v2194 = vunpack.c.h.b16 %v1493
    %v2195 = vunpack.c.l.b16 %v1494
    %v2196 = vunpack.c.h.b16 %v1494
    %v2197 = vunpack.c.l.b16 %v1495
    %v2198 = vunpack.c.h.b16 %v1495
    %v2199 = vunpack.c.l.b16 %v1496
    %v2200 = vunpack.c.h.b16 %v1496
    %v2201 = vunpack.c.l.b16 %v1497
    %v2202 = vunpack.c.h.b16 %v1497
    %v2203 = vunpack.c.l.b16 %v1498
    %v2204 = vunpack.c.h.b16 %v1498
    %v2205 = vunpack.c.l.b16 %v1499
    %v2206 = vunpack.c.h.b16 %v1499
    %v2207 = vunpack.c.l.b16 %v1500
    %v2208 = vunpack.c.h.b16 %v1500
    %v2209 = vunpack.c.l.b16 %v1501
    %v2210 = vunpack.c.h.b16 %v1501
    %v2211 = vunpack.c.l.b16 %v1502
    %v2212 = vunpack.c.h.b16 %v1502
    %v2213 = vunpack.c.l.b16 %v1503
    %v2214 = vunpack.c.h.b16 %v1503
    %v2215 = vunpack.c.l.b16 %v1504
    %v2216 = vunpack.c.h.b16 %v1504
    %v2217 = vunpack.c.l.b16 %v1505
    %v2218 = vunpack.c.h.b16 %v1505
    %v2219 = vunpack.c.l.b16 %v1506
    %v2220 = vunpack.c.h.b16 %v1506
    %v2221 = vunpack.c.l.b16 %v1507
    %v2222 = vunpack.c.h.b16 %v1507
    %v2223 = vunpack.c.l.b16 %v1508
    %v2224 = vunpack.c.h.b16 %v1508
    %v2225 = vunpack.c.l.b16 %v1509
    %v2226 = vunpack.c.h.b16 %v1509
    %v2227 = vunpack.c.l.b16 %v1510
    %v2228 = vunpack.c.h.b16 %v1510
    %v2229 = vunpack.c.l.b16 %v1511
    %v2230 = vunpack.c.h.b16 %v1511
    %v2231 = vunpack.c.l.b16 %v1512
    %v2232 = vunpack.c.h.b16 %v1512
    %v2233 = vunpack.c.l.b16 %v1513
    %v2234 = vunpack.c.h.b16 %v1513
    %v2235 = vunpack.c.l.b16 %v1514
    %v2236 = vunpack.c.h.b16 %v1514
    %v2237 = vunpack.c.l.b16 %v1515
    %v2238 = vunpack.c.h.b16 %v1515
    %v2239 = vunpack.c.l.b16 %v1516
    %v2240 = vunpack.c.h.b16 %v1516
    %v2241 = vunpack.c.l.b16 %v1517
    %v2242 = vunpack.c.h.b16 %v1517
    %v2243 = vunpack.c.l.b16 %v1518
    %v2244 = vunpack.c.h.b16 %v1518
    %v2245 = vunpack.c.l.b16 %v1519
    %v2246 = vunpack.c.h.b16 %v1519
    %v2247 = vunpack.c.l.b16 %v1520
    %v2248 = vunpack.c.h.b16 %v1520
    %v2249 = vunpack.c.l.b16 %v1521
    %v2250 = vunpack.c.h.b16 %v1521
    %v2251 = vunpack.c.l.b16 %v1522
    %v2252 = vunpack.c.h.b16 %v1522
    %v2253 = vunpack.c.l.b16 %v1523
    %v2254 = vunpack.c.h.b16 %v1523
    %v2255 = vunpack.c.l.b16 %v1524
    %v2256 = vunpack.c.h.b16 %v1524
    %v2257 = vunpack.c.l.b16 %v1525
    %v2258 = vunpack.c.h.b16 %v1525
    %v2259 = vunpack.c.l.b16 %v1526
    %v2260 = vunpack.c.h.b16 %v1526
    %v2261 = vunpack.c.l.b16 %v1527
    %v2262 = vunpack.c.h.b16 %v1527
    %v2263 = vunpack.c.l.b16 %v1528
    %v2264 = vunpack.c.h.b16 %v1528
    %v2265 = vunpack.c.l.b16 %v1529
    %v2266 = vunpack.c.h.b16 %v1529
    %v2267 = vunpack.c.l.b16 %v1530
    %v2268 = vunpack.c.h.b16 %v1530
    %v2269 = vunpack.c.l.b16 %v1531
    %v2270 = vunpack.c.h.b16 %v1531
    %v2271 = vunpack.c.l.b16 %v1532
    %v2272 = vunpack.c.h.b16 %v1532
    %v2273 = vunpack.c.l.b16 %v1533
    %v2274 = vunpack.c.h.b16 %v1533
    %v2275 = vunpack.c.l.b16 %v1534
    %v2276 = vunpack.c.h.b16 %v1534
    %v2277 = vunpack.c.l.b16 %v1535
    %v2278 = vunpack.c.h.b16 %v1535
    %v2279 = vunpack.c.l.b16 %v1536
    %v2280 = vunpack.c.h.b16 %v1536
    %v2281 = vunpack.c.l.b16 %v1537
    %v2282 = vunpack.c.h.b16 %v1537
    %v2283 = vunpack.c.l.b16 %v1538
    %v2284 = vunpack.c.h.b16 %v1538
    %v2285 = vunpack.c.l.b16 %v1539
    %v2286 = vunpack.c.h.b16 %v1539
    %v2287 = vunpack.c.l.b16 %v1540
    %v2288 = vunpack.c.h.b16 %v1540
    %v2289 = vunpack.c.l.b16 %v1541
    %v2290 = vunpack.c.h.b16 %v1541
    %v2291 = vunpack.c.l.b16 %v1542
    %v2292 = vunpack.c.h.b16 %v1542
    %v2293 = vunpack.c.l.b16 %v1543
    %v2294 = vunpack.c.h.b16 %v1543
    %v2295 = vunpack.c.l.b16 %v1544
    %v2296 = vunpack.c.h.b16 %v1544
    %v2297 = vunpack.c.l.b16 %v1545
    %v2298 = vunpack.c.h.b16 %v1545
    %v2299 = vunpack.c.l.b16 %v1546
    %v2300 = vunpack.c.h.b16 %v1546
    %v2301 = vunpack.c.l.b16 %v1547
    %v2302 = vunpack.c.h.b16 %v1547
    %v2303 = vunpack.c.l.b16 %v1548
    %v2304 = vunpack.c.h.b16 %v1548
    %v2305 = vunpack.c.l.b16 %v1549
    %v2306 = vunpack.c.h.b16 %v1549
    %v2307 = vunpack.c.l.b16 %v1550
    %v2308 = vunpack.c.h.b16 %v1550
    %v2309 = vunpack.c.l.b16 %v1551
    %v2310 = vunpack.c.h.b16 %v1551
    %v2311 = vunpack.c.l.b16 %v1552
    %v2312 = vunpack.c.h.b16 %v1552
    %v2313 = vunpack.c.l.b16 %v1553
    %v2314 = vunpack.c.h.b16 %v1553
    %v2315 = vunpack.c.l.b16 %v1554
    %v2316 = vunpack.c.h.b16 %v1554
    %v2317 = vunpack.c.l.b16 %v1555
    %v2318 = vunpack.c.h.b16 %v1555
    %v2319 = vunpack.c.l.b16 %v1556
    %v2320 = vunpack.c.h.b16 %v1556
    %v2321 = vunpack.c.l.b16 %v1557
    %v2322 = vunpack.c.h.b16 %v1557
    %v2323 = vunpack.c.l.b16 %v1558
    %v2324 = vunpack.c.h.b16 %v1558
    %v2325 = vunpack.c.l.b16 %v1559
    %v2326 = vunpack.c.h.b16 %v1559
    %v2327 = vunpack.c.l.b16 %v1560
    %v2328 = vunpack.c.h.b16 %v1560
    %v2329 = vpack.c.b16 %v1825, %v1817
    %v2330 = vpack.c.b16 %v1826, %v1818
    %v2331 = vpack.c.b16 %v1827, %v1819
    %v2332 = vpack.c.b16 %v1828, %v1820
    %v2333 = vpack.c.b16 %v1829, %v1821
    %v2334 = vpack.c.b16 %v1830, %v1822
    %v2335 = vpack.c.b16 %v1831, %v1823
    %v2336 = vpack.c.b16 %v1832, %v1824
    %v2337 = vpack.c.b16 %v1841, %v1833
    %v2338 = vpack.c.b16 %v1842, %v1834
    %v2339 = vpack.c.b16 %v1843, %v1835
    %v2340 = vpack.c.b16 %v1844, %v1836
    %v2341 = vpack.c.b16 %v1845, %v1837
    %v2342 = vpack.c.b16 %v1846, %v1838
    %v2343 = vpack.c.b16 %v1847, %v1839
    %v2344 = vpack.c.b16 %v1848, %v1840
    %v2345 = vpack.c.b16 %v1857, %v1849
    %v2346 = vpack.c.b16 %v1858, %v1850
    %v2347 = vpack.c.b16 %v1859, %v1851
    %v2348 = vpack.c.b16 %v1860, %v1852
    %v2349 = vpack.c.b16 %v1861, %v1853
    %v2350 = vpack.c.b16 %v1862, %v1854
    %v2351 = vpack.c.b16 %v1863, %v1855
    %v2352 = vpack.c.b16 %v1864, %v1856
    %v2353 = vpack.c.b16 %v1873, %v1865
    %v2354 = vpack.c.b16 %v1874, %v1866
    %v2355 = vpack.c.b16 %v1875, %v1867
    %v2356 = vpack.c.b16 %v1876, %v1868
    %v2357 = vpack.c.b16 %v1877, %v1869
    %v2358 = vpack.c.b16 %v1878, %v1870
    %v2359 = vpack.c.b16 %v1879, %v1871
    %v2360 = vpack.c.b16 %v1880, %v1872
    %v2361 = vpack.c.b16 %v1889, %v1881
    %v2362 = vpack.c.b16 %v1890, %v1882
    %v2363 = vpack.c.b16 %v1891, %v1883
    %v2364 = vpack.c.b16 %v1892, %v1884
    %v2365 = vpack.c.b16 %v1893, %v1885
    %v2366 = vpack.c.b16 %v1894, %v1886
    %v2367 = vpack.c.b16 %v1895, %v1887
    %v2368 = vpack.c.b16 %v1896, %v1888
    %v2369 = vpack.c.b16 %v1905, %v1897
    %v2370 = vpack.c.b16 %v1906, %v1898
    %v2371 = vpack.c.b16 %v1907, %v1899
    %v2372 = vpack.c.b16 %v1908, %v1900
    %v2373 = vpack.c.b16 %v1909, %v1901
    %v2374 = vpack.c.b16 %v1910, %v1902
    %v2375 = vpack.c.b16 %v1911, %v1903
    %v2376 = vpack.c.b16 %v1912, %v1904
    %v2377 = vpack.c.b16 %v1921, %v1913
    %v2378 = vpack.c.b16 %v1922, %v1914
    %v2379 = vpack.c.b16 %v1923, %v1915
    %v2380 = vpack.c.b16 %v1924, %v1916
    %v2381 = vpack.c.b16 %v1925, %v1917
    %v2382 = vpack.c.b16 %v1926, %v1918
    %v2383 = vpack.c.b16 %v1927, %v1919
    %v2384 = vpack.c.b16 %v1928, %v1920
    %v2385 = vpack.c.b16 %v1937, %v1929
    %v2386 = vpack.c.b16 %v1938, %v1930
    %v2387 = vpack.c.b16 %v1939, %v1931
    %v2388 = vpack.c.b16 %v1940, %v1932
    %v2389 = vpack.c.b16 %v1941, %v1933
    %v2390 = vpack.c.b16 %v1942, %v1934
    %v2391 = vpack.c.b16 %v1943, %v1935
    %v2392 = vpack.c.b16 %v1944, %v1936
    %v2393 = vpack.c.b16 %v1953, %v1945
    %v2394 = vpack.c.b16 %v1954, %v1946
    %v2395 = vpack.c.b16 %v1955, %v1947
    %v2396 = vpack.c.b16 %v1956, %v1948
    %v2397 = vpack.c.b16 %v1957, %v1949
    %v2398 = vpack.c.b16 %v1958, %v1950
    %v2399 = vpack.c.b16 %v1959, %v1951
    %v2400 = vpack.c.b16 %v1960, %v1952
    %v2401 = vpack.c.b16 %v1969, %v1961
    %v2402 = vpack.c.b16 %v1970, %v1962
    %v2403 = vpack.c.b16 %v1971, %v1963
    %v2404 = vpack.c.b16 %v1972, %v1964
    %v2405 = vpack.c.b16 %v1973, %v1965
    %v2406 = vpack.c.b16 %v1974, %v1966
    %v2407 = vpack.c.b16 %v1975, %v1967
    %v2408 = vpack.c.b16 %v1976, %v1968
    %v2409 = vpack.c.b16 %v1985, %v1977
    %v2410 = vpack.c.b16 %v1986, %v1978
    %v2411 = vpack.c.b16 %v1987, %v1979
    %v2412 = vpack.c.b16 %v1988, %v1980
    %v2413 = vpack.c.b16 %v1989, %v1981
    %v2414 = vpack.c.b16 %v1990, %v1982
    %v2415 = vpack.c.b16 %v1991, %v1983
    %v2416 = vpack.c.b16 %v1992, %v1984
    %v2417 = vpack.c.b16 %v2001, %v1993
    %v2418 = vpack.c.b16 %v2002, %v1994
    %v2419 = vpack.c.b16 %v2003, %v1995
    %v2420 = vpack.c.b16 %v2004, %v1996
    %v2421 = vpack.c.b16 %v2005, %v1997
    %v2422 = vpack.c.b16 %v2006, %v1998
    %v2423 = vpack.c.b16 %v2007, %v1999
    %v2424 = vpack.c.b16 %v2008, %v2000
    %v2425 = vpack.c.b16 %v2017, %v2009
    %v2426 = vpack.c.b16 %v2018, %v2010
    %v2427 = vpack.c.b16 %v2019, %v2011
    %v2428 = vpack.c.b16 %v2020, %v2012
    %v2429 = vpack.c.b16 %v2021, %v2013
    %v2430 = vpack.c.b16 %v2022, %v2014
    %v2431 = vpack.c.b16 %v2023, %v2015
    %v2432 = vpack.c.b16 %v2024, %v2016
    %v2433 = vpack.c.b16 %v2033, %v2025
    %v2434 = vpack.c.b16 %v2034, %v2026
    %v2435 = vpack.c.b16 %v2035, %v2027
    %v2436 = vpack.c.b16 %v2036, %v2028
    %v2437 = vpack.c.b16 %v2037, %v2029
    %v2438 = vpack.c.b16 %v2038, %v2030
    %v2439 = vpack.c.b16 %v2039, %v2031
    %v2440 = vpack.c.b16 %v2040, %v2032
    %v2441 = vpack.c.b16 %v2049, %v2041
    %v2442 = vpack.c.b16 %v2050, %v2042
    %v2443 = vpack.c.b16 %v2051, %v2043
    %v2444 = vpack.c.b16 %v2052, %v2044
    %v2445 = vpack.c.b16 %v2053, %v2045
    %v2446 = vpack.c.b16 %v2054, %v2046
    %v2447 = vpack.c.b16 %v2055, %v2047
    %v2448 = vpack.c.b16 %v2056, %v2048
    %v2449 = vpack.c.b16 %v2065, %v2057
    %v2450 = vpack.c.b16 %v2066, %v2058
    %v2451 = vpack.c.b16 %v2067, %v2059
    %v2452 = vpack.c.b16 %v2068, %v2060
    %v2453 = vpack.c.b16 %v2069, %v2061
    %v2454 = vpack.c.b16 %v2070, %v2062
    %v2455 = vpack.c.b16 %v2071, %v2063
    %v2456 = vpack.c.b16 %v2072, %v2064
    %v2457 = vpack.c.b16 %v2081, %v2073
    %v2458 = vpack.c.b16 %v2082, %v2074
    %v2459 = vpack.c.b16 %v2083, %v2075
    %v2460 = vpack.c.b16 %v2084, %v2076
    %v2461 = vpack.c.b16 %v2085, %v2077
    %v2462 = vpack.c.b16 %v2086, %v2078
    %v2463 = vpack.c.b16 %v2087, %v2079
    %v2464 = vpack.c.b16 %v2088, %v2080
    %v2465 = vpack.c.b16 %v2097, %v2089
    %v2466 = vpack.c.b16 %v2098, %v2090
    %v2467 = vpack.c.b16 %v2099, %v2091
    %v2468 = vpack.c.b16 %v2100, %v2092
    %v2469 = vpack.c.b16 %v2101, %v2093
    %v2470 = vpack.c.b16 %v2102, %v2094
    %v2471 = vpack.c.b16 %v2103, %v2095
    %v2472 = vpack.c.b16 %v2104, %v2096
    %v2473 = vpack.c.b16 %v2113, %v2105
    %v2474 = vpack.c.b16 %v2114, %v2106
    %v2475 = vpack.c.b16 %v2115, %v2107
    %v2476 = vpack.c.b16 %v2116, %v2108
    %v2477 = vpack.c.b16 %v2117, %v2109
    %v2478 = vpack.c.b16 %v2118, %v2110
    %v2479 = vpack.c.b16 %v2119, %v2111
    %v2480 = vpack.c.b16 %v2120, %v2112
    %v2481 = vpack.c.b16 %v2129, %v2121
    %v2482 = vpack.c.b16 %v2130, %v2122
    %v2483 = vpack.c.b16 %v2131, %v2123
    %v2484 = vpack.c.b16 %v2132, %v2124
    %v2485 = vpack.c.b16 %v2133, %v2125
    %v2486 = vpack.c.b16 %v2134, %v2126
    %v2487 = vpack.c.b16 %v2135, %v2127
    %v2488 = vpack.c.b16 %v2136, %v2128
    %v2489 = vpack.c.b16 %v2145, %v2137
    %v2490 = vpack.c.b16 %v2146, %v2138
    %v2491 = vpack.c.b16 %v2147, %v2139
    %v2492 = vpack.c.b16 %v2148, %v2140
    %v2493 = vpack.c.b16 %v2149, %v2141
    %v2494 = vpack.c.b16 %v2150, %v2142
    %v2495 = vpack.c.b16 %v2151, %v2143
    %v2496 = vpack.c.b16 %v2152, %v2144
    %v2497 = vpack.c.b16 %v2161, %v2153
    %v2498 = vpack.c.b16 %v2162, %v2154
    %v2499 = vpack.c.b16 %v2163, %v2155
    %v2500 = vpack.c.b16 %v2164, %v2156
    %v2501 = vpack.c.b16 %v2165, %v2157
    %v2502 = vpack.c.b16 %v2166, %v2158
    %v2503 = vpack.c.b16 %v2167, %v2159
    %v2504 = vpack.c.b16 %v2168, %v2160
    %v2505 = vpack.c.b16 %v2177, %v2169
    %v2506 = vpack.c.b16 %v2178, %v2170
    %v2507 = vpack.c.b16 %v2179, %v2171
    %v2508 = vpack.c.b16 %v2180, %v2172
    %v2509 = vpack.c.b16 %v2181, %v2173
    %v2510 = vpack.c.b16 %v2182, %v2174
    %v2511 = vpack.c.b16 %v2183, %v2175
    %v2512 = vpack.c.b16 %v2184, %v2176
    %v2513 = vpack.c.b16 %v2193, %v2185
    %v2514 = vpack.c.b16 %v2194, %v2186
    %v2515 = vpack.c.b16 %v2195, %v2187
    %v2516 = vpack.c.b16 %v2196, %v2188
    %v2517 = vpack.c.b16 %v2197, %v2189
    %v2518 = vpack.c.b16 %v2198, %v2190
    %v2519 = vpack.c.b16 %v2199, %v2191
    %v2520 = vpack.c.b16 %v2200, %v2192
    %v2521 = vpack.c.b16 %v2209, %v2201
    %v2522 = vpack.c.b16 %v2210, %v2202
    %v2523 = vpack.c.b16 %v2211, %v2203
    %v2524 = vpack.c.b16 %v2212, %v2204
    %v2525 = vpack.c.b16 %v2213, %v2205
    %v2526 = vpack.c.b16 %v2214, %v2206
    %v2527 = vpack.c.b16 %v2215, %v2207
    %v2528 = vpack.c.b16 %v2216, %v2208
    %v2529 = vpack.c.b16 %v2225, %v2217
    %v2530 = vpack.c.b16 %v2226, %v2218
    %v2531 = vpack.c.b16 %v2227, %v2219
    %v2532 = vpack.c.b16 %v2228, %v2220
    %v2533 = vpack.c.b16 %v2229, %v2221
    %v2534 = vpack.c.b16 %v2230, %v2222
    %v2535 = vpack.c.b16 %v2231, %v2223
    %v2536 = vpack.c.b16 %v2232, %v2224
    %v2537 = vpack.c.b16 %v2241, %v2233
    %v2538 = vpack.c.b16 %v2242, %v2234
    %v2539 = vpack.c.b16 %v2243, %v2235
    %v2540 = vpack.c.b16 %v2244, %v2236
    %v2541 = vpack.c.b16 %v2245, %v2237
    %v2542 = vpack.c.b16 %v2246, %v2238
    %v2543 = vpack.c.b16 %v2247, %v2239
    %v2544 = vpack.c.b16 %v2248, %v2240
    %v2545 = vpack.c.b16 %v2257, %v2249
    %v2546 = vpack.c.b16 %v2258, %v2250
    %v2547 = vpack.c.b16 %v2259, %v2251
    %v2548 = vpack.c.b16 %v2260, %v2252
    %v2549 = vpack.c.b16 %v2261, %v2253
    %v2550 = vpack.c.b16 %v2262, %v2254
    %v2551 = vpack.c.b16 %v2263, %v2255
    %v2552 = vpack.c.b16 %v2264, %v2256
    %v2553 = vpack.c.b16 %v2273, %v2265
    %v2554 = vpack.c.b16 %v2274, %v2266
    %v2555 = vpack.c.b16 %v2275, %v2267
    %v2556 = vpack.c.b16 %v2276, %v2268
    %v2557 = vpack.c.b16 %v2277, %v2269
    %v2558 = vpack.c.b16 %v2278, %v2270
    %v2559 = vpack.c.b16 %v2279, %v2271
    %v2560 = vpack.c.b16 %v2280, %v2272
    %v2561 = vpack.c.b16 %v2289, %v2281
    %v2562 = vpack.c.b16 %v2290, %v2282
    %v2563 = vpack.c.b16 %v2291, %v2283
    %v2564 = vpack.c.b16 %v2292, %v2284
    %v2565 = vpack.c.b16 %v2293, %v2285
    %v2566 = vpack.c.b16 %v2294, %v2286
    %v2567 = vpack.c.b16 %v2295, %v2287
    %v2568 = vpack.c.b16 %v2296, %v2288
    %v2569 = vpack.c.b16 %v2305, %v2297
    %v2570 = vpack.c.b16 %v2306, %v2298
    %v2571 = vpack.c.b16 %v2307, %v2299
    %v2572 = vpack.c.b16 %v2308, %v2300
    %v2573 = vpack.c.b16 %v2309, %v2301
    %v2574 = vpack.c.b16 %v2310, %v2302
    %v2575 = vpack.c.b16 %v2311, %v2303
    %v2576 = vpack.c.b16 %v2312, %v2304
    %v2577 = vpack.c.b16 %v2321, %v2313
    %v2578 = vpack.c.b16 %v2322, %v2314
    %v2579 = vpack.c.b16 %v2323, %v2315
    %v2580 = vpack.c.b16 %v2324, %v2316
    %v2581 = vpack.c.b16 %v2325, %v2317
    %v2582 = vpack.c.b16 %v2326, %v2318
    %v2583 = vpack.c.b16 %v2327, %v2319
    %v2584 = vpack.c.b16 %v2328, %v2320
    %2841 = vmatprep.subr.bf16.mxu0 %v2386
    %2842 = vmatpush1.bf16.msra.mxu0 %v2385
    %2843 = vmatprep.subr.bf16.mxu0 %v2378
    %2844 = vmatpush1.bf16.msra.mxu0 %v2377
    %2845 = vmatprep.subr.bf16.mxu0 %v2370
    %2846 = vmatpush1.bf16.msra.mxu0 %v2369
    %2847 = vmatprep.subr.bf16.mxu0 %v2362
    %2848 = vmatpush1.bf16.msra.mxu0 %v2361
    %2849 = vmatprep.subr.bf16.mxu0 %v2354
    %2850 = vmatpush1.bf16.msra.mxu0 %v2353
    %2851 = vmatprep.subr.bf16.mxu0 %v2346
    %2852 = vmatpush1.bf16.msra.mxu0 %v2345
    %2853 = vmatprep.subr.bf16.mxu0 %v2338
    %2854 = vmatpush1.bf16.msra.mxu0 %v2337
    %2855 = vmatprep.subr.bf16.mxu0 %v2330
    %2856 = vmatpush1.bf16.msra.mxu0 %v2329
    %2857 = vmatprep.subr.bf16.mxu0 %v2450
    %2858 = vmatpush2.bf16.msra.mxu0 %v2449
    %2859 = vmatprep.subr.bf16.mxu0 %v2442
    %2860 = vmatpush2.bf16.msra.mxu0 %v2441
    %2861 = vmatprep.subr.bf16.mxu0 %v2434
    %2862 = vmatpush2.bf16.msra.mxu0 %v2433
    %2863 = vmatprep.subr.bf16.mxu0 %v2426
    %2864 = vmatpush2.bf16.msra.mxu0 %v2425
    %2865 = vmatprep.subr.bf16.mxu0 %v2418
    %2866 = vmatpush2.bf16.msra.mxu0 %v2417
    %2867 = vmatprep.subr.bf16.mxu0 %v2410
    %2868 = vmatpush2.bf16.msra.mxu0 %v2409
    %2869 = vmatprep.subr.bf16.mxu0 %v2402
    %2870 = vmatpush2.bf16.msra.mxu0 %v2401
    %2871 = vmatprep.subr.bf16.mxu0 %v2394
    %2872 = vmatpush2.bf16.msra.mxu0 %v2393
    %2873 = vmatprep.mubr.bf16.mxu0 %v1046
    %2874 = vmatmul.mubr.bf16.gmra.mxu0 %v1045
    %v2875 = vpop.f32.mrf.mxu0
    %v2876 = vadd.f32 0.0, %v2875
    %v2877 = vpop.f32.mrf.mxu0
    %v2878 = vadd.f32 0.0, %v2877
    %v2879 = vpop.f32.mrf.mxu0
    %v2880 = vadd.f32 0.0, %v2879
    %v2881 = vpop.f32.mrf.mxu0
    %v2882 = vadd.f32 0.0, %v2881
    %2883 = vdwg.mxu0
    %2884 = vmatprep.subr.bf16.mxu0 %v2514
    %2885 = vmatpush1.bf16.msra.mxu0 %v2513
    %2886 = vmatprep.subr.bf16.mxu0 %v2506
    %2887 = vmatpush1.bf16.msra.mxu0 %v2505
    %2888 = vmatprep.subr.bf16.mxu0 %v2498
    %2889 = vmatpush1.bf16.msra.mxu0 %v2497
    %2890 = vmatprep.subr.bf16.mxu0 %v2490
    %2891 = vmatpush1.bf16.msra.mxu0 %v2489
    %2892 = vmatprep.subr.bf16.mxu0 %v2482
    %2893 = vmatpush1.bf16.msra.mxu0 %v2481
    %2894 = vmatprep.subr.bf16.mxu0 %v2474
    %2895 = vmatpush1.bf16.msra.mxu0 %v2473
    %2896 = vmatprep.subr.bf16.mxu0 %v2466
    %2897 = vmatpush1.bf16.msra.mxu0 %v2465
    %2898 = vmatprep.subr.bf16.mxu0 %v2458
    %2899 = vmatpush1.bf16.msra.mxu0 %v2457
    %2900 = vmatprep.subr.bf16.mxu0 %v2578
    %2901 = vmatpush2.bf16.msra.mxu0 %v2577
    %2902 = vmatprep.subr.bf16.mxu0 %v2570
    %2903 = vmatpush2.bf16.msra.mxu0 %v2569
    %2904 = vmatprep.subr.bf16.mxu0 %v2562
    %2905 = vmatpush2.bf16.msra.mxu0 %v2561
    %2906 = vmatprep.subr.bf16.mxu0 %v2554
    %2907 = vmatpush2.bf16.msra.mxu0 %v2553
    %2908 = vmatprep.subr.bf16.mxu0 %v2546
    %2909 = vmatpush2.bf16.msra.mxu0 %v2545
    %2910 = vmatprep.subr.bf16.mxu0 %v2538
    %2911 = vmatpush2.bf16.msra.mxu0 %v2537
    %2912 = vmatprep.subr.bf16.mxu0 %v2530
    %2913 = vmatpush2.bf16.msra.mxu0 %v2529
    %2914 = vmatprep.subr.bf16.mxu0 %v2522
    %2915 = vmatpush2.bf16.msra.mxu0 %v2521
    %2916 = vmatprep.mubr.bf16.mxu0 %v1048
    %2917 = vmatmul.mubr.bf16.gmra.mxu0 %v1047
    %v2918 = vpop.f32.mrf.mxu0
    %v2919 = vadd.f32 %v2876, %v2918
    %v2920 = vpop.f32.mrf.mxu0
    %v2921 = vadd.f32 %v2878, %v2920
    %v2922 = vpop.f32.mrf.mxu0
    %v2923 = vadd.f32 %v2880, %v2922
    %v2924 = vpop.f32.mrf.mxu0
    %v2925 = vadd.f32 %v2882, %v2924
    %2926 = vdwg.mxu0
    %2927 = vmatprep.subr.bf16.mxu0 %v2388
    %2928 = vmatpush1.bf16.msra.mxu0 %v2387
    %2929 = vmatprep.subr.bf16.mxu0 %v2380
    %2930 = vmatpush1.bf16.msra.mxu0 %v2379
    %2931 = vmatprep.subr.bf16.mxu0 %v2372
    %2932 = vmatpush1.bf16.msra.mxu0 %v2371
    %2933 = vmatprep.subr.bf16.mxu0 %v2364
    %2934 = vmatpush1.bf16.msra.mxu0 %v2363
    %2935 = vmatprep.subr.bf16.mxu0 %v2356
    %2936 = vmatpush1.bf16.msra.mxu0 %v2355
    %2937 = vmatprep.subr.bf16.mxu0 %v2348
    %2938 = vmatpush1.bf16.msra.mxu0 %v2347
    %2939 = vmatprep.subr.bf16.mxu0 %v2340
    %2940 = vmatpush1.bf16.msra.mxu0 %v2339
    %2941 = vmatprep.subr.bf16.mxu0 %v2332
    %2942 = vmatpush1.bf16.msra.mxu0 %v2331
    %2943 = vmatprep.subr.bf16.mxu0 %v2452
    %2944 = vmatpush2.bf16.msra.mxu0 %v2451
    %2945 = vmatprep.subr.bf16.mxu0 %v2444
    %2946 = vmatpush2.bf16.msra.mxu0 %v2443
    %2947 = vmatprep.subr.bf16.mxu0 %v2436
    %2948 = vmatpush2.bf16.msra.mxu0 %v2435
    %2949 = vmatprep.subr.bf16.mxu0 %v2428
    %2950 = vmatpush2.bf16.msra.mxu0 %v2427
    %2951 = vmatprep.subr.bf16.mxu0 %v2420
    %2952 = vmatpush2.bf16.msra.mxu0 %v2419
    %2953 = vmatprep.subr.bf16.mxu0 %v2412
    %2954 = vmatpush2.bf16.msra.mxu0 %v2411
    %2955 = vmatprep.subr.bf16.mxu0 %v2404
    %2956 = vmatpush2.bf16.msra.mxu0 %v2403
    %2957 = vmatprep.subr.bf16.mxu0 %v2396
    %2958 = vmatpush2.bf16.msra.mxu0 %v2395
    %2959 = vmatprep.mubr.bf16.mxu0 %v1046
    %2960 = vmatmul.mubr.bf16.gmra.mxu0 %v1045
    %v2961 = vpop.f32.mrf.mxu0
    %v2962 = vadd.f32 0.0, %v2961
    %v2963 = vpop.f32.mrf.mxu0
    %v2964 = vadd.f32 0.0, %v2963
    %v2965 = vpop.f32.mrf.mxu0
    %v2966 = vadd.f32 0.0, %v2965
    %v2967 = vpop.f32.mrf.mxu0
    %v2968 = vadd.f32 0.0, %v2967
    %2969 = vdwg.mxu0
    %2970 = vmatprep.subr.bf16.mxu0 %v2516
    %2971 = vmatpush1.bf16.msra.mxu0 %v2515
    %2972 = vmatprep.subr.bf16.mxu0 %v2508
    %2973 = vmatpush1.bf16.msra.mxu0 %v2507
    %2974 = vmatprep.subr.bf16.mxu0 %v2500
    %2975 = vmatpush1.bf16.msra.mxu0 %v2499
    %2976 = vmatprep.subr.bf16.mxu0 %v2492
    %2977 = vmatpush1.bf16.msra.mxu0 %v2491
    %2978 = vmatprep.subr.bf16.mxu0 %v2484
    %2979 = vmatpush1.bf16.msra.mxu0 %v2483
    %2980 = vmatprep.subr.bf16.mxu0 %v2476
    %2981 = vmatpush1.bf16.msra.mxu0 %v2475
    %2982 = vmatprep.subr.bf16.mxu0 %v2468
    %2983 = vmatpush1.bf16.msra.mxu0 %v2467
    %2984 = vmatprep.subr.bf16.mxu0 %v2460
    %2985 = vmatpush1.bf16.msra.mxu0 %v2459
    %2986 = vmatprep.subr.bf16.mxu0 %v2580
    %2987 = vmatpush2.bf16.msra.mxu0 %v2579
    %2988 = vmatprep.subr.bf16.mxu0 %v2572
    %2989 = vmatpush2.bf16.msra.mxu0 %v2571
    %2990 = vmatprep.subr.bf16.mxu0 %v2564
    %2991 = vmatpush2.bf16.msra.mxu0 %v2563
    %2992 = vmatprep.subr.bf16.mxu0 %v2556
    %2993 = vmatpush2.bf16.msra.mxu0 %v2555
    %2994 = vmatprep.subr.bf16.mxu0 %v2548
    %2995 = vmatpush2.bf16.msra.mxu0 %v2547
    %2996 = vmatprep.subr.bf16.mxu0 %v2540
    %2997 = vmatpush2.bf16.msra.mxu0 %v2539
    %2998 = vmatprep.subr.bf16.mxu0 %v2532
    %2999 = vmatpush2.bf16.msra.mxu0 %v2531
    %3000 = vmatprep.subr.bf16.mxu0 %v2524
    %3001 = vmatpush2.bf16.msra.mxu0 %v2523
    %3002 = vmatprep.mubr.bf16.mxu0 %v1048
    %3003 = vmatmul.mubr.bf16.gmra.mxu0 %v1047
    %v3004 = vpop.f32.mrf.mxu0
    %v3005 = vadd.f32 %v2962, %v3004
    %v3006 = vpop.f32.mrf.mxu0
    %v3007 = vadd.f32 %v2964, %v3006
    %v3008 = vpop.f32.mrf.mxu0
    %v3009 = vadd.f32 %v2966, %v3008
    %v3010 = vpop.f32.mrf.mxu0
    %v3011 = vadd.f32 %v2968, %v3010
    %3012 = vdwg.mxu0
    %3013 = vmatprep.subr.bf16.mxu0 %v2390
    %3014 = vmatpush1.bf16.msra.mxu0 %v2389
    %3015 = vmatprep.subr.bf16.mxu0 %v2382
    %3016 = vmatpush1.bf16.msra.mxu0 %v2381
    %3017 = vmatprep.subr.bf16.mxu0 %v2374
    %3018 = vmatpush1.bf16.msra.mxu0 %v2373
    %3019 = vmatprep.subr.bf16.mxu0 %v2366
    %3020 = vmatpush1.bf16.msra.mxu0 %v2365
    %3021 = vmatprep.subr.bf16.mxu0 %v2358
    %3022 = vmatpush1.bf16.msra.mxu0 %v2357
    %3023 = vmatprep.subr.bf16.mxu0 %v2350
    %3024 = vmatpush1.bf16.msra.mxu0 %v2349
    %3025 = vmatprep.subr.bf16.mxu0 %v2342
    %3026 = vmatpush1.bf16.msra.mxu0 %v2341
    %3027 = vmatprep.subr.bf16.mxu0 %v2334
    %3028 = vmatpush1.bf16.msra.mxu0 %v2333
    %3029 = vmatprep.subr.bf16.mxu0 %v2454
    %3030 = vmatpush2.bf16.msra.mxu0 %v2453
    %3031 = vmatprep.subr.bf16.mxu0 %v2446
    %3032 = vmatpush2.bf16.msra.mxu0 %v2445
    %3033 = vmatprep.subr.bf16.mxu0 %v2438
    %3034 = vmatpush2.bf16.msra.mxu0 %v2437
    %3035 = vmatprep.subr.bf16.mxu0 %v2430
    %3036 = vmatpush2.bf16.msra.mxu0 %v2429
    %3037 = vmatprep.subr.bf16.mxu0 %v2422
    %3038 = vmatpush2.bf16.msra.mxu0 %v2421
    %3039 = vmatprep.subr.bf16.mxu0 %v2414
    %3040 = vmatpush2.bf16.msra.mxu0 %v2413
    %3041 = vmatprep.subr.bf16.mxu0 %v2406
    %3042 = vmatpush2.bf16.msra.mxu0 %v2405
    %3043 = vmatprep.subr.bf16.mxu0 %v2398
    %3044 = vmatpush2.bf16.msra.mxu0 %v2397
    %3045 = vmatprep.mubr.bf16.mxu0 %v1046
    %3046 = vmatmul.mubr.bf16.gmra.mxu0 %v1045
    %v3047 = vpop.f32.mrf.mxu0
    %v3048 = vadd.f32 0.0, %v3047
    %v3049 = vpop.f32.mrf.mxu0
    %v3050 = vadd.f32 0.0, %v3049
    %v3051 = vpop.f32.mrf.mxu0
    %v3052 = vadd.f32 0.0, %v3051
    %v3053 = vpop.f32.mrf.mxu0
    %v3054 = vadd.f32 0.0, %v3053
    %3055 = vdwg.mxu0
    %3056 = vmatprep.subr.bf16.mxu0 %v2518
    %3057 = vmatpush1.bf16.msra.mxu0 %v2517
    %3058 = vmatprep.subr.bf16.mxu0 %v2510
    %3059 = vmatpush1.bf16.msra.mxu0 %v2509
    %3060 = vmatprep.subr.bf16.mxu0 %v2502
    %3061 = vmatpush1.bf16.msra.mxu0 %v2501
    %3062 = vmatprep.subr.bf16.mxu0 %v2494
    %3063 = vmatpush1.bf16.msra.mxu0 %v2493
    %3064 = vmatprep.subr.bf16.mxu0 %v2486
    %3065 = vmatpush1.bf16.msra.mxu0 %v2485
    %3066 = vmatprep.subr.bf16.mxu0 %v2478
    %3067 = vmatpush1.bf16.msra.mxu0 %v2477
    %3068 = vmatprep.subr.bf16.mxu0 %v2470
    %3069 = vmatpush1.bf16.msra.mxu0 %v2469
    %3070 = vmatprep.subr.bf16.mxu0 %v2462
    %3071 = vmatpush1.bf16.msra.mxu0 %v2461
    %3072 = vmatprep.subr.bf16.mxu0 %v2582
    %3073 = vmatpush2.bf16.msra.mxu0 %v2581
    %3074 = vmatprep.subr.bf16.mxu0 %v2574
    %3075 = vmatpush2.bf16.msra.mxu0 %v2573
    %3076 = vmatprep.subr.bf16.mxu0 %v2566
    %3077 = vmatpush2.bf16.msra.mxu0 %v2565
    %3078 = vmatprep.subr.bf16.mxu0 %v2558
    %3079 = vmatpush2.bf16.msra.mxu0 %v2557
    %3080 = vmatprep.subr.bf16.mxu0 %v2550
    %3081 = vmatpush2.bf16.msra.mxu0 %v2549
    %3082 = vmatprep.subr.bf16.mxu0 %v2542
    %3083 = vmatpush2.bf16.msra.mxu0 %v2541
    %3084 = vmatprep.subr.bf16.mxu0 %v2534
    %3085 = vmatpush2.bf16.msra.mxu0 %v2533
    %3086 = vmatprep.subr.bf16.mxu0 %v2526
    %3087 = vmatpush2.bf16.msra.mxu0 %v2525
    %3088 = vmatprep.mubr.bf16.mxu0 %v1048
    %3089 = vmatmul.mubr.bf16.gmra.mxu0 %v1047
    %v3090 = vpop.f32.mrf.mxu0
    %v3091 = vadd.f32 %v3048, %v3090
    %v3092 = vpop.f32.mrf.mxu0
    %v3093 = vadd.f32 %v3050, %v3092
    %v3094 = vpop.f32.mrf.mxu0
    %v3095 = vadd.f32 %v3052, %v3094
    %v3096 = vpop.f32.mrf.mxu0
    %v3097 = vadd.f32 %v3054, %v3096
    %3098 = vdwg.mxu0
    %3099 = vmatprep.subr.bf16.mxu0 %v2392
    %3100 = vmatpush1.bf16.msra.mxu0 %v2391
    %3101 = vmatprep.subr.bf16.mxu0 %v2384
    %3102 = vmatpush1.bf16.msra.mxu0 %v2383
    %3103 = vmatprep.subr.bf16.mxu0 %v2376
    %3104 = vmatpush1.bf16.msra.mxu0 %v2375
    %3105 = vmatprep.subr.bf16.mxu0 %v2368
    %3106 = vmatpush1.bf16.msra.mxu0 %v2367
    %3107 = vmatprep.subr.bf16.mxu0 %v2360
    %3108 = vmatpush1.bf16.msra.mxu0 %v2359
    %3109 = vmatprep.subr.bf16.mxu0 %v2352
    %3110 = vmatpush1.bf16.msra.mxu0 %v2351
    %3111 = vmatprep.subr.bf16.mxu0 %v2344
    %3112 = vmatpush1.bf16.msra.mxu0 %v2343
    %3113 = vmatprep.subr.bf16.mxu0 %v2336
    %3114 = vmatpush1.bf16.msra.mxu0 %v2335
    %3115 = vmatprep.subr.bf16.mxu0 %v2456
    %3116 = vmatpush2.bf16.msra.mxu0 %v2455
    %3117 = vmatprep.subr.bf16.mxu0 %v2448
    %3118 = vmatpush2.bf16.msra.mxu0 %v2447
    %3119 = vmatprep.subr.bf16.mxu0 %v2440
    %3120 = vmatpush2.bf16.msra.mxu0 %v2439
    %3121 = vmatprep.subr.bf16.mxu0 %v2432
    %3122 = vmatpush2.bf16.msra.mxu0 %v2431
    %3123 = vmatprep.subr.bf16.mxu0 %v2424
    %3124 = vmatpush2.bf16.msra.mxu0 %v2423
    %3125 = vmatprep.subr.bf16.mxu0 %v2416
    %3126 = vmatpush2.bf16.msra.mxu0 %v2415
    %3127 = vmatprep.subr.bf16.mxu0 %v2408
    %3128 = vmatpush2.bf16.msra.mxu0 %v2407
    %3129 = vmatprep.subr.bf16.mxu0 %v2400
    %3130 = vmatpush2.bf16.msra.mxu0 %v2399
    %3131 = vmatprep.mubr.bf16.mxu0 %v1046
    %3132 = vmatmul.mubr.bf16.gmra.mxu0 %v1045
    %v3133 = vpop.f32.mrf.mxu0
    %v3134 = vadd.f32 0.0, %v3133
    %v3135 = vpop.f32.mrf.mxu0
    %v3136 = vadd.f32 0.0, %v3135
    %v3137 = vpop.f32.mrf.mxu0
    %v3138 = vadd.f32 0.0, %v3137
    %v3139 = vpop.f32.mrf.mxu0
    %v3140 = vadd.f32 0.0, %v3139
    %3141 = vdwg.mxu0
    %3142 = vmatprep.subr.bf16.mxu0 %v2520
    %3143 = vmatpush1.bf16.msra.mxu0 %v2519
    %3144 = vmatprep.subr.bf16.mxu0 %v2512
    %3145 = vmatpush1.bf16.msra.mxu0 %v2511
    %3146 = vmatprep.subr.bf16.mxu0 %v2504
    %3147 = vmatpush1.bf16.msra.mxu0 %v2503
    %3148 = vmatprep.subr.bf16.mxu0 %v2496
    %3149 = vmatpush1.bf16.msra.mxu0 %v2495
    %3150 = vmatprep.subr.bf16.mxu0 %v2488
    %3151 = vmatpush1.bf16.msra.mxu0 %v2487
    %3152 = vmatprep.subr.bf16.mxu0 %v2480
    %3153 = vmatpush1.bf16.msra.mxu0 %v2479
    %3154 = vmatprep.subr.bf16.mxu0 %v2472
    %3155 = vmatpush1.bf16.msra.mxu0 %v2471
    %3156 = vmatprep.subr.bf16.mxu0 %v2464
    %3157 = vmatpush1.bf16.msra.mxu0 %v2463
    %3158 = vmatprep.subr.bf16.mxu0 %v2584
    %3159 = vmatpush2.bf16.msra.mxu0 %v2583
    %3160 = vmatprep.subr.bf16.mxu0 %v2576
    %3161 = vmatpush2.bf16.msra.mxu0 %v2575
    %3162 = vmatprep.subr.bf16.mxu0 %v2568
    %3163 = vmatpush2.bf16.msra.mxu0 %v2567
    %3164 = vmatprep.subr.bf16.mxu0 %v2560
    %3165 = vmatpush2.bf16.msra.mxu0 %v2559
    %3166 = vmatprep.subr.bf16.mxu0 %v2552
    %3167 = vmatpush2.bf16.msra.mxu0 %v2551
    %3168 = vmatprep.subr.bf16.mxu0 %v2544
    %3169 = vmatpush2.bf16.msra.mxu0 %v2543
    %3170 = vmatprep.subr.bf16.mxu0 %v2536
    %3171 = vmatpush2.bf16.msra.mxu0 %v2535
    %3172 = vmatprep.subr.bf16.mxu0 %v2528
    %3173 = vmatpush2.bf16.msra.mxu0 %v2527
    %3174 = vmatprep.mubr.bf16.mxu0 %v1048
    %3175 = vmatmul.mubr.bf16.gmra.mxu0 %v1047
    %v3176 = vpop.f32.mrf.mxu0
    %v3177 = vadd.f32 %v3134, %v3176
    %v3178 = vpop.f32.mrf.mxu0
    %v3179 = vadd.f32 %v3136, %v3178
    %v3180 = vpop.f32.mrf.mxu0
    %v3181 = vadd.f32 %v3138, %v3180
    %v3182 = vpop.f32.mrf.mxu0
    %v3183 = vadd.f32 %v3140, %v3182
    %3184 = vdwg.mxu0
    %v3441 = vunpack.c.l.b16 %v1049
    %v3442 = vunpack.c.h.b16 %v1049
    %v3443 = vunpack.c.l.b16 %v1050
    %v3444 = vunpack.c.h.b16 %v1050
    %v3445 = vunpack.c.l.b16 %v1051
    %v3446 = vunpack.c.h.b16 %v1051
    %v3447 = vunpack.c.l.b16 %v1052
    %v3448 = vunpack.c.h.b16 %v1052
    %v3449 = vunpack.c.l.b16 %v1053
    %v3450 = vunpack.c.h.b16 %v1053
    %v3451 = vunpack.c.l.b16 %v1054
    %v3452 = vunpack.c.h.b16 %v1054
    %v3453 = vunpack.c.l.b16 %v1055
    %v3454 = vunpack.c.h.b16 %v1055
    %v3455 = vunpack.c.l.b16 %v1056
    %v3456 = vunpack.c.h.b16 %v1056
    %v3457 = vunpack.c.l.b16 %v1057
    %v3458 = vunpack.c.h.b16 %v1057
    %v3459 = vunpack.c.l.b16 %v1058
    %v3460 = vunpack.c.h.b16 %v1058
    %v3461 = vunpack.c.l.b16 %v1059
    %v3462 = vunpack.c.h.b16 %v1059
    %v3463 = vunpack.c.l.b16 %v1060
    %v3464 = vunpack.c.h.b16 %v1060
    %v3465 = vunpack.c.l.b16 %v1061
    %v3466 = vunpack.c.h.b16 %v1061
    %v3467 = vunpack.c.l.b16 %v1062
    %v3468 = vunpack.c.h.b16 %v1062
    %v3469 = vunpack.c.l.b16 %v1063
    %v3470 = vunpack.c.h.b16 %v1063
    %v3471 = vunpack.c.l.b16 %v1064
    %v3472 = vunpack.c.h.b16 %v1064
    %v3473 = vunpack.c.l.b16 %v1065
    %v3474 = vunpack.c.h.b16 %v1065
    %v3475 = vunpack.c.l.b16 %v1066
    %v3476 = vunpack.c.h.b16 %v1066
    %v3477 = vunpack.c.l.b16 %v1067
    %v3478 = vunpack.c.h.b16 %v1067
    %v3479 = vunpack.c.l.b16 %v1068
    %v3480 = vunpack.c.h.b16 %v1068
    %v3481 = vunpack.c.l.b16 %v1069
    %v3482 = vunpack.c.h.b16 %v1069
    %v3483 = vunpack.c.l.b16 %v1070
    %v3484 = vunpack.c.h.b16 %v1070
    %v3485 = vunpack.c.l.b16 %v1071
    %v3486 = vunpack.c.h.b16 %v1071
    %v3487 = vunpack.c.l.b16 %v1072
    %v3488 = vunpack.c.h.b16 %v1072
    %v3489 = vunpack.c.l.b16 %v1073
    %v3490 = vunpack.c.h.b16 %v1073
    %v3491 = vunpack.c.l.b16 %v1074
    %v3492 = vunpack.c.h.b16 %v1074
    %v3493 = vunpack.c.l.b16 %v1075
    %v3494 = vunpack.c.h.b16 %v1075
    %v3495 = vunpack.c.l.b16 %v1076
    %v3496 = vunpack.c.h.b16 %v1076
    %v3497 = vunpack.c.l.b16 %v1077
    %v3498 = vunpack.c.h.b16 %v1077
    %v3499 = vunpack.c.l.b16 %v1078
    %v3500 = vunpack.c.h.b16 %v1078
    %v3501 = vunpack.c.l.b16 %v1079
    %v3502 = vunpack.c.h.b16 %v1079
    %v3503 = vunpack.c.l.b16 %v1080
    %v3504 = vunpack.c.h.b16 %v1080
    %v3505 = vunpack.c.l.b16 %v1081
    %v3506 = vunpack.c.h.b16 %v1081
    %v3507 = vunpack.c.l.b16 %v1082
    %v3508 = vunpack.c.h.b16 %v1082
    %v3509 = vunpack.c.l.b16 %v1083
    %v3510 = vunpack.c.h.b16 %v1083
    %v3511 = vunpack.c.l.b16 %v1084
    %v3512 = vunpack.c.h.b16 %v1084
    %v3513 = vunpack.c.l.b16 %v1085
    %v3514 = vunpack.c.h.b16 %v1085
    %v3515 = vunpack.c.l.b16 %v1086
    %v3516 = vunpack.c.h.b16 %v1086
    %v3517 = vunpack.c.l.b16 %v1087
    %v3518 = vunpack.c.h.b16 %v1087
    %v3519 = vunpack.c.l.b16 %v1088
    %v3520 = vunpack.c.h.b16 %v1088
    %v3521 = vunpack.c.l.b16 %v1089
    %v3522 = vunpack.c.h.b16 %v1089
    %v3523 = vunpack.c.l.b16 %v1090
    %v3524 = vunpack.c.h.b16 %v1090
    %v3525 = vunpack.c.l.b16 %v1091
    %v3526 = vunpack.c.h.b16 %v1091
    %v3527 = vunpack.c.l.b16 %v1092
    %v3528 = vunpack.c.h.b16 %v1092
    %v3529 = vunpack.c.l.b16 %v1093
    %v3530 = vunpack.c.h.b16 %v1093
    %v3531 = vunpack.c.l.b16 %v1094
    %v3532 = vunpack.c.h.b16 %v1094
    %v3533 = vunpack.c.l.b16 %v1095
    %v3534 = vunpack.c.h.b16 %v1095
    %v3535 = vunpack.c.l.b16 %v1096
    %v3536 = vunpack.c.h.b16 %v1096
    %v3537 = vunpack.c.l.b16 %v1097
    %v3538 = vunpack.c.h.b16 %v1097
    %v3539 = vunpack.c.l.b16 %v1098
    %v3540 = vunpack.c.h.b16 %v1098
    %v3541 = vunpack.c.l.b16 %v1099
    %v3542 = vunpack.c.h.b16 %v1099
    %v3543 = vunpack.c.l.b16 %v1100
    %v3544 = vunpack.c.h.b16 %v1100
    %v3545 = vunpack.c.l.b16 %v1101
    %v3546 = vunpack.c.h.b16 %v1101
    %v3547 = vunpack.c.l.b16 %v1102
    %v3548 = vunpack.c.h.b16 %v1102
    %v3549 = vunpack.c.l.b16 %v1103
    %v3550 = vunpack.c.h.b16 %v1103
    %v3551 = vunpack.c.l.b16 %v1104
    %v3552 = vunpack.c.h.b16 %v1104
    %v3553 = vunpack.c.l.b16 %v1105
    %v3554 = vunpack.c.h.b16 %v1105
    %v3555 = vunpack.c.l.b16 %v1106
    %v3556 = vunpack.c.h.b16 %v1106
    %v3557 = vunpack.c.l.b16 %v1107
    %v3558 = vunpack.c.h.b16 %v1107
    %v3559 = vunpack.c.l.b16 %v1108
    %v3560 = vunpack.c.h.b16 %v1108
    %v3561 = vunpack.c.l.b16 %v1109
    %v3562 = vunpack.c.h.b16 %v1109
    %v3563 = vunpack.c.l.b16 %v1110
    %v3564 = vunpack.c.h.b16 %v1110
    %v3565 = vunpack.c.l.b16 %v1111
    %v3566 = vunpack.c.h.b16 %v1111
    %v3567 = vunpack.c.l.b16 %v1112
    %v3568 = vunpack.c.h.b16 %v1112
    %v3569 = vunpack.c.l.b16 %v1113
    %v3570 = vunpack.c.h.b16 %v1113
    %v3571 = vunpack.c.l.b16 %v1114
    %v3572 = vunpack.c.h.b16 %v1114
    %v3573 = vunpack.c.l.b16 %v1115
    %v3574 = vunpack.c.h.b16 %v1115
    %v3575 = vunpack.c.l.b16 %v1116
    %v3576 = vunpack.c.h.b16 %v1116
    %v3577 = vunpack.c.l.b16 %v1117
    %v3578 = vunpack.c.h.b16 %v1117
    %v3579 = vunpack.c.l.b16 %v1118
    %v3580 = vunpack.c.h.b16 %v1118
    %v3581 = vunpack.c.l.b16 %v1119
    %v3582 = vunpack.c.h.b16 %v1119
    %v3583 = vunpack.c.l.b16 %v1120
    %v3584 = vunpack.c.h.b16 %v1120
    %v3585 = vunpack.c.l.b16 %v1121
    %v3586 = vunpack.c.h.b16 %v1121
    %v3587 = vunpack.c.l.b16 %v1122
    %v3588 = vunpack.c.h.b16 %v1122
    %v3589 = vunpack.c.l.b16 %v1123
    %v3590 = vunpack.c.h.b16 %v1123
    %v3591 = vunpack.c.l.b16 %v1124
    %v3592 = vunpack.c.h.b16 %v1124
    %v3593 = vunpack.c.l.b16 %v1125
    %v3594 = vunpack.c.h.b16 %v1125
    %v3595 = vunpack.c.l.b16 %v1126
    %v3596 = vunpack.c.h.b16 %v1126
    %v3597 = vunpack.c.l.b16 %v1127
    %v3598 = vunpack.c.h.b16 %v1127
    %v3599 = vunpack.c.l.b16 %v1128
    %v3600 = vunpack.c.h.b16 %v1128
    %v3601 = vunpack.c.l.b16 %v1129
    %v3602 = vunpack.c.h.b16 %v1129
    %v3603 = vunpack.c.l.b16 %v1130
    %v3604 = vunpack.c.h.b16 %v1130
    %v3605 = vunpack.c.l.b16 %v1131
    %v3606 = vunpack.c.h.b16 %v1131
    %v3607 = vunpack.c.l.b16 %v1132
    %v3608 = vunpack.c.h.b16 %v1132
    %v3609 = vunpack.c.l.b16 %v1133
    %v3610 = vunpack.c.h.b16 %v1133
    %v3611 = vunpack.c.l.b16 %v1134
    %v3612 = vunpack.c.h.b16 %v1134
    %v3613 = vunpack.c.l.b16 %v1135
    %v3614 = vunpack.c.h.b16 %v1135
    %v3615 = vunpack.c.l.b16 %v1136
    %v3616 = vunpack.c.h.b16 %v1136
    %v3617 = vunpack.c.l.b16 %v1137
    %v3618 = vunpack.c.h.b16 %v1137
    %v3619 = vunpack.c.l.b16 %v1138
    %v3620 = vunpack.c.h.b16 %v1138
    %v3621 = vunpack.c.l.b16 %v1139
    %v3622 = vunpack.c.h.b16 %v1139
    %v3623 = vunpack.c.l.b16 %v1140
    %v3624 = vunpack.c.h.b16 %v1140
    %v3625 = vunpack.c.l.b16 %v1141
    %v3626 = vunpack.c.h.b16 %v1141
    %v3627 = vunpack.c.l.b16 %v1142
    %v3628 = vunpack.c.h.b16 %v1142
    %v3629 = vunpack.c.l.b16 %v1143
    %v3630 = vunpack.c.h.b16 %v1143
    %v3631 = vunpack.c.l.b16 %v1144
    %v3632 = vunpack.c.h.b16 %v1144
    %v3633 = vunpack.c.l.b16 %v1145
    %v3634 = vunpack.c.h.b16 %v1145
    %v3635 = vunpack.c.l.b16 %v1146
    %v3636 = vunpack.c.h.b16 %v1146
    %v3637 = vunpack.c.l.b16 %v1147
    %v3638 = vunpack.c.h.b16 %v1147
    %v3639 = vunpack.c.l.b16 %v1148
    %v3640 = vunpack.c.h.b16 %v1148
    %v3641 = vunpack.c.l.b16 %v1149
    %v3642 = vunpack.c.h.b16 %v1149
    %v3643 = vunpack.c.l.b16 %v1150
    %v3644 = vunpack.c.h.b16 %v1150
    %v3645 = vunpack.c.l.b16 %v1151
    %v3646 = vunpack.c.h.b16 %v1151
    %v3647 = vunpack.c.l.b16 %v1152
    %v3648 = vunpack.c.h.b16 %v1152
    %v3649 = vunpack.c.l.b16 %v1153
    %v3650 = vunpack.c.h.b16 %v1153
    %v3651 = vunpack.c.l.b16 %v1154
    %v3652 = vunpack.c.h.b16 %v1154
    %v3653 = vunpack.c.l.b16 %v1155
    %v3654 = vunpack.c.h.b16 %v1155
    %v3655 = vunpack.c.l.b16 %v1156
    %v3656 = vunpack.c.h.b16 %v1156
    %v3657 = vunpack.c.l.b16 %v1157
    %v3658 = vunpack.c.h.b16 %v1157
    %v3659 = vunpack.c.l.b16 %v1158
    %v3660 = vunpack.c.h.b16 %v1158
    %v3661 = vunpack.c.l.b16 %v1159
    %v3662 = vunpack.c.h.b16 %v1159
    %v3663 = vunpack.c.l.b16 %v1160
    %v3664 = vunpack.c.h.b16 %v1160
    %v3665 = vunpack.c.l.b16 %v1161
    %v3666 = vunpack.c.h.b16 %v1161
    %v3667 = vunpack.c.l.b16 %v1162
    %v3668 = vunpack.c.h.b16 %v1162
    %v3669 = vunpack.c.l.b16 %v1163
    %v3670 = vunpack.c.h.b16 %v1163
    %v3671 = vunpack.c.l.b16 %v1164
    %v3672 = vunpack.c.h.b16 %v1164
    %v3673 = vunpack.c.l.b16 %v1165
    %v3674 = vunpack.c.h.b16 %v1165
    %v3675 = vunpack.c.l.b16 %v1166
    %v3676 = vunpack.c.h.b16 %v1166
    %v3677 = vunpack.c.l.b16 %v1167
    %v3678 = vunpack.c.h.b16 %v1167
    %v3679 = vunpack.c.l.b16 %v1168
    %v3680 = vunpack.c.h.b16 %v1168
    %v3681 = vunpack.c.l.b16 %v1169
    %v3682 = vunpack.c.h.b16 %v1169
    %v3683 = vunpack.c.l.b16 %v1170
    %v3684 = vunpack.c.h.b16 %v1170
    %v3685 = vunpack.c.l.b16 %v1171
    %v3686 = vunpack.c.h.b16 %v1171
    %v3687 = vunpack.c.l.b16 %v1172
    %v3688 = vunpack.c.h.b16 %v1172
    %v3689 = vunpack.c.l.b16 %v1173
    %v3690 = vunpack.c.h.b16 %v1173
    %v3691 = vunpack.c.l.b16 %v1174
    %v3692 = vunpack.c.h.b16 %v1174
    %v3693 = vunpack.c.l.b16 %v1175
    %v3694 = vunpack.c.h.b16 %v1175
    %v3695 = vunpack.c.l.b16 %v1176
    %v3696 = vunpack.c.h.b16 %v1176
    %v3697 = vunpack.c.l.b16 %v1177
    %v3698 = vunpack.c.h.b16 %v1177
    %v3699 = vunpack.c.l.b16 %v1178
    %v3700 = vunpack.c.h.b16 %v1178
    %v3701 = vunpack.c.l.b16 %v1179
    %v3702 = vunpack.c.h.b16 %v1179
    %v3703 = vunpack.c.l.b16 %v1180
    %v3704 = vunpack.c.h.b16 %v1180
    %v3705 = vunpack.c.l.b16 %v1181
    %v3706 = vunpack.c.h.b16 %v1181
    %v3707 = vunpack.c.l.b16 %v1182
    %v3708 = vunpack.c.h.b16 %v1182
    %v3709 = vunpack.c.l.b16 %v1183
    %v3710 = vunpack.c.h.b16 %v1183
    %v3711 = vunpack.c.l.b16 %v1184
    %v3712 = vunpack.c.h.b16 %v1184
    %v3713 = vunpack.c.l.b16 %v1185
    %v3714 = vunpack.c.h.b16 %v1185
    %v3715 = vunpack.c.l.b16 %v1186
    %v3716 = vunpack.c.h.b16 %v1186
    %v3717 = vunpack.c.l.b16 %v1187
    %v3718 = vunpack.c.h.b16 %v1187
    %v3719 = vunpack.c.l.b16 %v1188
    %v3720 = vunpack.c.h.b16 %v1188
    %v3721 = vunpack.c.l.b16 %v1189
    %v3722 = vunpack.c.h.b16 %v1189
    %v3723 = vunpack.c.l.b16 %v1190
    %v3724 = vunpack.c.h.b16 %v1190
    %v3725 = vunpack.c.l.b16 %v1191
    %v3726 = vunpack.c.h.b16 %v1191
    %v3727 = vunpack.c.l.b16 %v1192
    %v3728 = vunpack.c.h.b16 %v1192
    %v3729 = vunpack.c.l.b16 %v1193
    %v3730 = vunpack.c.h.b16 %v1193
    %v3731 = vunpack.c.l.b16 %v1194
    %v3732 = vunpack.c.h.b16 %v1194
    %v3733 = vunpack.c.l.b16 %v1195
    %v3734 = vunpack.c.h.b16 %v1195
    %v3735 = vunpack.c.l.b16 %v1196
    %v3736 = vunpack.c.h.b16 %v1196
    %v3737 = vunpack.c.l.b16 %v1197
    %v3738 = vunpack.c.h.b16 %v1197
    %v3739 = vunpack.c.l.b16 %v1198
    %v3740 = vunpack.c.h.b16 %v1198
    %v3741 = vunpack.c.l.b16 %v1199
    %v3742 = vunpack.c.h.b16 %v1199
    %v3743 = vunpack.c.l.b16 %v1200
    %v3744 = vunpack.c.h.b16 %v1200
    %v3745 = vunpack.c.l.b16 %v1201
    %v3746 = vunpack.c.h.b16 %v1201
    %v3747 = vunpack.c.l.b16 %v1202
    %v3748 = vunpack.c.h.b16 %v1202
    %v3749 = vunpack.c.l.b16 %v1203
    %v3750 = vunpack.c.h.b16 %v1203
    %v3751 = vunpack.c.l.b16 %v1204
    %v3752 = vunpack.c.h.b16 %v1204
    %v3753 = vunpack.c.l.b16 %v1205
    %v3754 = vunpack.c.h.b16 %v1205
    %v3755 = vunpack.c.l.b16 %v1206
    %v3756 = vunpack.c.h.b16 %v1206
    %v3757 = vunpack.c.l.b16 %v1207
    %v3758 = vunpack.c.h.b16 %v1207
    %v3759 = vunpack.c.l.b16 %v1208
    %v3760 = vunpack.c.h.b16 %v1208
    %v3761 = vunpack.c.l.b16 %v1209
    %v3762 = vunpack.c.h.b16 %v1209
    %v3763 = vunpack.c.l.b16 %v1210
    %v3764 = vunpack.c.h.b16 %v1210
    %v3765 = vunpack.c.l.b16 %v1211
    %v3766 = vunpack.c.h.b16 %v1211
    %v3767 = vunpack.c.l.b16 %v1212
    %v3768 = vunpack.c.h.b16 %v1212
    %v3769 = vunpack.c.l.b16 %v1213
    %v3770 = vunpack.c.h.b16 %v1213
    %v3771 = vunpack.c.l.b16 %v1214
    %v3772 = vunpack.c.h.b16 %v1214
    %v3773 = vunpack.c.l.b16 %v1215
    %v3774 = vunpack.c.h.b16 %v1215
    %v3775 = vunpack.c.l.b16 %v1216
    %v3776 = vunpack.c.h.b16 %v1216
    %v3777 = vunpack.c.l.b16 %v1217
    %v3778 = vunpack.c.h.b16 %v1217
    %v3779 = vunpack.c.l.b16 %v1218
    %v3780 = vunpack.c.h.b16 %v1218
    %v3781 = vunpack.c.l.b16 %v1219
    %v3782 = vunpack.c.h.b16 %v1219
    %v3783 = vunpack.c.l.b16 %v1220
    %v3784 = vunpack.c.h.b16 %v1220
    %v3785 = vunpack.c.l.b16 %v1221
    %v3786 = vunpack.c.h.b16 %v1221
    %v3787 = vunpack.c.l.b16 %v1222
    %v3788 = vunpack.c.h.b16 %v1222
    %v3789 = vunpack.c.l.b16 %v1223
    %v3790 = vunpack.c.h.b16 %v1223
    %v3791 = vunpack.c.l.b16 %v1224
    %v3792 = vunpack.c.h.b16 %v1224
    %v3793 = vunpack.c.l.b16 %v1225
    %v3794 = vunpack.c.h.b16 %v1225
    %v3795 = vunpack.c.l.b16 %v1226
    %v3796 = vunpack.c.h.b16 %v1226
    %v3797 = vunpack.c.l.b16 %v1227
    %v3798 = vunpack.c.h.b16 %v1227
    %v3799 = vunpack.c.l.b16 %v1228
    %v3800 = vunpack.c.h.b16 %v1228
    %v3801 = vunpack.c.l.b16 %v1229
    %v3802 = vunpack.c.h.b16 %v1229
    %v3803 = vunpack.c.l.b16 %v1230
    %v3804 = vunpack.c.h.b16 %v1230
    %v3805 = vunpack.c.l.b16 %v1231
    %v3806 = vunpack.c.h.b16 %v1231
    %v3807 = vunpack.c.l.b16 %v1232
    %v3808 = vunpack.c.h.b16 %v1232
    %v3809 = vunpack.c.l.b16 %v1233
    %v3810 = vunpack.c.h.b16 %v1233
    %v3811 = vunpack.c.l.b16 %v1234
    %v3812 = vunpack.c.h.b16 %v1234
    %v3813 = vunpack.c.l.b16 %v1235
    %v3814 = vunpack.c.h.b16 %v1235
    %v3815 = vunpack.c.l.b16 %v1236
    %v3816 = vunpack.c.h.b16 %v1236
    %v3817 = vunpack.c.l.b16 %v1237
    %v3818 = vunpack.c.h.b16 %v1237
    %v3819 = vunpack.c.l.b16 %v1238
    %v3820 = vunpack.c.h.b16 %v1238
    %v3821 = vunpack.c.l.b16 %v1239
    %v3822 = vunpack.c.h.b16 %v1239
    %v3823 = vunpack.c.l.b16 %v1240
    %v3824 = vunpack.c.h.b16 %v1240
    %v3825 = vunpack.c.l.b16 %v1241
    %v3826 = vunpack.c.h.b16 %v1241
    %v3827 = vunpack.c.l.b16 %v1242
    %v3828 = vunpack.c.h.b16 %v1242
    %v3829 = vunpack.c.l.b16 %v1243
    %v3830 = vunpack.c.h.b16 %v1243
    %v3831 = vunpack.c.l.b16 %v1244
    %v3832 = vunpack.c.h.b16 %v1244
    %v3833 = vunpack.c.l.b16 %v1245
    %v3834 = vunpack.c.h.b16 %v1245
    %v3835 = vunpack.c.l.b16 %v1246
    %v3836 = vunpack.c.h.b16 %v1246
    %v3837 = vunpack.c.l.b16 %v1247
    %v3838 = vunpack.c.h.b16 %v1247
    %v3839 = vunpack.c.l.b16 %v1248
    %v3840 = vunpack.c.h.b16 %v1248
    %v3841 = vunpack.c.l.b16 %v1249
    %v3842 = vunpack.c.h.b16 %v1249
    %v3843 = vunpack.c.l.b16 %v1250
    %v3844 = vunpack.c.h.b16 %v1250
    %v3845 = vunpack.c.l.b16 %v1251
    %v3846 = vunpack.c.h.b16 %v1251
    %v3847 = vunpack.c.l.b16 %v1252
    %v3848 = vunpack.c.h.b16 %v1252
    %v3849 = vunpack.c.l.b16 %v1253
    %v3850 = vunpack.c.h.b16 %v1253
    %v3851 = vunpack.c.l.b16 %v1254
    %v3852 = vunpack.c.h.b16 %v1254
    %v3853 = vunpack.c.l.b16 %v1255
    %v3854 = vunpack.c.h.b16 %v1255
    %v3855 = vunpack.c.l.b16 %v1256
    %v3856 = vunpack.c.h.b16 %v1256
    %v3857 = vunpack.c.l.b16 %v1257
    %v3858 = vunpack.c.h.b16 %v1257
    %v3859 = vunpack.c.l.b16 %v1258
    %v3860 = vunpack.c.h.b16 %v1258
    %v3861 = vunpack.c.l.b16 %v1259
    %v3862 = vunpack.c.h.b16 %v1259
    %v3863 = vunpack.c.l.b16 %v1260
    %v3864 = vunpack.c.h.b16 %v1260
    %v3865 = vunpack.c.l.b16 %v1261
    %v3866 = vunpack.c.h.b16 %v1261
    %v3867 = vunpack.c.l.b16 %v1262
    %v3868 = vunpack.c.h.b16 %v1262
    %v3869 = vunpack.c.l.b16 %v1263
    %v3870 = vunpack.c.h.b16 %v1263
    %v3871 = vunpack.c.l.b16 %v1264
    %v3872 = vunpack.c.h.b16 %v1264
    %v3873 = vunpack.c.l.b16 %v1265
    %v3874 = vunpack.c.h.b16 %v1265
    %v3875 = vunpack.c.l.b16 %v1266
    %v3876 = vunpack.c.h.b16 %v1266
    %v3877 = vunpack.c.l.b16 %v1267
    %v3878 = vunpack.c.h.b16 %v1267
    %v3879 = vunpack.c.l.b16 %v1268
    %v3880 = vunpack.c.h.b16 %v1268
    %v3881 = vunpack.c.l.b16 %v1269
    %v3882 = vunpack.c.h.b16 %v1269
    %v3883 = vunpack.c.l.b16 %v1270
    %v3884 = vunpack.c.h.b16 %v1270
    %v3885 = vunpack.c.l.b16 %v1271
    %v3886 = vunpack.c.h.b16 %v1271
    %v3887 = vunpack.c.l.b16 %v1272
    %v3888 = vunpack.c.h.b16 %v1272
    %v3889 = vunpack.c.l.b16 %v1273
    %v3890 = vunpack.c.h.b16 %v1273
    %v3891 = vunpack.c.l.b16 %v1274
    %v3892 = vunpack.c.h.b16 %v1274
    %v3893 = vunpack.c.l.b16 %v1275
    %v3894 = vunpack.c.h.b16 %v1275
    %v3895 = vunpack.c.l.b16 %v1276
    %v3896 = vunpack.c.h.b16 %v1276
    %v3897 = vunpack.c.l.b16 %v1277
    %v3898 = vunpack.c.h.b16 %v1277
    %v3899 = vunpack.c.l.b16 %v1278
    %v3900 = vunpack.c.h.b16 %v1278
    %v3901 = vunpack.c.l.b16 %v1279
    %v3902 = vunpack.c.h.b16 %v1279
    %v3903 = vunpack.c.l.b16 %v1280
    %v3904 = vunpack.c.h.b16 %v1280
    %v3905 = vunpack.c.l.b16 %v1281
    %v3906 = vunpack.c.h.b16 %v1281
    %v3907 = vunpack.c.l.b16 %v1282
    %v3908 = vunpack.c.h.b16 %v1282
    %v3909 = vunpack.c.l.b16 %v1283
    %v3910 = vunpack.c.h.b16 %v1283
    %v3911 = vunpack.c.l.b16 %v1284
    %v3912 = vunpack.c.h.b16 %v1284
    %v3913 = vunpack.c.l.b16 %v1285
    %v3914 = vunpack.c.h.b16 %v1285
    %v3915 = vunpack.c.l.b16 %v1286
    %v3916 = vunpack.c.h.b16 %v1286
    %v3917 = vunpack.c.l.b16 %v1287
    %v3918 = vunpack.c.h.b16 %v1287
    %v3919 = vunpack.c.l.b16 %v1288
    %v3920 = vunpack.c.h.b16 %v1288
    %v3921 = vunpack.c.l.b16 %v1289
    %v3922 = vunpack.c.h.b16 %v1289
    %v3923 = vunpack.c.l.b16 %v1290
    %v3924 = vunpack.c.h.b16 %v1290
    %v3925 = vunpack.c.l.b16 %v1291
    %v3926 = vunpack.c.h.b16 %v1291
    %v3927 = vunpack.c.l.b16 %v1292
    %v3928 = vunpack.c.h.b16 %v1292
    %v3929 = vunpack.c.l.b16 %v1293
    %v3930 = vunpack.c.h.b16 %v1293
    %v3931 = vunpack.c.l.b16 %v1294
    %v3932 = vunpack.c.h.b16 %v1294
    %v3933 = vunpack.c.l.b16 %v1295
    %v3934 = vunpack.c.h.b16 %v1295
    %v3935 = vunpack.c.l.b16 %v1296
    %v3936 = vunpack.c.h.b16 %v1296
    %v3937 = vunpack.c.l.b16 %v1297
    %v3938 = vunpack.c.h.b16 %v1297
    %v3939 = vunpack.c.l.b16 %v1298
    %v3940 = vunpack.c.h.b16 %v1298
    %v3941 = vunpack.c.l.b16 %v1299
    %v3942 = vunpack.c.h.b16 %v1299
    %v3943 = vunpack.c.l.b16 %v1300
    %v3944 = vunpack.c.h.b16 %v1300
    %v3945 = vunpack.c.l.b16 %v1301
    %v3946 = vunpack.c.h.b16 %v1301
    %v3947 = vunpack.c.l.b16 %v1302
    %v3948 = vunpack.c.h.b16 %v1302
    %v3949 = vunpack.c.l.b16 %v1303
    %v3950 = vunpack.c.h.b16 %v1303
    %v3951 = vunpack.c.l.b16 %v1304
    %v3952 = vunpack.c.h.b16 %v1304
    %v3953 = vpack.c.b16 %v3449, %v3441
    %v3954 = vpack.c.b16 %v3450, %v3442
    %v3955 = vpack.c.b16 %v3451, %v3443
    %v3956 = vpack.c.b16 %v3452, %v3444
    %v3957 = vpack.c.b16 %v3453, %v3445
    %v3958 = vpack.c.b16 %v3454, %v3446
    %v3959 = vpack.c.b16 %v3455, %v3447
    %v3960 = vpack.c.b16 %v3456, %v3448
    %v3961 = vpack.c.b16 %v3465, %v3457
    %v3962 = vpack.c.b16 %v3466, %v3458
    %v3963 = vpack.c.b16 %v3467, %v3459
    %v3964 = vpack.c.b16 %v3468, %v3460
    %v3965 = vpack.c.b16 %v3469, %v3461
    %v3966 = vpack.c.b16 %v3470, %v3462
    %v3967 = vpack.c.b16 %v3471, %v3463
    %v3968 = vpack.c.b16 %v3472, %v3464
    %v3969 = vpack.c.b16 %v3481, %v3473
    %v3970 = vpack.c.b16 %v3482, %v3474
    %v3971 = vpack.c.b16 %v3483, %v3475
    %v3972 = vpack.c.b16 %v3484, %v3476
    %v3973 = vpack.c.b16 %v3485, %v3477
    %v3974 = vpack.c.b16 %v3486, %v3478
    %v3975 = vpack.c.b16 %v3487, %v3479
    %v3976 = vpack.c.b16 %v3488, %v3480
    %v3977 = vpack.c.b16 %v3497, %v3489
    %v3978 = vpack.c.b16 %v3498, %v3490
    %v3979 = vpack.c.b16 %v3499, %v3491
    %v3980 = vpack.c.b16 %v3500, %v3492
    %v3981 = vpack.c.b16 %v3501, %v3493
    %v3982 = vpack.c.b16 %v3502, %v3494
    %v3983 = vpack.c.b16 %v3503, %v3495
    %v3984 = vpack.c.b16 %v3504, %v3496
    %v3985 = vpack.c.b16 %v3513, %v3505
    %v3986 = vpack.c.b16 %v3514, %v3506
    %v3987 = vpack.c.b16 %v3515, %v3507
    %v3988 = vpack.c.b16 %v3516, %v3508
    %v3989 = vpack.c.b16 %v3517, %v3509
    %v3990 = vpack.c.b16 %v3518, %v3510
    %v3991 = vpack.c.b16 %v3519, %v3511
    %v3992 = vpack.c.b16 %v3520, %v3512
    %v3993 = vpack.c.b16 %v3529, %v3521
    %v3994 = vpack.c.b16 %v3530, %v3522
    %v3995 = vpack.c.b16 %v3531, %v3523
    %v3996 = vpack.c.b16 %v3532, %v3524
    %v3997 = vpack.c.b16 %v3533, %v3525
    %v3998 = vpack.c.b16 %v3534, %v3526
    %v3999 = vpack.c.b16 %v3535, %v3527
    %v4000 = vpack.c.b16 %v3536, %v3528
    %v4001 = vpack.c.b16 %v3545, %v3537
    %v4002 = vpack.c.b16 %v3546, %v3538
    %v4003 = vpack.c.b16 %v3547, %v3539
    %v4004 = vpack.c.b16 %v3548, %v3540
    %v4005 = vpack.c.b16 %v3549, %v3541
    %v4006 = vpack.c.b16 %v3550, %v3542
    %v4007 = vpack.c.b16 %v3551, %v3543
    %v4008 = vpack.c.b16 %v3552, %v3544
    %v4009 = vpack.c.b16 %v3561, %v3553
    %v4010 = vpack.c.b16 %v3562, %v3554
    %v4011 = vpack.c.b16 %v3563, %v3555
    %v4012 = vpack.c.b16 %v3564, %v3556
    %v4013 = vpack.c.b16 %v3565, %v3557
    %v4014 = vpack.c.b16 %v3566, %v3558
    %v4015 = vpack.c.b16 %v3567, %v3559
    %v4016 = vpack.c.b16 %v3568, %v3560
    %v4017 = vpack.c.b16 %v3577, %v3569
    %v4018 = vpack.c.b16 %v3578, %v3570
    %v4019 = vpack.c.b16 %v3579, %v3571
    %v4020 = vpack.c.b16 %v3580, %v3572
    %v4021 = vpack.c.b16 %v3581, %v3573
    %v4022 = vpack.c.b16 %v3582, %v3574
    %v4023 = vpack.c.b16 %v3583, %v3575
    %v4024 = vpack.c.b16 %v3584, %v3576
    %v4025 = vpack.c.b16 %v3593, %v3585
    %v4026 = vpack.c.b16 %v3594, %v3586
    %v4027 = vpack.c.b16 %v3595, %v3587
    %v4028 = vpack.c.b16 %v3596, %v3588
    %v4029 = vpack.c.b16 %v3597, %v3589
    %v4030 = vpack.c.b16 %v3598, %v3590
    %v4031 = vpack.c.b16 %v3599, %v3591
    %v4032 = vpack.c.b16 %v3600, %v3592
    %v4033 = vpack.c.b16 %v3609, %v3601
    %v4034 = vpack.c.b16 %v3610, %v3602
    %v4035 = vpack.c.b16 %v3611, %v3603
    %v4036 = vpack.c.b16 %v3612, %v3604
    %v4037 = vpack.c.b16 %v3613, %v3605
    %v4038 = vpack.c.b16 %v3614, %v3606
    %v4039 = vpack.c.b16 %v3615, %v3607
    %v4040 = vpack.c.b16 %v3616, %v3608
    %v4041 = vpack.c.b16 %v3625, %v3617
    %v4042 = vpack.c.b16 %v3626, %v3618
    %v4043 = vpack.c.b16 %v3627, %v3619
    %v4044 = vpack.c.b16 %v3628, %v3620
    %v4045 = vpack.c.b16 %v3629, %v3621
    %v4046 = vpack.c.b16 %v3630, %v3622
    %v4047 = vpack.c.b16 %v3631, %v3623
    %v4048 = vpack.c.b16 %v3632, %v3624
    %v4049 = vpack.c.b16 %v3641, %v3633
    %v4050 = vpack.c.b16 %v3642, %v3634
    %v4051 = vpack.c.b16 %v3643, %v3635
    %v4052 = vpack.c.b16 %v3644, %v3636
    %v4053 = vpack.c.b16 %v3645, %v3637
    %v4054 = vpack.c.b16 %v3646, %v3638
    %v4055 = vpack.c.b16 %v3647, %v3639
    %v4056 = vpack.c.b16 %v3648, %v3640
    %v4057 = vpack.c.b16 %v3657, %v3649
    %v4058 = vpack.c.b16 %v3658, %v3650
    %v4059 = vpack.c.b16 %v3659, %v3651
    %v4060 = vpack.c.b16 %v3660, %v3652
    %v4061 = vpack.c.b16 %v3661, %v3653
    %v4062 = vpack.c.b16 %v3662, %v3654
    %v4063 = vpack.c.b16 %v3663, %v3655
    %v4064 = vpack.c.b16 %v3664, %v3656
    %v4065 = vpack.c.b16 %v3673, %v3665
    %v4066 = vpack.c.b16 %v3674, %v3666
    %v4067 = vpack.c.b16 %v3675, %v3667
    %v4068 = vpack.c.b16 %v3676, %v3668
    %v4069 = vpack.c.b16 %v3677, %v3669
    %v4070 = vpack.c.b16 %v3678, %v3670
    %v4071 = vpack.c.b16 %v3679, %v3671
    %v4072 = vpack.c.b16 %v3680, %v3672
    %v4073 = vpack.c.b16 %v3689, %v3681
    %v4074 = vpack.c.b16 %v3690, %v3682
    %v4075 = vpack.c.b16 %v3691, %v3683
    %v4076 = vpack.c.b16 %v3692, %v3684
    %v4077 = vpack.c.b16 %v3693, %v3685
    %v4078 = vpack.c.b16 %v3694, %v3686
    %v4079 = vpack.c.b16 %v3695, %v3687
    %v4080 = vpack.c.b16 %v3696, %v3688
    %v4081 = vpack.c.b16 %v3705, %v3697
    %v4082 = vpack.c.b16 %v3706, %v3698
    %v4083 = vpack.c.b16 %v3707, %v3699
    %v4084 = vpack.c.b16 %v3708, %v3700
    %v4085 = vpack.c.b16 %v3709, %v3701
    %v4086 = vpack.c.b16 %v3710, %v3702
    %v4087 = vpack.c.b16 %v3711, %v3703
    %v4088 = vpack.c.b16 %v3712, %v3704
    %v4089 = vpack.c.b16 %v3721, %v3713
    %v4090 = vpack.c.b16 %v3722, %v3714
    %v4091 = vpack.c.b16 %v3723, %v3715
    %v4092 = vpack.c.b16 %v3724, %v3716
    %v4093 = vpack.c.b16 %v3725, %v3717
    %v4094 = vpack.c.b16 %v3726, %v3718
    %v4095 = vpack.c.b16 %v3727, %v3719
    %v4096 = vpack.c.b16 %v3728, %v3720
    %v4097 = vpack.c.b16 %v3737, %v3729
    %v4098 = vpack.c.b16 %v3738, %v3730
    %v4099 = vpack.c.b16 %v3739, %v3731
    %v4100 = vpack.c.b16 %v3740, %v3732
    %v4101 = vpack.c.b16 %v3741, %v3733
    %v4102 = vpack.c.b16 %v3742, %v3734
    %v4103 = vpack.c.b16 %v3743, %v3735
    %v4104 = vpack.c.b16 %v3744, %v3736
    %v4105 = vpack.c.b16 %v3753, %v3745
    %v4106 = vpack.c.b16 %v3754, %v3746
    %v4107 = vpack.c.b16 %v3755, %v3747
    %v4108 = vpack.c.b16 %v3756, %v3748
    %v4109 = vpack.c.b16 %v3757, %v3749
    %v4110 = vpack.c.b16 %v3758, %v3750
    %v4111 = vpack.c.b16 %v3759, %v3751
    %v4112 = vpack.c.b16 %v3760, %v3752
    %v4113 = vpack.c.b16 %v3769, %v3761
    %v4114 = vpack.c.b16 %v3770, %v3762
    %v4115 = vpack.c.b16 %v3771, %v3763
    %v4116 = vpack.c.b16 %v3772, %v3764
    %v4117 = vpack.c.b16 %v3773, %v3765
    %v4118 = vpack.c.b16 %v3774, %v3766
    %v4119 = vpack.c.b16 %v3775, %v3767
    %v4120 = vpack.c.b16 %v3776, %v3768
    %v4121 = vpack.c.b16 %v3785, %v3777
    %v4122 = vpack.c.b16 %v3786, %v3778
    %v4123 = vpack.c.b16 %v3787, %v3779
    %v4124 = vpack.c.b16 %v3788, %v3780
    %v4125 = vpack.c.b16 %v3789, %v3781
    %v4126 = vpack.c.b16 %v3790, %v3782
    %v4127 = vpack.c.b16 %v3791, %v3783
    %v4128 = vpack.c.b16 %v3792, %v3784
    %v4129 = vpack.c.b16 %v3801, %v3793
    %v4130 = vpack.c.b16 %v3802, %v3794
    %v4131 = vpack.c.b16 %v3803, %v3795
    %v4132 = vpack.c.b16 %v3804, %v3796
    %v4133 = vpack.c.b16 %v3805, %v3797
    %v4134 = vpack.c.b16 %v3806, %v3798
    %v4135 = vpack.c.b16 %v3807, %v3799
    %v4136 = vpack.c.b16 %v3808, %v3800
    %v4137 = vpack.c.b16 %v3817, %v3809
    %v4138 = vpack.c.b16 %v3818, %v3810
    %v4139 = vpack.c.b16 %v3819, %v3811
    %v4140 = vpack.c.b16 %v3820, %v3812
    %v4141 = vpack.c.b16 %v3821, %v3813
    %v4142 = vpack.c.b16 %v3822, %v3814
    %v4143 = vpack.c.b16 %v3823, %v3815
    %v4144 = vpack.c.b16 %v3824, %v3816
    %v4145 = vpack.c.b16 %v3833, %v3825
    %v4146 = vpack.c.b16 %v3834, %v3826
    %v4147 = vpack.c.b16 %v3835, %v3827
    %v4148 = vpack.c.b16 %v3836, %v3828
    %v4149 = vpack.c.b16 %v3837, %v3829
    %v4150 = vpack.c.b16 %v3838, %v3830
    %v4151 = vpack.c.b16 %v3839, %v3831
    %v4152 = vpack.c.b16 %v3840, %v3832
    %v4153 = vpack.c.b16 %v3849, %v3841
    %v4154 = vpack.c.b16 %v3850, %v3842
    %v4155 = vpack.c.b16 %v3851, %v3843
    %v4156 = vpack.c.b16 %v3852, %v3844
    %v4157 = vpack.c.b16 %v3853, %v3845
    %v4158 = vpack.c.b16 %v3854, %v3846
    %v4159 = vpack.c.b16 %v3855, %v3847
    %v4160 = vpack.c.b16 %v3856, %v3848
    %v4161 = vpack.c.b16 %v3865, %v3857
    %v4162 = vpack.c.b16 %v3866, %v3858
    %v4163 = vpack.c.b16 %v3867, %v3859
    %v4164 = vpack.c.b16 %v3868, %v3860
    %v4165 = vpack.c.b16 %v3869, %v3861
    %v4166 = vpack.c.b16 %v3870, %v3862
    %v4167 = vpack.c.b16 %v3871, %v3863
    %v4168 = vpack.c.b16 %v3872, %v3864
    %v4169 = vpack.c.b16 %v3881, %v3873
    %v4170 = vpack.c.b16 %v3882, %v3874
    %v4171 = vpack.c.b16 %v3883, %v3875
    %v4172 = vpack.c.b16 %v3884, %v3876
    %v4173 = vpack.c.b16 %v3885, %v3877
    %v4174 = vpack.c.b16 %v3886, %v3878
    %v4175 = vpack.c.b16 %v3887, %v3879
    %v4176 = vpack.c.b16 %v3888, %v3880
    %v4177 = vpack.c.b16 %v3897, %v3889
    %v4178 = vpack.c.b16 %v3898, %v3890
    %v4179 = vpack.c.b16 %v3899, %v3891
    %v4180 = vpack.c.b16 %v3900, %v3892
    %v4181 = vpack.c.b16 %v3901, %v3893
    %v4182 = vpack.c.b16 %v3902, %v3894
    %v4183 = vpack.c.b16 %v3903, %v3895
    %v4184 = vpack.c.b16 %v3904, %v3896
    %v4185 = vpack.c.b16 %v3913, %v3905
    %v4186 = vpack.c.b16 %v3914, %v3906
    %v4187 = vpack.c.b16 %v3915, %v3907
    %v4188 = vpack.c.b16 %v3916, %v3908
    %v4189 = vpack.c.b16 %v3917, %v3909
    %v4190 = vpack.c.b16 %v3918, %v3910
    %v4191 = vpack.c.b16 %v3919, %v3911
    %v4192 = vpack.c.b16 %v3920, %v3912
    %v4193 = vpack.c.b16 %v3929, %v3921
    %v4194 = vpack.c.b16 %v3930, %v3922
    %v4195 = vpack.c.b16 %v3931, %v3923
    %v4196 = vpack.c.b16 %v3932, %v3924
    %v4197 = vpack.c.b16 %v3933, %v3925
    %v4198 = vpack.c.b16 %v3934, %v3926
    %v4199 = vpack.c.b16 %v3935, %v3927
    %v4200 = vpack.c.b16 %v3936, %v3928
    %v4201 = vpack.c.b16 %v3945, %v3937
    %v4202 = vpack.c.b16 %v3946, %v3938
    %v4203 = vpack.c.b16 %v3947, %v3939
    %v4204 = vpack.c.b16 %v3948, %v3940
    %v4205 = vpack.c.b16 %v3949, %v3941
    %v4206 = vpack.c.b16 %v3950, %v3942
    %v4207 = vpack.c.b16 %v3951, %v3943
    %v4208 = vpack.c.b16 %v3952, %v3944
    %4465 = vmatprep.subr.bf16.mxu0 %v4010
    %4466 = vmatpush1.bf16.msra.mxu0 %v4009
    %4467 = vmatprep.subr.bf16.mxu0 %v4002
    %4468 = vmatpush1.bf16.msra.mxu0 %v4001
    %4469 = vmatprep.subr.bf16.mxu0 %v3994
    %4470 = vmatpush1.bf16.msra.mxu0 %v3993
    %4471 = vmatprep.subr.bf16.mxu0 %v3986
    %4472 = vmatpush1.bf16.msra.mxu0 %v3985
    %4473 = vmatprep.subr.bf16.mxu0 %v3978
    %4474 = vmatpush1.bf16.msra.mxu0 %v3977
    %4475 = vmatprep.subr.bf16.mxu0 %v3970
    %4476 = vmatpush1.bf16.msra.mxu0 %v3969
    %4477 = vmatprep.subr.bf16.mxu0 %v3962
    %4478 = vmatpush1.bf16.msra.mxu0 %v3961
    %4479 = vmatprep.subr.bf16.mxu0 %v3954
    %4480 = vmatpush1.bf16.msra.mxu0 %v3953
    %4481 = vmatprep.subr.bf16.mxu0 %v4074
    %4482 = vmatpush2.bf16.msra.mxu0 %v4073
    %4483 = vmatprep.subr.bf16.mxu0 %v4066
    %4484 = vmatpush2.bf16.msra.mxu0 %v4065
    %4485 = vmatprep.subr.bf16.mxu0 %v4058
    %4486 = vmatpush2.bf16.msra.mxu0 %v4057
    %4487 = vmatprep.subr.bf16.mxu0 %v4050
    %4488 = vmatpush2.bf16.msra.mxu0 %v4049
    %4489 = vmatprep.subr.bf16.mxu0 %v4042
    %4490 = vmatpush2.bf16.msra.mxu0 %v4041
    %4491 = vmatprep.subr.bf16.mxu0 %v4034
    %4492 = vmatpush2.bf16.msra.mxu0 %v4033
    %4493 = vmatprep.subr.bf16.mxu0 %v4026
    %4494 = vmatpush2.bf16.msra.mxu0 %v4025
    %4495 = vmatprep.subr.bf16.mxu0 %v4018
    %4496 = vmatpush2.bf16.msra.mxu0 %v4017
    %4497 = vmatprep.mubr.bf16.mxu0 %v1034
    %4498 = vmatmul.mubr.bf16.gmra.mxu0 %v1033
    %v4499 = vpop.f32.mrf.mxu0
    %v4500 = vadd.f32 %v2919, %v4499
    %v4501 = vpop.f32.mrf.mxu0
    %v4502 = vadd.f32 %v2921, %v4501
    %v4503 = vpop.f32.mrf.mxu0
    %v4504 = vadd.f32 %v2923, %v4503
    %v4505 = vpop.f32.mrf.mxu0
    %v4506 = vadd.f32 %v2925, %v4505
    %4507 = vdwg.mxu0
    %4508 = vmatprep.subr.bf16.mxu0 %v4138
    %4509 = vmatpush1.bf16.msra.mxu0 %v4137
    %4510 = vmatprep.subr.bf16.mxu0 %v4130
    %4511 = vmatpush1.bf16.msra.mxu0 %v4129
    %4512 = vmatprep.subr.bf16.mxu0 %v4122
    %4513 = vmatpush1.bf16.msra.mxu0 %v4121
    %4514 = vmatprep.subr.bf16.mxu0 %v4114
    %4515 = vmatpush1.bf16.msra.mxu0 %v4113
    %4516 = vmatprep.subr.bf16.mxu0 %v4106
    %4517 = vmatpush1.bf16.msra.mxu0 %v4105
    %4518 = vmatprep.subr.bf16.mxu0 %v4098
    %4519 = vmatpush1.bf16.msra.mxu0 %v4097
    %4520 = vmatprep.subr.bf16.mxu0 %v4090
    %4521 = vmatpush1.bf16.msra.mxu0 %v4089
    %4522 = vmatprep.subr.bf16.mxu0 %v4082
    %4523 = vmatpush1.bf16.msra.mxu0 %v4081
    %4524 = vmatprep.subr.bf16.mxu0 %v4202
    %4525 = vmatpush2.bf16.msra.mxu0 %v4201
    %4526 = vmatprep.subr.bf16.mxu0 %v4194
    %4527 = vmatpush2.bf16.msra.mxu0 %v4193
    %4528 = vmatprep.subr.bf16.mxu0 %v4186
    %4529 = vmatpush2.bf16.msra.mxu0 %v4185
    %4530 = vmatprep.subr.bf16.mxu0 %v4178
    %4531 = vmatpush2.bf16.msra.mxu0 %v4177
    %4532 = vmatprep.subr.bf16.mxu0 %v4170
    %4533 = vmatpush2.bf16.msra.mxu0 %v4169
    %4534 = vmatprep.subr.bf16.mxu0 %v4162
    %4535 = vmatpush2.bf16.msra.mxu0 %v4161
    %4536 = vmatprep.subr.bf16.mxu0 %v4154
    %4537 = vmatpush2.bf16.msra.mxu0 %v4153
    %4538 = vmatprep.subr.bf16.mxu0 %v4146
    %4539 = vmatpush2.bf16.msra.mxu0 %v4145
    %4540 = vmatprep.mubr.bf16.mxu0 %v1036
    %4541 = vmatmul.mubr.bf16.gmra.mxu0 %v1035
    %v4542 = vpop.f32.mrf.mxu0
    %v4543 = vadd.f32 %v4500, %v4542
    %v4544 = vpop.f32.mrf.mxu0
    %v4545 = vadd.f32 %v4502, %v4544
    %v4546 = vpop.f32.mrf.mxu0
    %v4547 = vadd.f32 %v4504, %v4546
    %v4548 = vpop.f32.mrf.mxu0
    %v4549 = vadd.f32 %v4506, %v4548
    %4550 = vdwg.mxu0
    %4551 = vmatprep.subr.bf16.mxu0 %v4012
    %4552 = vmatpush1.bf16.msra.mxu0 %v4011
    %4553 = vmatprep.subr.bf16.mxu0 %v4004
    %4554 = vmatpush1.bf16.msra.mxu0 %v4003
    %4555 = vmatprep.subr.bf16.mxu0 %v3996
    %4556 = vmatpush1.bf16.msra.mxu0 %v3995
    %4557 = vmatprep.subr.bf16.mxu0 %v3988
    %4558 = vmatpush1.bf16.msra.mxu0 %v3987
    %4559 = vmatprep.subr.bf16.mxu0 %v3980
    %4560 = vmatpush1.bf16.msra.mxu0 %v3979
    %4561 = vmatprep.subr.bf16.mxu0 %v3972
    %4562 = vmatpush1.bf16.msra.mxu0 %v3971
    %4563 = vmatprep.subr.bf16.mxu0 %v3964
    %4564 = vmatpush1.bf16.msra.mxu0 %v3963
    %4565 = vmatprep.subr.bf16.mxu0 %v3956
    %4566 = vmatpush1.bf16.msra.mxu0 %v3955
    %4567 = vmatprep.subr.bf16.mxu0 %v4076
    %4568 = vmatpush2.bf16.msra.mxu0 %v4075
    %4569 = vmatprep.subr.bf16.mxu0 %v4068
    %4570 = vmatpush2.bf16.msra.mxu0 %v4067
    %4571 = vmatprep.subr.bf16.mxu0 %v4060
    %4572 = vmatpush2.bf16.msra.mxu0 %v4059
    %4573 = vmatprep.subr.bf16.mxu0 %v4052
    %4574 = vmatpush2.bf16.msra.mxu0 %v4051
    %4575 = vmatprep.subr.bf16.mxu0 %v4044
    %4576 = vmatpush2.bf16.msra.mxu0 %v4043
    %4577 = vmatprep.subr.bf16.mxu0 %v4036
    %4578 = vmatpush2.bf16.msra.mxu0 %v4035
    %4579 = vmatprep.subr.bf16.mxu0 %v4028
    %4580 = vmatpush2.bf16.msra.mxu0 %v4027
    %4581 = vmatprep.subr.bf16.mxu0 %v4020
    %4582 = vmatpush2.bf16.msra.mxu0 %v4019
    %4583 = vmatprep.mubr.bf16.mxu0 %v1034
    %4584 = vmatmul.mubr.bf16.gmra.mxu0 %v1033
    %v4585 = vpop.f32.mrf.mxu0
    %v4586 = vadd.f32 %v3005, %v4585
    %v4587 = vpop.f32.mrf.mxu0
    %v4588 = vadd.f32 %v3007, %v4587
    %v4589 = vpop.f32.mrf.mxu0
    %v4590 = vadd.f32 %v3009, %v4589
    %v4591 = vpop.f32.mrf.mxu0
    %v4592 = vadd.f32 %v3011, %v4591
    %4593 = vdwg.mxu0
    %4594 = vmatprep.subr.bf16.mxu0 %v4140
    %4595 = vmatpush1.bf16.msra.mxu0 %v4139
    %4596 = vmatprep.subr.bf16.mxu0 %v4132
    %4597 = vmatpush1.bf16.msra.mxu0 %v4131
    %4598 = vmatprep.subr.bf16.mxu0 %v4124
    %4599 = vmatpush1.bf16.msra.mxu0 %v4123
    %4600 = vmatprep.subr.bf16.mxu0 %v4116
    %4601 = vmatpush1.bf16.msra.mxu0 %v4115
    %4602 = vmatprep.subr.bf16.mxu0 %v4108
    %4603 = vmatpush1.bf16.msra.mxu0 %v4107
    %4604 = vmatprep.subr.bf16.mxu0 %v4100
    %4605 = vmatpush1.bf16.msra.mxu0 %v4099
    %4606 = vmatprep.subr.bf16.mxu0 %v4092
    %4607 = vmatpush1.bf16.msra.mxu0 %v4091
    %4608 = vmatprep.subr.bf16.mxu0 %v4084
    %4609 = vmatpush1.bf16.msra.mxu0 %v4083
    %4610 = vmatprep.subr.bf16.mxu0 %v4204
    %4611 = vmatpush2.bf16.msra.mxu0 %v4203
    %4612 = vmatprep.subr.bf16.mxu0 %v4196
    %4613 = vmatpush2.bf16.msra.mxu0 %v4195
    %4614 = vmatprep.subr.bf16.mxu0 %v4188
    %4615 = vmatpush2.bf16.msra.mxu0 %v4187
    %4616 = vmatprep.subr.bf16.mxu0 %v4180
    %4617 = vmatpush2.bf16.msra.mxu0 %v4179
    %4618 = vmatprep.subr.bf16.mxu0 %v4172
    %4619 = vmatpush2.bf16.msra.mxu0 %v4171
    %4620 = vmatprep.subr.bf16.mxu0 %v4164
    %4621 = vmatpush2.bf16.msra.mxu0 %v4163
    %4622 = vmatprep.subr.bf16.mxu0 %v4156
    %4623 = vmatpush2.bf16.msra.mxu0 %v4155
    %4624 = vmatprep.subr.bf16.mxu0 %v4148
    %4625 = vmatpush2.bf16.msra.mxu0 %v4147
    %4626 = vmatprep.mubr.bf16.mxu0 %v1036
    %4627 = vmatmul.mubr.bf16.gmra.mxu0 %v1035
    %v4628 = vpop.f32.mrf.mxu0
    %v4629 = vadd.f32 %v4586, %v4628
    %v4630 = vpop.f32.mrf.mxu0
    %v4631 = vadd.f32 %v4588, %v4630
    %v4632 = vpop.f32.mrf.mxu0
    %v4633 = vadd.f32 %v4590, %v4632
    %v4634 = vpop.f32.mrf.mxu0
    %v4635 = vadd.f32 %v4592, %v4634
    %4636 = vdwg.mxu0
    %4637 = vmatprep.subr.bf16.mxu0 %v4014
    %4638 = vmatpush1.bf16.msra.mxu0 %v4013
    %4639 = vmatprep.subr.bf16.mxu0 %v4006
    %4640 = vmatpush1.bf16.msra.mxu0 %v4005
    %4641 = vmatprep.subr.bf16.mxu0 %v3998
    %4642 = vmatpush1.bf16.msra.mxu0 %v3997
    %4643 = vmatprep.subr.bf16.mxu0 %v3990
    %4644 = vmatpush1.bf16.msra.mxu0 %v3989
    %4645 = vmatprep.subr.bf16.mxu0 %v3982
    %4646 = vmatpush1.bf16.msra.mxu0 %v3981
    %4647 = vmatprep.subr.bf16.mxu0 %v3974
    %4648 = vmatpush1.bf16.msra.mxu0 %v3973
    %4649 = vmatprep.subr.bf16.mxu0 %v3966
    %4650 = vmatpush1.bf16.msra.mxu0 %v3965
    %4651 = vmatprep.subr.bf16.mxu0 %v3958
    %4652 = vmatpush1.bf16.msra.mxu0 %v3957
    %4653 = vmatprep.subr.bf16.mxu0 %v4078
    %4654 = vmatpush2.bf16.msra.mxu0 %v4077
    %4655 = vmatprep.subr.bf16.mxu0 %v4070
    %4656 = vmatpush2.bf16.msra.mxu0 %v4069
    %4657 = vmatprep.subr.bf16.mxu0 %v4062
    %4658 = vmatpush2.bf16.msra.mxu0 %v4061
    %4659 = vmatprep.subr.bf16.mxu0 %v4054
    %4660 = vmatpush2.bf16.msra.mxu0 %v4053
    %4661 = vmatprep.subr.bf16.mxu0 %v4046
    %4662 = vmatpush2.bf16.msra.mxu0 %v4045
    %4663 = vmatprep.subr.bf16.mxu0 %v4038
    %4664 = vmatpush2.bf16.msra.mxu0 %v4037
    %4665 = vmatprep.subr.bf16.mxu0 %v4030
    %4666 = vmatpush2.bf16.msra.mxu0 %v4029
    %4667 = vmatprep.subr.bf16.mxu0 %v4022
    %4668 = vmatpush2.bf16.msra.mxu0 %v4021
    %4669 = vmatprep.mubr.bf16.mxu0 %v1034
    %4670 = vmatmul.mubr.bf16.gmra.mxu0 %v1033
    %v4671 = vpop.f32.mrf.mxu0
    %v4672 = vadd.f32 %v3091, %v4671
    %v4673 = vpop.f32.mrf.mxu0
    %v4674 = vadd.f32 %v3093, %v4673
    %v4675 = vpop.f32.mrf.mxu0
    %v4676 = vadd.f32 %v3095, %v4675
    %v4677 = vpop.f32.mrf.mxu0
    %v4678 = vadd.f32 %v3097, %v4677
    %4679 = vdwg.mxu0
    %4680 = vmatprep.subr.bf16.mxu0 %v4142
    %4681 = vmatpush1.bf16.msra.mxu0 %v4141
    %4682 = vmatprep.subr.bf16.mxu0 %v4134
    %4683 = vmatpush1.bf16.msra.mxu0 %v4133
    %4684 = vmatprep.subr.bf16.mxu0 %v4126
    %4685 = vmatpush1.bf16.msra.mxu0 %v4125
    %4686 = vmatprep.subr.bf16.mxu0 %v4118
    %4687 = vmatpush1.bf16.msra.mxu0 %v4117
    %4688 = vmatprep.subr.bf16.mxu0 %v4110
    %4689 = vmatpush1.bf16.msra.mxu0 %v4109
    %4690 = vmatprep.subr.bf16.mxu0 %v4102
    %4691 = vmatpush1.bf16.msra.mxu0 %v4101
    %4692 = vmatprep.subr.bf16.mxu0 %v4094
    %4693 = vmatpush1.bf16.msra.mxu0 %v4093
    %4694 = vmatprep.subr.bf16.mxu0 %v4086
    %4695 = vmatpush1.bf16.msra.mxu0 %v4085
    %4696 = vmatprep.subr.bf16.mxu0 %v4206
    %4697 = vmatpush2.bf16.msra.mxu0 %v4205
    %4698 = vmatprep.subr.bf16.mxu0 %v4198
    %4699 = vmatpush2.bf16.msra.mxu0 %v4197
    %4700 = vmatprep.subr.bf16.mxu0 %v4190
    %4701 = vmatpush2.bf16.msra.mxu0 %v4189
    %4702 = vmatprep.subr.bf16.mxu0 %v4182
    %4703 = vmatpush2.bf16.msra.mxu0 %v4181
    %4704 = vmatprep.subr.bf16.mxu0 %v4174
    %4705 = vmatpush2.bf16.msra.mxu0 %v4173
    %4706 = vmatprep.subr.bf16.mxu0 %v4166
    %4707 = vmatpush2.bf16.msra.mxu0 %v4165
    %4708 = vmatprep.subr.bf16.mxu0 %v4158
    %4709 = vmatpush2.bf16.msra.mxu0 %v4157
    %4710 = vmatprep.subr.bf16.mxu0 %v4150
    %4711 = vmatpush2.bf16.msra.mxu0 %v4149
    %4712 = vmatprep.mubr.bf16.mxu0 %v1036
    %4713 = vmatmul.mubr.bf16.gmra.mxu0 %v1035
    %v4714 = vpop.f32.mrf.mxu0
    %v4715 = vadd.f32 %v4672, %v4714
    %v4716 = vpop.f32.mrf.mxu0
    %v4717 = vadd.f32 %v4674, %v4716
    %v4718 = vpop.f32.mrf.mxu0
    %v4719 = vadd.f32 %v4676, %v4718
    %v4720 = vpop.f32.mrf.mxu0
    %v4721 = vadd.f32 %v4678, %v4720
    %4722 = vdwg.mxu0
    %4723 = vmatprep.subr.bf16.mxu0 %v4016
    %4724 = vmatpush1.bf16.msra.mxu0 %v4015
    %4725 = vmatprep.subr.bf16.mxu0 %v4008
    %4726 = vmatpush1.bf16.msra.mxu0 %v4007
    %4727 = vmatprep.subr.bf16.mxu0 %v4000
    %4728 = vmatpush1.bf16.msra.mxu0 %v3999
    %4729 = vmatprep.subr.bf16.mxu0 %v3992
    %4730 = vmatpush1.bf16.msra.mxu0 %v3991
    %4731 = vmatprep.subr.bf16.mxu0 %v3984
    %4732 = vmatpush1.bf16.msra.mxu0 %v3983
    %4733 = vmatprep.subr.bf16.mxu0 %v3976
    %4734 = vmatpush1.bf16.msra.mxu0 %v3975
    %4735 = vmatprep.subr.bf16.mxu0 %v3968
    %4736 = vmatpush1.bf16.msra.mxu0 %v3967
    %4737 = vmatprep.subr.bf16.mxu0 %v3960
    %4738 = vmatpush1.bf16.msra.mxu0 %v3959
    %4739 = vmatprep.subr.bf16.mxu0 %v4080
    %4740 = vmatpush2.bf16.msra.mxu0 %v4079
    %4741 = vmatprep.subr.bf16.mxu0 %v4072
    %4742 = vmatpush2.bf16.msra.mxu0 %v4071
    %4743 = vmatprep.subr.bf16.mxu0 %v4064
    %4744 = vmatpush2.bf16.msra.mxu0 %v4063
    %4745 = vmatprep.subr.bf16.mxu0 %v4056
    %4746 = vmatpush2.bf16.msra.mxu0 %v4055
    %4747 = vmatprep.subr.bf16.mxu0 %v4048
    %4748 = vmatpush2.bf16.msra.mxu0 %v4047
    %4749 = vmatprep.subr.bf16.mxu0 %v4040
    %4750 = vmatpush2.bf16.msra.mxu0 %v4039
    %4751 = vmatprep.subr.bf16.mxu0 %v4032
    %4752 = vmatpush2.bf16.msra.mxu0 %v4031
    %4753 = vmatprep.subr.bf16.mxu0 %v4024
    %4754 = vmatpush2.bf16.msra.mxu0 %v4023
    %4755 = vmatprep.mubr.bf16.mxu0 %v1034
    %4756 = vmatmul.mubr.bf16.gmra.mxu0 %v1033
    %v4757 = vpop.f32.mrf.mxu0
    %v4758 = vadd.f32 %v3177, %v4757
    %v4759 = vpop.f32.mrf.mxu0
    %v4760 = vadd.f32 %v3179, %v4759
    %v4761 = vpop.f32.mrf.mxu0
    %v4762 = vadd.f32 %v3181, %v4761
    %v4763 = vpop.f32.mrf.mxu0
    %v4764 = vadd.f32 %v3183, %v4763
    %4765 = vdwg.mxu0
    %4766 = vmatprep.subr.bf16.mxu0 %v4144
    %4767 = vmatpush1.bf16.msra.mxu0 %v4143
    %4768 = vmatprep.subr.bf16.mxu0 %v4136
    %4769 = vmatpush1.bf16.msra.mxu0 %v4135
    %4770 = vmatprep.subr.bf16.mxu0 %v4128
    %4771 = vmatpush1.bf16.msra.mxu0 %v4127
    %4772 = vmatprep.subr.bf16.mxu0 %v4120
    %4773 = vmatpush1.bf16.msra.mxu0 %v4119
    %4774 = vmatprep.subr.bf16.mxu0 %v4112
    %4775 = vmatpush1.bf16.msra.mxu0 %v4111
    %4776 = vmatprep.subr.bf16.mxu0 %v4104
    %4777 = vmatpush1.bf16.msra.mxu0 %v4103
    %4778 = vmatprep.subr.bf16.mxu0 %v4096
    %4779 = vmatpush1.bf16.msra.mxu0 %v4095
    %4780 = vmatprep.subr.bf16.mxu0 %v4088
    %4781 = vmatpush1.bf16.msra.mxu0 %v4087
    %4782 = vmatprep.subr.bf16.mxu0 %v4208
    %4783 = vmatpush2.bf16.msra.mxu0 %v4207
    %4784 = vmatprep.subr.bf16.mxu0 %v4200
    %4785 = vmatpush2.bf16.msra.mxu0 %v4199
    %4786 = vmatprep.subr.bf16.mxu0 %v4192
    %4787 = vmatpush2.bf16.msra.mxu0 %v4191
    %4788 = vmatprep.subr.bf16.mxu0 %v4184
    %4789 = vmatpush2.bf16.msra.mxu0 %v4183
    %4790 = vmatprep.subr.bf16.mxu0 %v4176
    %4791 = vmatpush2.bf16.msra.mxu0 %v4175
    %4792 = vmatprep.subr.bf16.mxu0 %v4168
    %4793 = vmatpush2.bf16.msra.mxu0 %v4167
    %4794 = vmatprep.subr.bf16.mxu0 %v4160
    %4795 = vmatpush2.bf16.msra.mxu0 %v4159
    %4796 = vmatprep.subr.bf16.mxu0 %v4152
    %4797 = vmatpush2.bf16.msra.mxu0 %v4151
    %4798 = vmatprep.mubr.bf16.mxu0 %v1036
    %4799 = vmatmul.mubr.bf16.gmra.mxu0 %v1035
    %v4800 = vpop.f32.mrf.mxu0
    %v4801 = vadd.f32 %v4758, %v4800
    %v4802 = vpop.f32.mrf.mxu0
    %v4803 = vadd.f32 %v4760, %v4802
    %v4804 = vpop.f32.mrf.mxu0
    %v4805 = vadd.f32 %v4762, %v4804
    %v4806 = vpop.f32.mrf.mxu0
    %v4807 = vadd.f32 %v4764, %v4806
    %4808 = vdwg.mxu0
    %v4809 = vmax.f32 %v4543, %v4715
    %v4810 = vmax.f32 %v4545, %v4717
    %v4811 = vmax.f32 %v4629, %v4801
    %v4812 = vmax.f32 %v4631, %v4803
    %v4813 = vmax.f32 %v4547, %v4719
    %v4814 = vmax.f32 %v4549, %v4721
    %v4815 = vmax.f32 %v4633, %v4805
    %v4816 = vmax.f32 %v4635, %v4807
    %v4817 = vmax.f32 %v4809, %v4811
    %v4818 = vmax.f32 %v4810, %v4812
    %v4819 = vmax.f32 %v4813, %v4815
    %v4820 = vmax.f32 %v4814, %v4816
    %v4821 = vmax.f32 %v4817, %v4818
    %v4822 = vmax.f32 %v4819, %v4820
    %v4823 = vld [vmem:[#allocation13] sm:$0x1]
    %v4825 = vlaneseq
    %v4826 = vshrl.u32 %v4825, 7
    %v4827 = vsub.s32 0, %v4826
    %v4828 = vrot.slane %v4823, %v4827
    %v4830 = vadd.f32 %v4821, %v4828
    %v4831 = vadd.f32 %v4822, %v4828
    %v4832 = vmax.f32 %v4830, 0.0
    %v4833 = vmax.f32 %v4831, 0.0
    %4834 = vst [vmem:[#allocation14] sm:$0xff] %v4832
    %4835 = vst [vmem:[#allocation14 + $0x8] sm:$0xff] %v4833
    // Predicated region
    $region78: #{tpu_custom_call.1} parent=1 // pred_check
      _
    $region79: #{tpu_custom_call.1} parent=1 // pred_check_branch
      %4837 = sbr.rel (0) target = $region81
    $region80: #{tpu_custom_call.1} parent=1 // pred_region
      %s4839 = ssub.s32 256, 256
      %4840 = vsyncadd [#allocation4], %s4839
      %s4841 = sshll.u32 [#allocation14], 4
      %s4842 = int_to_ptr.vmem [resolvable:$true] %s4841
      %4847 = dma.vmem_to_hbm [thread:$0]  %s4842, 256, %s12, [#allocation4], 128, 128, 8
    $region81: #{tpu_custom_call.1} parent=1 // pred_fallthru
      _
    // Predicated region
    $region82: #{tpu_custom_call.1} parent=1 // pred_check
      _
    $region83: #{tpu_custom_call.1} parent=1 // pred_check_branch
      %4849 = sbr.rel (0) target = $region85
    $region84: #{tpu_custom_call.1} parent=1 // pred_region
      %4850 = dma.done [#allocation4], 256
    $region85: #{tpu_custom_call.1} parent=1 // pred_fallthru
      _
    %4851 = vsyncpa [#allocation3], 1
    %4852 = vsyncpa [#allocation6], 1
    %4853 = vsyncpa [#allocation9], 1
    %4854 = vsyncpa [#allocation12], 1
    %4855 = vsyncpa [#allocation4], 1

</llo_original>
